<compile_context>
chip_gen: v7x
topology: tpu7x:2x2x1
jax: 0.10.0
libtpu: 0.0.40
codegen_flags: <defaults>
</compile_context>

<pallas_src>
import functools

import jax
import jax.numpy as jnp
from jax.experimental import pallas as pl
from jax.experimental.pallas import tpu as pltpu


_NEG = -1e9    # finite additive mask value (avoids NaN if a row is fully masked)
_EPS = 1e-6    # T5 RMSNorm epsilon


# ----------------------------- Pallas kernel --------------------------------

def _rmsnorm(x, g):
    # T5LayerNorm: no mean subtraction, no bias (f32 math)
    var = jnp.mean(x * x, axis=-1, keepdims=True)
    return x * jax.lax.rsqrt(var + _EPS) * g


def _fused_encoder_kernel(hs0_ref, bias_ref,
                          ln1_ref, wqkv_ref, wo_ref, ln2_ref, wi_ref, wf_ref,
                          fln_ref, cw_ref, cb_ref,
                          probs_ref, hs_vmem,
                          *, B, S, H, Dk, num_layers):
    """One grid step = one full T5 encoder layer on the resident (BS, D)
    activation; the classifier head runs on the last step."""
    l = pl.program_id(0)
    inner = H * Dk

    @pl.when(l == 0)
    def _():
        hs_vmem[...] = hs0_ref[...]

    x = hs_vmem[...]                                            # (BS, D) f32

    # ---------------- self-attention block ----------------
    ln = _rmsnorm(x, ln1_ref[...])
    qkv = jnp.dot(ln.astype(jnp.bfloat16), wqkv_ref[...],
                  preferred_element_type=jnp.float32)           # (BS, 3*inner)
    q = qkv[:, 0 * inner:1 * inner]
    k = qkv[:, 1 * inner:2 * inner]
    v = qkv[:, 2 * inner:3 * inner]

    attn_proj = jnp.zeros_like(x)                               # (BS, D) f32
    for h in range(H):              # static unroll over heads
        qh = q[:, h * Dk:(h + 1) * Dk].astype(jnp.bfloat16)
        kh = k[:, h * Dk:(h + 1) * Dk].astype(jnp.bfloat16)
        vh = v[:, h * Dk:(h + 1) * Dk].astype(jnp.bfloat16)
        # T5 does NOT scale scores by 1/sqrt(d_kv)
        s = jax.lax.dot_general(qh, kh, (((1,), (1,)), ((), ())),
                                preferred_element_type=jnp.float32)  # (BS,BS)
        s = s + bias_ref[h]                   # precombined rel-pos bias + mask
        m = jnp.max(s, axis=-1, keepdims=True)
        e = jnp.exp(s - m)
        p = e * pl.reciprocal(jnp.sum(e, axis=-1, keepdims=True), approx=True)
        pv = jnp.dot(p.astype(jnp.bfloat16), vh,
                     preferred_element_type=jnp.float32)             # (BS, Dk)
        # accumulate directly through this head's slice of the output proj
        attn_proj = attn_proj + jnp.dot(
            pv.astype(jnp.bfloat16), wo_ref[h * Dk:(h + 1) * Dk, :],
            preferred_element_type=jnp.float32)

    h1 = x + attn_proj

    # ---------------- feed-forward block (ReLU) ----------------
    ln2 = _rmsnorm(h1, ln2_ref[...])
    ff = jnp.maximum(
        jnp.dot(ln2.astype(jnp.bfloat16), wi_ref[...],
                preferred_element_type=jnp.float32), 0.0)
    ff = jnp.dot(ff.astype(jnp.bfloat16), wf_ref[...],
                 preferred_element_type=jnp.float32)
    hs_new = h1 + ff
    hs_vmem[...] = hs_new

    # ---------------- classifier head on the last layer ----------------
    @pl.when(l == num_layers - 1)
    def _():
        # pool first token of every sequence (rows 0, S, 2S, ...)
        pooled = jnp.concatenate(
            [hs_new[b * S:b * S + 1, :] for b in range(B)], axis=0)   # (B, D)
        ln_p = _rmsnorm(pooled, fln_ref[...])
        logits = jnp.dot(ln_p.astype(jnp.bfloat16), cw_ref[...],
                         preferred_element_type=jnp.float32) + cb_ref[...]
        m = jnp.max(logits, axis=-1, keepdims=True)
        e = jnp.exp(logits - m)
        # exact normalisation for the final output; padded classes get -1e30
        # bias -> exp underflows to exactly 0.
        probs_ref[...] = e / jnp.sum(e, axis=-1, keepdims=True)


# --------------------------- T5 encoder glue --------------------------------

def _t5_relative_position_bucket(relative_position, num_buckets=32,
                                 max_distance=128):
    # bidirectional encoder bucketing (HF T5 semantics)
    num_buckets = num_buckets // 2
    rel_buckets = (relative_position > 0).astype(jnp.int32) * num_buckets
    rp = jnp.abs(relative_position)
    max_exact = num_buckets // 2
    is_small = rp < max_exact
    rp_f = jnp.maximum(rp, 1).astype(jnp.float32)
    rp_if_large = max_exact + (
        jnp.log(rp_f / max_exact)
        / jnp.log(max_distance / max_exact)
        * (num_buckets - max_exact)
    ).astype(jnp.int32)
    rp_if_large = jnp.minimum(rp_if_large, num_buckets - 1)
    return rel_buckets + jnp.where(is_small, rp, rp_if_large)


def compute_position_bias(rel_emb, S):
    # rel_emb: (num_buckets, H) -> bias (H, S, S), shared across layers
    ctx = jnp.arange(S)[:, None]
    mem = jnp.arange(S)[None, :]
    buckets = _t5_relative_position_bucket(mem - ctx)   # (S, S)
    values = rel_emb[buckets]                           # (S, S, H)
    return jnp.transpose(values, (2, 0, 1))             # (H, S, S)


def build_attention_mask(attention_mask, B, S):
    # Additive (B*S, B*S) mask over the flattened score matrix:
    #  - block-diagonal (queries only attend within their own batch)
    #  - key-validity mask from attention_mask
    BS = B * S
    key_ok = attention_mask.reshape(BS).astype(jnp.float32)
    kmask = jnp.where(key_ok > 0, 0.0, _NEG)
    bid = jnp.arange(BS) // S
    block = jnp.where(bid[:, None] == bid[None, :], 0.0, _NEG)
    return (block + kmask[None, :]).astype(jnp.float32)


# ------------------------------ forward --------------------------------------

def concept_detector_forward(params, input_ids, attention_mask):
    B, S = input_ids.shape
    D = params["embed"].shape[1]
    H = params["num_heads"]
    Dk = params["d_kv"]
    L = params["num_layers"]
    num_classes = params["num_classes"]
    inner = H * Dk
    d_ff = params["wi_all"].shape[2]
    c_pad = params["cls_w_pad"].shape[1]
    BS = B * S

    hs0 = params["embed"][input_ids].reshape(BS, D)          # embedding gather
    pos_bias = compute_position_bias(params["rel_bias"], S)  # (H, S, S)
    amask = build_attention_mask(attention_mask, B, S)       # (BS, BS)
    # combined additive bias + mask, precomputed once in f32 (kept f32 in-kernel)
    bias_mask = jnp.tile(pos_bias, (1, B, B)) + amask[None, :, :]   # (H, BS, BS)

    kern = functools.partial(_fused_encoder_kernel,
                             B=B, S=S, H=H, Dk=Dk, num_layers=L)

    grid_spec = pltpu.PrefetchScalarGridSpec(
        num_scalar_prefetch=0,
        grid=(L,),
        in_specs=[
            pl.BlockSpec((BS, D), lambda l: (0, 0)),                  # hs0
            pl.BlockSpec((H, BS, BS), lambda l: (0, 0, 0)),           # bias+mask
            pl.BlockSpec((None, 1, D), lambda l: (l, 0, 0)),          # ln1
            pl.BlockSpec((None, D, 3 * inner), lambda l: (l, 0, 0)),  # wqkv
            pl.BlockSpec((None, inner, D), lambda l: (l, 0, 0)),      # wo
            pl.BlockSpec((None, 1, D), lambda l: (l, 0, 0)),          # ln2
            pl.BlockSpec((None, D, d_ff), lambda l: (l, 0, 0)),       # wi
            pl.BlockSpec((None, d_ff, D), lambda l: (l, 0, 0)),       # wo_ff
            pl.BlockSpec((1, D), lambda l: (0, 0)),                   # final_ln
            pl.BlockSpec((D, c_pad), lambda l: (0, 0)),               # cls_w_pad
            pl.BlockSpec((1, c_pad), lambda l: (0, 0)),               # cls_b_pad
        ],
        out_specs=pl.BlockSpec((B, c_pad), lambda l: (0, 0)),
        scratch_shapes=[pltpu.VMEM((BS, D), jnp.float32)],
    )

    probs_pad = pl.pallas_call(
        kern,
        out_shape=jax.ShapeDtypeStruct((B, c_pad), jnp.float32),
        grid_spec=grid_spec,
        compiler_params=pltpu.CompilerParams(
            dimension_semantics=("arbitrary",)),
    )(hs0, bias_mask,
      params["ln1_all"], params["wqkv_all"], params["wo_all"],
      params["ln2_all"], params["wi_all"], params["wf_all"],
      params["final_ln"], params["cls_w_pad"], params["cls_b_pad"])

    return probs_pad[:, :num_classes]


# ------------------------------- params -------------------------------------

def init_params(key, vocab, d_model, num_heads, d_kv, d_ff, num_layers,
                num_classes, num_buckets=32):
    inner = num_heads * d_kv
    keys = iter(jax.random.split(key, 8 + 6 * num_layers))

    def norm(shape, scale=0.02):
        return jax.random.normal(next(keys), shape, jnp.float32) * scale

    ln1, wqkv, wo, ln2, wi, wf = [], [], [], [], [], []
    for _ in range(num_layers):
        ln1.append(jnp.ones((1, d_model), jnp.float32) + norm((1, d_model), 0.01))
        wqkv.append(norm((d_model, 3 * inner)))
        wo.append(norm((inner, d_model)))
        ln2.append(jnp.ones((1, d_model), jnp.float32) + norm((1, d_model), 0.01))
        wi.append(norm((d_model, d_ff)))
        wf.append(norm((d_ff, d_model)))

    c_pad = max(128, ((num_classes + 127) // 128) * 128)
    cls_w = norm((d_model, num_classes))
    cls_b = norm((num_classes,))
    cls_w_pad = jnp.zeros((d_model, c_pad), jnp.float32).at[:, :num_classes].set(cls_w)
    cls_b_pad = jnp.full((1, c_pad), -1e30, jnp.float32).at[0, :num_classes].set(cls_b)

    bf16 = jnp.bfloat16
    return {
        "embed": norm((vocab, d_model)),
        "rel_bias": norm((num_buckets, num_heads)),
        # stacked per-layer weights (bf16 for all MXU operands, f32 LN gains)
        "ln1_all": jnp.stack(ln1, axis=0),                       # (L, 1, D) f32
        "wqkv_all": jnp.stack(wqkv, axis=0).astype(bf16),        # (L, D, 3*inner)
        "wo_all": jnp.stack(wo, axis=0).astype(bf16),            # (L, inner, D)
        "ln2_all": jnp.stack(ln2, axis=0),                       # (L, 1, D) f32
        "wi_all": jnp.stack(wi, axis=0).astype(bf16),            # (L, D, d_ff)
        "wf_all": jnp.stack(wf, axis=0).astype(bf16),            # (L, d_ff, D)
        "final_ln": jnp.ones((1, d_model), jnp.float32) + norm((1, d_model), 0.01),
        "cls_w_pad": cls_w_pad.astype(bf16),
        "cls_b_pad": cls_b_pad,                                  # f32 (holds -1e30)
        "num_heads": num_heads,
        "d_kv": d_kv,
        "num_layers": num_layers,
        "num_classes": num_classes,
    }


# -------------------------------- main ---------------------------------------

if __name__ == "__main__":
    # config: d_model=128, num_layers=3, num_heads=8, d_ff=256, d_kv=64 (HF default)
    B, S = 2, 8
    VOCAB = 64            # TODO(synk): real vocab comes from the tokenizer; synthetic here
    D_MODEL = 128
    NUM_HEADS = 8
    D_KV = 64
    D_FF = 256
    NUM_LAYERS = 3
    NUM_CLASSES = 8

    root = jax.random.PRNGKey(0)
    k_param, k_ids = jax.random.split(root)

    params = init_params(k_param, VOCAB, D_MODEL, NUM_HEADS, D_KV, D_FF,
                         NUM_LAYERS, NUM_CLASSES)

    input_ids = jax.random.randint(k_ids, (B, S), 0, VOCAB, dtype=jnp.int32)
    attention_mask = jnp.ones((B, S), jnp.float32).at[1, 5:].set(0.0)

    probs = concept_detector_forward(params, input_ids, attention_mask)
    probs = jax.block_until_ready(probs)

    assert probs.shape == (B, NUM_CLASSES)
    assert bool(jnp.all(jnp.isfinite(probs)))
    assert bool(jnp.allclose(jnp.sum(probs, axis=-1), 1.0, atol=1e-5))
    print("KERNEL_OK")
</pallas_src>

<mosaic_0001>
module attributes {stable_mosaic.version = 11 : i64} {
  func.func @_fused_encoder_kernel(%arg0: i32, %arg1: memref<16x128xf32, #tpu.memory_space<vmem>>, %arg2: memref<8x16x16xf32, #tpu.memory_space<vmem>>, %arg3: memref<1x1x128xf32, #tpu.memory_space<vmem>>, %arg4: memref<1x128x1536xbf16, #tpu.memory_space<vmem>>, %arg5: memref<1x512x128xbf16, #tpu.memory_space<vmem>>, %arg6: memref<1x1x128xf32, #tpu.memory_space<vmem>>, %arg7: memref<1x128x256xbf16, #tpu.memory_space<vmem>>, %arg8: memref<1x256x128xbf16, #tpu.memory_space<vmem>>, %arg9: memref<1x128xf32, #tpu.memory_space<vmem>>, %arg10: memref<128x128xbf16, #tpu.memory_space<vmem>>, %arg11: memref<1x128xf32, #tpu.memory_space<vmem>>, %arg12: memref<2x128xf32, #tpu.memory_space<vmem>>, %arg13: memref<16x128xf32, #tpu.memory_space<vmem>>) attributes {dimension_semantics = [#tpu.dimension_semantics<arbitrary>], iteration_bounds = array<i64: 3>, scalar_prefetch = 0 : i64, scratch_operands = 1 : i64, tpu.core_type = #tpu.core_type<tc>, window_params = [{pipeline_mode = #tpu.pipeline_mode<synchronous>, transform_indices = @transform_0, window_bounds = array<i64: 16, 128>}, {pipeline_mode = #tpu.pipeline_mode<synchronous>, transform_indices = @transform_1, window_bounds = array<i64: 8, 16, 16>}, {transform_indices = @transform_2, window_bounds = array<i64: 1, 1, 128>}, {transform_indices = @transform_3, window_bounds = array<i64: 1, 128, 1536>}, {transform_indices = @transform_4, window_bounds = array<i64: 1, 512, 128>}, {transform_indices = @transform_5, window_bounds = array<i64: 1, 1, 128>}, {transform_indices = @transform_6, window_bounds = array<i64: 1, 128, 256>}, {transform_indices = @transform_7, window_bounds = array<i64: 1, 256, 128>}, {pipeline_mode = #tpu.pipeline_mode<synchronous>, transform_indices = @transform_8, window_bounds = array<i64: 1, 128>}, {pipeline_mode = #tpu.pipeline_mode<synchronous>, transform_indices = @transform_9, window_bounds = array<i64: 128, 128>}, {pipeline_mode = #tpu.pipeline_mode<synchronous>, transform_indices = @transform_10, window_bounds = array<i64: 1, 128>}, {pipeline_mode = #tpu.pipeline_mode<synchronous>, transform_indices = @transform_11, window_bounds = array<i64: 2, 128>}]} {
    %c0_i32 = arith.constant 0 : i32
    %0 = arith.cmpi eq, %arg0, %c0_i32 : i32
    %1 = arith.extui %0 : i1 to i32
    %c0_i32_0 = arith.constant 0 : i32
    %2 = arith.cmpi ne, %1, %c0_i32_0 : i32
    scf.if %2 {
      %c0_104 = arith.constant 0 : index
      %c0_105 = arith.constant 0 : index
      %272 = vector.load %arg1[%c0_104, %c0_105] : memref<16x128xf32, #tpu.memory_space<vmem>>, vector<16x128xf32>
      %c0_106 = arith.constant 0 : index
      %c0_107 = arith.constant 0 : index
      %273 = vector.load %arg13[%c0_106, %c0_107] : memref<16x128xf32, #tpu.memory_space<vmem>>, vector<16x128xf32>
      tpu.vector_store %arg13[%c0_106, %c0_107], %272 {strides = array<i32>} : memref<16x128xf32, #tpu.memory_space<vmem>>, vector<16x128xf32>,
    } else {
    }
    %c0 = arith.constant 0 : index
    %c0_1 = arith.constant 0 : index
    %3 = vector.load %arg13[%c0, %c0_1] : memref<16x128xf32, #tpu.memory_space<vmem>>, vector<16x128xf32>
    %c0_2 = arith.constant 0 : index
    %c0_3 = arith.constant 0 : index
    %c0_4 = arith.constant 0 : index
    %4 = vector.load %arg3[%c0_2, %c0_3, %c0_4] : memref<1x1x128xf32, #tpu.memory_space<vmem>>, vector<1x1x128xf32>
    %5 = vector.shape_cast %4 : vector<1x1x128xf32> to vector<1x128xf32>
    %6 = arith.mulf %3, %3 : vector<16x128xf32>
    %cst = arith.constant dense<0.000000e+00> : vector<16xf32>
    %7 = vector.multi_reduction <add>, %6, %cst [1] : vector<16x128xf32> to vector<16xf32>
    %8 = vector.shape_cast %7 : vector<16xf32> to vector<16x1xf32>
    %cst_5 = arith.constant 1.280000e+02 : f32
    %9 = vector.broadcast %cst_5 : f32 to vector<16x1xf32>
    %10 = arith.divf %8, %9 : vector<16x1xf32>
    %cst_6 = arith.constant 9.99999997E-7 : f32
    %11 = vector.broadcast %cst_6 : f32 to vector<16x1xf32>
    %12 = arith.addf %10, %11 : vector<16x1xf32>
    %13 = math.rsqrt %12 : vector<16x1xf32>
    %14 = vector.broadcast %13 : vector<16x1xf32> to vector<16x128xf32>
    %15 = arith.mulf %3, %14 : vector<16x128xf32>
    %16 = vector.broadcast %5 : vector<1x128xf32> to vector<16x128xf32>
    %17 = arith.mulf %15, %16 : vector<16x128xf32>
    %18 = arith.truncf %17 : vector<16x128xf32> to vector<16x128xbf16>
    %c0_7 = arith.constant 0 : index
    %c0_8 = arith.constant 0 : index
    %c0_9 = arith.constant 0 : index
    %19 = vector.load %arg4[%c0_7, %c0_8, %c0_9] : memref<1x128x1536xbf16, #tpu.memory_space<vmem>>, vector<1x128x1536xbf16>
    %20 = vector.shape_cast %19 : vector<1x128x1536xbf16> to vector<128x1536xbf16>
    %cst_10 = arith.constant dense<0.000000e+00> : vector<16x1536xf32>
    %21 = tpu.matmul %18, %20, %cst_10 {dimension_numbers = #tpu.dot_dimension_numbers<[1], [0], [0], [1], [0, 0, 1, 1], [], []>} : vector<16x128xbf16>, vector<128x1536xbf16>, vector<16x1536xf32> -> vector<16x1536xf32>
    %22 = vector.extract_strided_slice %21 {offsets = [0, 0], sizes = [16, 512], strides = [1, 1]} : vector<16x1536xf32> to vector<16x512xf32>
    %23 = vector.extract_strided_slice %21 {offsets = [0, 512], sizes = [16, 512], strides = [1, 1]} : vector<16x1536xf32> to vector<16x512xf32>
    %24 = vector.extract_strided_slice %21 {offsets = [0, 1024], sizes = [16, 512], strides = [1, 1]} : vector<16x1536xf32> to vector<16x512xf32>
    %cst_11 = arith.constant 0.000000e+00 : f32
    %25 = vector.broadcast %cst_11 : f32 to vector<16x128xf32>
    %26 = vector.extract_strided_slice %22 {offsets = [0, 0], sizes = [16, 64], strides = [1, 1]} : vector<16x512xf32> to vector<16x64xf32>
    %27 = arith.truncf %26 : vector<16x64xf32> to vector<16x64xbf16>
    %28 = vector.extract_strided_slice %23 {offsets = [0, 0], sizes = [16, 64], strides = [1, 1]} : vector<16x512xf32> to vector<16x64xf32>
    %29 = arith.truncf %28 : vector<16x64xf32> to vector<16x64xbf16>
    %30 = vector.extract_strided_slice %24 {offsets = [0, 0], sizes = [16, 64], strides = [1, 1]} : vector<16x512xf32> to vector<16x64xf32>
    %31 = arith.truncf %30 : vector<16x64xf32> to vector<16x64xbf16>
    %cst_12 = arith.constant dense<0.000000e+00> : vector<16x16xf32>
    %32 = tpu.matmul %27, %29, %cst_12 {dimension_numbers = #tpu.dot_dimension_numbers<[1], [1], [0], [0], [0, 0, 1, 0], [], []>} : vector<16x64xbf16>, vector<16x64xbf16>, vector<16x16xf32> -> vector<16x16xf32>
    %c0_13 = arith.constant 0 : index
    %c0_14 = arith.constant 0 : index
    %c0_15 = arith.constant 0 : index
    %33 = vector.load %arg2[%c0_13, %c0_14, %c0_15] : memref<8x16x16xf32, #tpu.memory_space<vmem>>, vector<1x16x16xf32>
    %34 = vector.shape_cast %33 : vector<1x16x16xf32> to vector<16x16xf32>
    %35 = arith.addf %32, %34 : vector<16x16xf32>
    %cst_16 = arith.constant dense<0xFF800000> : vector<16xf32>
    %36 = vector.multi_reduction <maximumf>, %35, %cst_16 [1] : vector<16x16xf32> to vector<16xf32>
    %37 = vector.shape_cast %36 : vector<16xf32> to vector<16x1xf32>
    %38 = vector.broadcast %37 : vector<16x1xf32> to vector<16x16xf32>
    %39 = arith.subf %35, %38 : vector<16x16xf32>
    %40 = math.exp %39 : vector<16x16xf32>
    %cst_17 = arith.constant dense<0.000000e+00> : vector<16xf32>
    %41 = vector.multi_reduction <add>, %40, %cst_17 [1] : vector<16x16xf32> to vector<16xf32>
    %42 = vector.shape_cast %41 : vector<16xf32> to vector<16x1xf32>
    %43 = tpu.reciprocal %42 {approx = true} : vector<16x1xf32> -> vector<16x1xf32>
    %44 = vector.broadcast %43 : vector<16x1xf32> to vector<16x16xf32>
    %45 = arith.mulf %40, %44 : vector<16x16xf32>
    %46 = arith.truncf %45 : vector<16x16xf32> to vector<16x16xbf16>
    %cst_18 = arith.constant dense<0.000000e+00> : vector<16x64xf32>
    %47 = tpu.matmul %46, %31, %cst_18 {dimension_numbers = #tpu.dot_dimension_numbers<[1], [0], [0], [1], [0, 0, 1, 1], [], []>} : vector<16x16xbf16>, vector<16x64xbf16>, vector<16x64xf32> -> vector<16x64xf32>
    %48 = arith.truncf %47 : vector<16x64xf32> to vector<16x64xbf16>
    %c0_19 = arith.constant 0 : index
    %c0_20 = arith.constant 0 : index
    %c0_21 = arith.constant 0 : index
    %49 = vector.load %arg5[%c0_19, %c0_20, %c0_21] : memref<1x512x128xbf16, #tpu.memory_space<vmem>>, vector<1x64x128xbf16>
    %50 = vector.shape_cast %49 : vector<1x64x128xbf16> to vector<64x128xbf16>
    %cst_22 = arith.constant dense<0.000000e+00> : vector<16x128xf32>
    %51 = tpu.matmul %48, %50, %cst_22 {dimension_numbers = #tpu.dot_dimension_numbers<[1], [0], [0], [1], [0, 0, 1, 1], [], []>} : vector<16x64xbf16>, vector<64x128xbf16>, vector<16x128xf32> -> vector<16x128xf32>
    %52 = arith.addf %25, %51 : vector<16x128xf32>
    %53 = vector.extract_strided_slice %22 {offsets = [0, 64], sizes = [16, 64], strides = [1, 1]} : vector<16x512xf32> to vector<16x64xf32>
    %54 = arith.truncf %53 : vector<16x64xf32> to vector<16x64xbf16>
    %55 = vector.extract_strided_slice %23 {offsets = [0, 64], sizes = [16, 64], strides = [1, 1]} : vector<16x512xf32> to vector<16x64xf32>
    %56 = arith.truncf %55 : vector<16x64xf32> to vector<16x64xbf16>
    %57 = vector.extract_strided_slice %24 {offsets = [0, 64], sizes = [16, 64], strides = [1, 1]} : vector<16x512xf32> to vector<16x64xf32>
    %58 = arith.truncf %57 : vector<16x64xf32> to vector<16x64xbf16>
    %cst_23 = arith.constant dense<0.000000e+00> : vector<16x16xf32>
    %59 = tpu.matmul %54, %56, %cst_23 {dimension_numbers = #tpu.dot_dimension_numbers<[1], [1], [0], [0], [0, 0, 1, 0], [], []>} : vector<16x64xbf16>, vector<16x64xbf16>, vector<16x16xf32> -> vector<16x16xf32>
    %c1 = arith.constant 1 : index
    %c0_24 = arith.constant 0 : index
    %c0_25 = arith.constant 0 : index
    %60 = vector.load %arg2[%c1, %c0_24, %c0_25] : memref<8x16x16xf32, #tpu.memory_space<vmem>>, vector<1x16x16xf32>
    %61 = vector.shape_cast %60 : vector<1x16x16xf32> to vector<16x16xf32>
    %62 = arith.addf %59, %61 : vector<16x16xf32>
    %cst_26 = arith.constant dense<0xFF800000> : vector<16xf32>
    %63 = vector.multi_reduction <maximumf>, %62, %cst_26 [1] : vector<16x16xf32> to vector<16xf32>
    %64 = vector.shape_cast %63 : vector<16xf32> to vector<16x1xf32>
    %65 = vector.broadcast %64 : vector<16x1xf32> to vector<16x16xf32>
    %66 = arith.subf %62, %65 : vector<16x16xf32>
    %67 = math.exp %66 : vector<16x16xf32>
    %cst_27 = arith.constant dense<0.000000e+00> : vector<16xf32>
    %68 = vector.multi_reduction <add>, %67, %cst_27 [1] : vector<16x16xf32> to vector<16xf32>
    %69 = vector.shape_cast %68 : vector<16xf32> to vector<16x1xf32>
    %70 = tpu.reciprocal %69 {approx = true} : vector<16x1xf32> -> vector<16x1xf32>
    %71 = vector.broadcast %70 : vector<16x1xf32> to vector<16x16xf32>
    %72 = arith.mulf %67, %71 : vector<16x16xf32>
    %73 = arith.truncf %72 : vector<16x16xf32> to vector<16x16xbf16>
    %cst_28 = arith.constant dense<0.000000e+00> : vector<16x64xf32>
    %74 = tpu.matmul %73, %58, %cst_28 {dimension_numbers = #tpu.dot_dimension_numbers<[1], [0], [0], [1], [0, 0, 1, 1], [], []>} : vector<16x16xbf16>, vector<16x64xbf16>, vector<16x64xf32> -> vector<16x64xf32>
    %75 = arith.truncf %74 : vector<16x64xf32> to vector<16x64xbf16>
    %c0_29 = arith.constant 0 : index
    %c64 = arith.constant 64 : index
    %c0_30 = arith.constant 0 : index
    %76 = vector.load %arg5[%c0_29, %c64, %c0_30] : memref<1x512x128xbf16, #tpu.memory_space<vmem>>, vector<1x64x128xbf16>
    %77 = vector.shape_cast %76 : vector<1x64x128xbf16> to vector<64x128xbf16>
    %cst_31 = arith.constant dense<0.000000e+00> : vector<16x128xf32>
    %78 = tpu.matmul %75, %77, %cst_31 {dimension_numbers = #tpu.dot_dimension_numbers<[1], [0], [0], [1], [0, 0, 1, 1], [], []>} : vector<16x64xbf16>, vector<64x128xbf16>, vector<16x128xf32> -> vector<16x128xf32>
    %79 = arith.addf %52, %78 : vector<16x128xf32>
    %80 = vector.extract_strided_slice %22 {offsets = [0, 128], sizes = [16, 64], strides = [1, 1]} : vector<16x512xf32> to vector<16x64xf32>
    %81 = arith.truncf %80 : vector<16x64xf32> to vector<16x64xbf16>
    %82 = vector.extract_strided_slice %23 {offsets = [0, 128], sizes = [16, 64], strides = [1, 1]} : vector<16x512xf32> to vector<16x64xf32>
    %83 = arith.truncf %82 : vector<16x64xf32> to vector<16x64xbf16>
    %84 = vector.extract_strided_slice %24 {offsets = [0, 128], sizes = [16, 64], strides = [1, 1]} : vector<16x512xf32> to vector<16x64xf32>
    %85 = arith.truncf %84 : vector<16x64xf32> to vector<16x64xbf16>
    %cst_32 = arith.constant dense<0.000000e+00> : vector<16x16xf32>
    %86 = tpu.matmul %81, %83, %cst_32 {dimension_numbers = #tpu.dot_dimension_numbers<[1], [1], [0], [0], [0, 0, 1, 0], [], []>} : vector<16x64xbf16>, vector<16x64xbf16>, vector<16x16xf32> -> vector<16x16xf32>
    %c2 = arith.constant 2 : index
    %c0_33 = arith.constant 0 : index
    %c0_34 = arith.constant 0 : index
    %87 = vector.load %arg2[%c2, %c0_33, %c0_34] : memref<8x16x16xf32, #tpu.memory_space<vmem>>, vector<1x16x16xf32>
    %88 = vector.shape_cast %87 : vector<1x16x16xf32> to vector<16x16xf32>
    %89 = arith.addf %86, %88 : vector<16x16xf32>
    %cst_35 = arith.constant dense<0xFF800000> : vector<16xf32>
    %90 = vector.multi_reduction <maximumf>, %89, %cst_35 [1] : vector<16x16xf32> to vector<16xf32>
    %91 = vector.shape_cast %90 : vector<16xf32> to vector<16x1xf32>
    %92 = vector.broadcast %91 : vector<16x1xf32> to vector<16x16xf32>
    %93 = arith.subf %89, %92 : vector<16x16xf32>
    %94 = math.exp %93 : vector<16x16xf32>
    %cst_36 = arith.constant dense<0.000000e+00> : vector<16xf32>
    %95 = vector.multi_reduction <add>, %94, %cst_36 [1] : vector<16x16xf32> to vector<16xf32>
    %96 = vector.shape_cast %95 : vector<16xf32> to vector<16x1xf32>
    %97 = tpu.reciprocal %96 {approx = true} : vector<16x1xf32> -> vector<16x1xf32>
    %98 = vector.broadcast %97 : vector<16x1xf32> to vector<16x16xf32>
    %99 = arith.mulf %94, %98 : vector<16x16xf32>
    %100 = arith.truncf %99 : vector<16x16xf32> to vector<16x16xbf16>
    %cst_37 = arith.constant dense<0.000000e+00> : vector<16x64xf32>
    %101 = tpu.matmul %100, %85, %cst_37 {dimension_numbers = #tpu.dot_dimension_numbers<[1], [0], [0], [1], [0, 0, 1, 1], [], []>} : vector<16x16xbf16>, vector<16x64xbf16>, vector<16x64xf32> -> vector<16x64xf32>
    %102 = arith.truncf %101 : vector<16x64xf32> to vector<16x64xbf16>
    %c0_38 = arith.constant 0 : index
    %c128 = arith.constant 128 : index
    %c0_39 = arith.constant 0 : index
    %103 = vector.load %arg5[%c0_38, %c128, %c0_39] : memref<1x512x128xbf16, #tpu.memory_space<vmem>>, vector<1x64x128xbf16>
    %104 = vector.shape_cast %103 : vector<1x64x128xbf16> to vector<64x128xbf16>
    %cst_40 = arith.constant dense<0.000000e+00> : vector<16x128xf32>
    %105 = tpu.matmul %102, %104, %cst_40 {dimension_numbers = #tpu.dot_dimension_numbers<[1], [0], [0], [1], [0, 0, 1, 1], [], []>} : vector<16x64xbf16>, vector<64x128xbf16>, vector<16x128xf32> -> vector<16x128xf32>
    %106 = arith.addf %79, %105 : vector<16x128xf32>
    %107 = vector.extract_strided_slice %22 {offsets = [0, 192], sizes = [16, 64], strides = [1, 1]} : vector<16x512xf32> to vector<16x64xf32>
    %108 = arith.truncf %107 : vector<16x64xf32> to vector<16x64xbf16>
    %109 = vector.extract_strided_slice %23 {offsets = [0, 192], sizes = [16, 64], strides = [1, 1]} : vector<16x512xf32> to vector<16x64xf32>
    %110 = arith.truncf %109 : vector<16x64xf32> to vector<16x64xbf16>
    %111 = vector.extract_strided_slice %24 {offsets = [0, 192], sizes = [16, 64], strides = [1, 1]} : vector<16x512xf32> to vector<16x64xf32>
    %112 = arith.truncf %111 : vector<16x64xf32> to vector<16x64xbf16>
    %cst_41 = arith.constant dense<0.000000e+00> : vector<16x16xf32>
    %113 = tpu.matmul %108, %110, %cst_41 {dimension_numbers = #tpu.dot_dimension_numbers<[1], [1], [0], [0], [0, 0, 1, 0], [], []>} : vector<16x64xbf16>, vector<16x64xbf16>, vector<16x16xf32> -> vector<16x16xf32>
    %c3 = arith.constant 3 : index
    %c0_42 = arith.constant 0 : index
    %c0_43 = arith.constant 0 : index
    %114 = vector.load %arg2[%c3, %c0_42, %c0_43] : memref<8x16x16xf32, #tpu.memory_space<vmem>>, vector<1x16x16xf32>
    %115 = vector.shape_cast %114 : vector<1x16x16xf32> to vector<16x16xf32>
    %116 = arith.addf %113, %115 : vector<16x16xf32>
    %cst_44 = arith.constant dense<0xFF800000> : vector<16xf32>
    %117 = vector.multi_reduction <maximumf>, %116, %cst_44 [1] : vector<16x16xf32> to vector<16xf32>
    %118 = vector.shape_cast %117 : vector<16xf32> to vector<16x1xf32>
    %119 = vector.broadcast %118 : vector<16x1xf32> to vector<16x16xf32>
    %120 = arith.subf %116, %119 : vector<16x16xf32>
    %121 = math.exp %120 : vector<16x16xf32>
    %cst_45 = arith.constant dense<0.000000e+00> : vector<16xf32>
    %122 = vector.multi_reduction <add>, %121, %cst_45 [1] : vector<16x16xf32> to vector<16xf32>
    %123 = vector.shape_cast %122 : vector<16xf32> to vector<16x1xf32>
    %124 = tpu.reciprocal %123 {approx = true} : vector<16x1xf32> -> vector<16x1xf32>
    %125 = vector.broadcast %124 : vector<16x1xf32> to vector<16x16xf32>
    %126 = arith.mulf %121, %125 : vector<16x16xf32>
    %127 = arith.truncf %126 : vector<16x16xf32> to vector<16x16xbf16>
    %cst_46 = arith.constant dense<0.000000e+00> : vector<16x64xf32>
    %128 = tpu.matmul %127, %112, %cst_46 {dimension_numbers = #tpu.dot_dimension_numbers<[1], [0], [0], [1], [0, 0, 1, 1], [], []>} : vector<16x16xbf16>, vector<16x64xbf16>, vector<16x64xf32> -> vector<16x64xf32>
    %129 = arith.truncf %128 : vector<16x64xf32> to vector<16x64xbf16>
    %c0_47 = arith.constant 0 : index
    %c192 = arith.constant 192 : index
    %c0_48 = arith.constant 0 : index
    %130 = vector.load %arg5[%c0_47, %c192, %c0_48] : memref<1x512x128xbf16, #tpu.memory_space<vmem>>, vector<1x64x128xbf16>
    %131 = vector.shape_cast %130 : vector<1x64x128xbf16> to vector<64x128xbf16>
    %cst_49 = arith.constant dense<0.000000e+00> : vector<16x128xf32>
    %132 = tpu.matmul %129, %131, %cst_49 {dimension_numbers = #tpu.dot_dimension_numbers<[1], [0], [0], [1], [0, 0, 1, 1], [], []>} : vector<16x64xbf16>, vector<64x128xbf16>, vector<16x128xf32> -> vector<16x128xf32>
    %133 = arith.addf %106, %132 : vector<16x128xf32>
    %134 = vector.extract_strided_slice %22 {offsets = [0, 256], sizes = [16, 64], strides = [1, 1]} : vector<16x512xf32> to vector<16x64xf32>
    %135 = arith.truncf %134 : vector<16x64xf32> to vector<16x64xbf16>
    %136 = vector.extract_strided_slice %23 {offsets = [0, 256], sizes = [16, 64], strides = [1, 1]} : vector<16x512xf32> to vector<16x64xf32>
    %137 = arith.truncf %136 : vector<16x64xf32> to vector<16x64xbf16>
    %138 = vector.extract_strided_slice %24 {offsets = [0, 256], sizes = [16, 64], strides = [1, 1]} : vector<16x512xf32> to vector<16x64xf32>
    %139 = arith.truncf %138 : vector<16x64xf32> to vector<16x64xbf16>
    %cst_50 = arith.constant dense<0.000000e+00> : vector<16x16xf32>
    %140 = tpu.matmul %135, %137, %cst_50 {dimension_numbers = #tpu.dot_dimension_numbers<[1], [1], [0], [0], [0, 0, 1, 0], [], []>} : vector<16x64xbf16>, vector<16x64xbf16>, vector<16x16xf32> -> vector<16x16xf32>
    %c4 = arith.constant 4 : index
    %c0_51 = arith.constant 0 : index
    %c0_52 = arith.constant 0 : index
    %141 = vector.load %arg2[%c4, %c0_51, %c0_52] : memref<8x16x16xf32, #tpu.memory_space<vmem>>, vector<1x16x16xf32>
    %142 = vector.shape_cast %141 : vector<1x16x16xf32> to vector<16x16xf32>
    %143 = arith.addf %140, %142 : vector<16x16xf32>
    %cst_53 = arith.constant dense<0xFF800000> : vector<16xf32>
    %144 = vector.multi_reduction <maximumf>, %143, %cst_53 [1] : vector<16x16xf32> to vector<16xf32>
    %145 = vector.shape_cast %144 : vector<16xf32> to vector<16x1xf32>
    %146 = vector.broadcast %145 : vector<16x1xf32> to vector<16x16xf32>
    %147 = arith.subf %143, %146 : vector<16x16xf32>
    %148 = math.exp %147 : vector<16x16xf32>
    %cst_54 = arith.constant dense<0.000000e+00> : vector<16xf32>
    %149 = vector.multi_reduction <add>, %148, %cst_54 [1] : vector<16x16xf32> to vector<16xf32>
    %150 = vector.shape_cast %149 : vector<16xf32> to vector<16x1xf32>
    %151 = tpu.reciprocal %150 {approx = true} : vector<16x1xf32> -> vector<16x1xf32>
    %152 = vector.broadcast %151 : vector<16x1xf32> to vector<16x16xf32>
    %153 = arith.mulf %148, %152 : vector<16x16xf32>
    %154 = arith.truncf %153 : vector<16x16xf32> to vector<16x16xbf16>
    %cst_55 = arith.constant dense<0.000000e+00> : vector<16x64xf32>
    %155 = tpu.matmul %154, %139, %cst_55 {dimension_numbers = #tpu.dot_dimension_numbers<[1], [0], [0], [1], [0, 0, 1, 1], [], []>} : vector<16x16xbf16>, vector<16x64xbf16>, vector<16x64xf32> -> vector<16x64xf32>
    %156 = arith.truncf %155 : vector<16x64xf32> to vector<16x64xbf16>
    %c0_56 = arith.constant 0 : index
    %c256 = arith.constant 256 : index
    %c0_57 = arith.constant 0 : index
    %157 = vector.load %arg5[%c0_56, %c256, %c0_57] : memref<1x512x128xbf16, #tpu.memory_space<vmem>>, vector<1x64x128xbf16>
    %158 = vector.shape_cast %157 : vector<1x64x128xbf16> to vector<64x128xbf16>
    %cst_58 = arith.constant dense<0.000000e+00> : vector<16x128xf32>
    %159 = tpu.matmul %156, %158, %cst_58 {dimension_numbers = #tpu.dot_dimension_numbers<[1], [0], [0], [1], [0, 0, 1, 1], [], []>} : vector<16x64xbf16>, vector<64x128xbf16>, vector<16x128xf32> -> vector<16x128xf32>
    %160 = arith.addf %133, %159 : vector<16x128xf32>
    %161 = vector.extract_strided_slice %22 {offsets = [0, 320], sizes = [16, 64], strides = [1, 1]} : vector<16x512xf32> to vector<16x64xf32>
    %162 = arith.truncf %161 : vector<16x64xf32> to vector<16x64xbf16>
    %163 = vector.extract_strided_slice %23 {offsets = [0, 320], sizes = [16, 64], strides = [1, 1]} : vector<16x512xf32> to vector<16x64xf32>
    %164 = arith.truncf %163 : vector<16x64xf32> to vector<16x64xbf16>
    %165 = vector.extract_strided_slice %24 {offsets = [0, 320], sizes = [16, 64], strides = [1, 1]} : vector<16x512xf32> to vector<16x64xf32>
    %166 = arith.truncf %165 : vector<16x64xf32> to vector<16x64xbf16>
    %cst_59 = arith.constant dense<0.000000e+00> : vector<16x16xf32>
    %167 = tpu.matmul %162, %164, %cst_59 {dimension_numbers = #tpu.dot_dimension_numbers<[1], [1], [0], [0], [0, 0, 1, 0], [], []>} : vector<16x64xbf16>, vector<16x64xbf16>, vector<16x16xf32> -> vector<16x16xf32>
    %c5 = arith.constant 5 : index
    %c0_60 = arith.constant 0 : index
    %c0_61 = arith.constant 0 : index
    %168 = vector.load %arg2[%c5, %c0_60, %c0_61] : memref<8x16x16xf32, #tpu.memory_space<vmem>>, vector<1x16x16xf32>
    %169 = vector.shape_cast %168 : vector<1x16x16xf32> to vector<16x16xf32>
    %170 = arith.addf %167, %169 : vector<16x16xf32>
    %cst_62 = arith.constant dense<0xFF800000> : vector<16xf32>
    %171 = vector.multi_reduction <maximumf>, %170, %cst_62 [1] : vector<16x16xf32> to vector<16xf32>
    %172 = vector.shape_cast %171 : vector<16xf32> to vector<16x1xf32>
    %173 = vector.broadcast %172 : vector<16x1xf32> to vector<16x16xf32>
    %174 = arith.subf %170, %173 : vector<16x16xf32>
    %175 = math.exp %174 : vector<16x16xf32>
    %cst_63 = arith.constant dense<0.000000e+00> : vector<16xf32>
    %176 = vector.multi_reduction <add>, %175, %cst_63 [1] : vector<16x16xf32> to vector<16xf32>
    %177 = vector.shape_cast %176 : vector<16xf32> to vector<16x1xf32>
    %178 = tpu.reciprocal %177 {approx = true} : vector<16x1xf32> -> vector<16x1xf32>
    %179 = vector.broadcast %178 : vector<16x1xf32> to vector<16x16xf32>
    %180 = arith.mulf %175, %179 : vector<16x16xf32>
    %181 = arith.truncf %180 : vector<16x16xf32> to vector<16x16xbf16>
    %cst_64 = arith.constant dense<0.000000e+00> : vector<16x64xf32>
    %182 = tpu.matmul %181, %166, %cst_64 {dimension_numbers = #tpu.dot_dimension_numbers<[1], [0], [0], [1], [0, 0, 1, 1], [], []>} : vector<16x16xbf16>, vector<16x64xbf16>, vector<16x64xf32> -> vector<16x64xf32>
    %183 = arith.truncf %182 : vector<16x64xf32> to vector<16x64xbf16>
    %c0_65 = arith.constant 0 : index
    %c320 = arith.constant 320 : index
    %c0_66 = arith.constant 0 : index
    %184 = vector.load %arg5[%c0_65, %c320, %c0_66] : memref<1x512x128xbf16, #tpu.memory_space<vmem>>, vector<1x64x128xbf16>
    %185 = vector.shape_cast %184 : vector<1x64x128xbf16> to vector<64x128xbf16>
    %cst_67 = arith.constant dense<0.000000e+00> : vector<16x128xf32>
    %186 = tpu.matmul %183, %185, %cst_67 {dimension_numbers = #tpu.dot_dimension_numbers<[1], [0], [0], [1], [0, 0, 1, 1], [], []>} : vector<16x64xbf16>, vector<64x128xbf16>, vector<16x128xf32> -> vector<16x128xf32>
    %187 = arith.addf %160, %186 : vector<16x128xf32>
    %188 = vector.extract_strided_slice %22 {offsets = [0, 384], sizes = [16, 64], strides = [1, 1]} : vector<16x512xf32> to vector<16x64xf32>
    %189 = arith.truncf %188 : vector<16x64xf32> to vector<16x64xbf16>
    %190 = vector.extract_strided_slice %23 {offsets = [0, 384], sizes = [16, 64], strides = [1, 1]} : vector<16x512xf32> to vector<16x64xf32>
    %191 = arith.truncf %190 : vector<16x64xf32> to vector<16x64xbf16>
    %192 = vector.extract_strided_slice %24 {offsets = [0, 384], sizes = [16, 64], strides = [1, 1]} : vector<16x512xf32> to vector<16x64xf32>
    %193 = arith.truncf %192 : vector<16x64xf32> to vector<16x64xbf16>
    %cst_68 = arith.constant dense<0.000000e+00> : vector<16x16xf32>
    %194 = tpu.matmul %189, %191, %cst_68 {dimension_numbers = #tpu.dot_dimension_numbers<[1], [1], [0], [0], [0, 0, 1, 0], [], []>} : vector<16x64xbf16>, vector<16x64xbf16>, vector<16x16xf32> -> vector<16x16xf32>
    %c6 = arith.constant 6 : index
    %c0_69 = arith.constant 0 : index
    %c0_70 = arith.constant 0 : index
    %195 = vector.load %arg2[%c6, %c0_69, %c0_70] : memref<8x16x16xf32, #tpu.memory_space<vmem>>, vector<1x16x16xf32>
    %196 = vector.shape_cast %195 : vector<1x16x16xf32> to vector<16x16xf32>
    %197 = arith.addf %194, %196 : vector<16x16xf32>
    %cst_71 = arith.constant dense<0xFF800000> : vector<16xf32>
    %198 = vector.multi_reduction <maximumf>, %197, %cst_71 [1] : vector<16x16xf32> to vector<16xf32>
    %199 = vector.shape_cast %198 : vector<16xf32> to vector<16x1xf32>
    %200 = vector.broadcast %199 : vector<16x1xf32> to vector<16x16xf32>
    %201 = arith.subf %197, %200 : vector<16x16xf32>
    %202 = math.exp %201 : vector<16x16xf32>
    %cst_72 = arith.constant dense<0.000000e+00> : vector<16xf32>
    %203 = vector.multi_reduction <add>, %202, %cst_72 [1] : vector<16x16xf32> to vector<16xf32>
    %204 = vector.shape_cast %203 : vector<16xf32> to vector<16x1xf32>
    %205 = tpu.reciprocal %204 {approx = true} : vector<16x1xf32> -> vector<16x1xf32>
    %206 = vector.broadcast %205 : vector<16x1xf32> to vector<16x16xf32>
    %207 = arith.mulf %202, %206 : vector<16x16xf32>
    %208 = arith.truncf %207 : vector<16x16xf32> to vector<16x16xbf16>
    %cst_73 = arith.constant dense<0.000000e+00> : vector<16x64xf32>
    %209 = tpu.matmul %208, %193, %cst_73 {dimension_numbers = #tpu.dot_dimension_numbers<[1], [0], [0], [1], [0, 0, 1, 1], [], []>} : vector<16x16xbf16>, vector<16x64xbf16>, vector<16x64xf32> -> vector<16x64xf32>
    %210 = arith.truncf %209 : vector<16x64xf32> to vector<16x64xbf16>
    %c0_74 = arith.constant 0 : index
    %c384 = arith.constant 384 : index
    %c0_75 = arith.constant 0 : index
    %211 = vector.load %arg5[%c0_74, %c384, %c0_75] : memref<1x512x128xbf16, #tpu.memory_space<vmem>>, vector<1x64x128xbf16>
    %212 = vector.shape_cast %211 : vector<1x64x128xbf16> to vector<64x128xbf16>
    %cst_76 = arith.constant dense<0.000000e+00> : vector<16x128xf32>
    %213 = tpu.matmul %210, %212, %cst_76 {dimension_numbers = #tpu.dot_dimension_numbers<[1], [0], [0], [1], [0, 0, 1, 1], [], []>} : vector<16x64xbf16>, vector<64x128xbf16>, vector<16x128xf32> -> vector<16x128xf32>
    %214 = arith.addf %187, %213 : vector<16x128xf32>
    %215 = vector.extract_strided_slice %22 {offsets = [0, 448], sizes = [16, 64], strides = [1, 1]} : vector<16x512xf32> to vector<16x64xf32>
    %216 = arith.truncf %215 : vector<16x64xf32> to vector<16x64xbf16>
    %217 = vector.extract_strided_slice %23 {offsets = [0, 448], sizes = [16, 64], strides = [1, 1]} : vector<16x512xf32> to vector<16x64xf32>
    %218 = arith.truncf %217 : vector<16x64xf32> to vector<16x64xbf16>
    %219 = vector.extract_strided_slice %24 {offsets = [0, 448], sizes = [16, 64], strides = [1, 1]} : vector<16x512xf32> to vector<16x64xf32>
    %220 = arith.truncf %219 : vector<16x64xf32> to vector<16x64xbf16>
    %cst_77 = arith.constant dense<0.000000e+00> : vector<16x16xf32>
    %221 = tpu.matmul %216, %218, %cst_77 {dimension_numbers = #tpu.dot_dimension_numbers<[1], [1], [0], [0], [0, 0, 1, 0], [], []>} : vector<16x64xbf16>, vector<16x64xbf16>, vector<16x16xf32> -> vector<16x16xf32>
    %c7 = arith.constant 7 : index
    %c0_78 = arith.constant 0 : index
    %c0_79 = arith.constant 0 : index
    %222 = vector.load %arg2[%c7, %c0_78, %c0_79] : memref<8x16x16xf32, #tpu.memory_space<vmem>>, vector<1x16x16xf32>
    %223 = vector.shape_cast %222 : vector<1x16x16xf32> to vector<16x16xf32>
    %224 = arith.addf %221, %223 : vector<16x16xf32>
    %cst_80 = arith.constant dense<0xFF800000> : vector<16xf32>
    %225 = vector.multi_reduction <maximumf>, %224, %cst_80 [1] : vector<16x16xf32> to vector<16xf32>
    %226 = vector.shape_cast %225 : vector<16xf32> to vector<16x1xf32>
    %227 = vector.broadcast %226 : vector<16x1xf32> to vector<16x16xf32>
    %228 = arith.subf %224, %227 : vector<16x16xf32>
    %229 = math.exp %228 : vector<16x16xf32>
    %cst_81 = arith.constant dense<0.000000e+00> : vector<16xf32>
    %230 = vector.multi_reduction <add>, %229, %cst_81 [1] : vector<16x16xf32> to vector<16xf32>
    %231 = vector.shape_cast %230 : vector<16xf32> to vector<16x1xf32>
    %232 = tpu.reciprocal %231 {approx = true} : vector<16x1xf32> -> vector<16x1xf32>
    %233 = vector.broadcast %232 : vector<16x1xf32> to vector<16x16xf32>
    %234 = arith.mulf %229, %233 : vector<16x16xf32>
    %235 = arith.truncf %234 : vector<16x16xf32> to vector<16x16xbf16>
    %cst_82 = arith.constant dense<0.000000e+00> : vector<16x64xf32>
    %236 = tpu.matmul %235, %220, %cst_82 {dimension_numbers = #tpu.dot_dimension_numbers<[1], [0], [0], [1], [0, 0, 1, 1], [], []>} : vector<16x16xbf16>, vector<16x64xbf16>, vector<16x64xf32> -> vector<16x64xf32>
    %237 = arith.truncf %236 : vector<16x64xf32> to vector<16x64xbf16>
    %c0_83 = arith.constant 0 : index
    %c448 = arith.constant 448 : index
    %c0_84 = arith.constant 0 : index
    %238 = vector.load %arg5[%c0_83, %c448, %c0_84] : memref<1x512x128xbf16, #tpu.memory_space<vmem>>, vector<1x64x128xbf16>
    %239 = vector.shape_cast %238 : vector<1x64x128xbf16> to vector<64x128xbf16>
    %cst_85 = arith.constant dense<0.000000e+00> : vector<16x128xf32>
    %240 = tpu.matmul %237, %239, %cst_85 {dimension_numbers = #tpu.dot_dimension_numbers<[1], [0], [0], [1], [0, 0, 1, 1], [], []>} : vector<16x64xbf16>, vector<64x128xbf16>, vector<16x128xf32> -> vector<16x128xf32>
    %241 = arith.addf %214, %240 : vector<16x128xf32>
    %242 = arith.addf %3, %241 : vector<16x128xf32>
    %c0_86 = arith.constant 0 : index
    %c0_87 = arith.constant 0 : index
    %c0_88 = arith.constant 0 : index
    %243 = vector.load %arg6[%c0_86, %c0_87, %c0_88] : memref<1x1x128xf32, #tpu.memory_space<vmem>>, vector<1x1x128xf32>
    %244 = vector.shape_cast %243 : vector<1x1x128xf32> to vector<1x128xf32>
    %245 = arith.mulf %242, %242 : vector<16x128xf32>
    %cst_89 = arith.constant dense<0.000000e+00> : vector<16xf32>
    %246 = vector.multi_reduction <add>, %245, %cst_89 [1] : vector<16x128xf32> to vector<16xf32>
    %247 = vector.shape_cast %246 : vector<16xf32> to vector<16x1xf32>
    %cst_90 = arith.constant 1.280000e+02 : f32
    %248 = vector.broadcast %cst_90 : f32 to vector<16x1xf32>
    %249 = arith.divf %247, %248 : vector<16x1xf32>
    %cst_91 = arith.constant 9.99999997E-7 : f32
    %250 = vector.broadcast %cst_91 : f32 to vector<16x1xf32>
    %251 = arith.addf %249, %250 : vector<16x1xf32>
    %252 = math.rsqrt %251 : vector<16x1xf32>
    %253 = vector.broadcast %252 : vector<16x1xf32> to vector<16x128xf32>
    %254 = arith.mulf %242, %253 : vector<16x128xf32>
    %255 = vector.broadcast %244 : vector<1x128xf32> to vector<16x128xf32>
    %256 = arith.mulf %254, %255 : vector<16x128xf32>
    %257 = arith.truncf %256 : vector<16x128xf32> to vector<16x128xbf16>
    %c0_92 = arith.constant 0 : index
    %c0_93 = arith.constant 0 : index
    %c0_94 = arith.constant 0 : index
    %258 = vector.load %arg7[%c0_92, %c0_93, %c0_94] : memref<1x128x256xbf16, #tpu.memory_space<vmem>>, vector<1x128x256xbf16>
    %259 = vector.shape_cast %258 : vector<1x128x256xbf16> to vector<128x256xbf16>
    %cst_95 = arith.constant dense<0.000000e+00> : vector<16x256xf32>
    %260 = tpu.matmul %257, %259, %cst_95 {dimension_numbers = #tpu.dot_dimension_numbers<[1], [0], [0], [1], [0, 0, 1, 1], [], []>} : vector<16x128xbf16>, vector<128x256xbf16>, vector<16x256xf32> -> vector<16x256xf32>
    %cst_96 = arith.constant 0.000000e+00 : f32
    %261 = vector.broadcast %cst_96 : f32 to vector<16x256xf32>
    %262 = arith.maximumf %260, %261 : vector<16x256xf32>
    %263 = arith.truncf %262 : vector<16x256xf32> to vector<16x256xbf16>
    %c0_97 = arith.constant 0 : index
    %c0_98 = arith.constant 0 : index
    %c0_99 = arith.constant 0 : index
    %264 = vector.load %arg8[%c0_97, %c0_98, %c0_99] : memref<1x256x128xbf16, #tpu.memory_space<vmem>>, vector<1x256x128xbf16>
    %265 = vector.shape_cast %264 : vector<1x256x128xbf16> to vector<256x128xbf16>
    %cst_100 = arith.constant dense<0.000000e+00> : vector<16x128xf32>
    %266 = tpu.matmul %263, %265, %cst_100 {dimension_numbers = #tpu.dot_dimension_numbers<[1], [0], [0], [1], [0, 0, 1, 1], [], []>} : vector<16x256xbf16>, vector<256x128xbf16>, vector<16x128xf32> -> vector<16x128xf32>
    %267 = arith.addf %242, %266 : vector<16x128xf32>
    %c0_101 = arith.constant 0 : index
    %c0_102 = arith.constant 0 : index
    %268 = vector.load %arg13[%c0_101, %c0_102] : memref<16x128xf32, #tpu.memory_space<vmem>>, vector<16x128xf32>
    tpu.vector_store %arg13[%c0_101, %c0_102], %267 {strides = array<i32>} : memref<16x128xf32, #tpu.memory_space<vmem>>, vector<16x128xf32>,
    %c2_i32 = arith.constant 2 : i32
    %269 = arith.cmpi eq, %arg0, %c2_i32 : i32
    %270 = arith.extui %269 : i1 to i32
    %c0_i32_103 = arith.constant 0 : i32
    %271 = arith.cmpi ne, %270, %c0_i32_103 : i32
    scf.if %271 {
      %272 = vector.extract_strided_slice %267 {offsets = [0, 0], sizes = [1, 128], strides = [1, 1]} : vector<16x128xf32> to vector<1x128xf32>
      %273 = vector.extract_strided_slice %267 {offsets = [8, 0], sizes = [1, 128], strides = [1, 1]} : vector<16x128xf32> to vector<1x128xf32>
      %274 = tpu.concatenate %272, %273 in 0 : vector<1x128xf32>, vector<1x128xf32> -> vector<2x128xf32>
      %c0_104 = arith.constant 0 : index
      %c0_105 = arith.constant 0 : index
      %275 = vector.load %arg9[%c0_104, %c0_105] : memref<1x128xf32, #tpu.memory_space<vmem>>, vector<1x128xf32>
      %276 = arith.mulf %274, %274 : vector<2x128xf32>
      %cst_106 = arith.constant dense<0.000000e+00> : vector<2xf32>
      %277 = vector.multi_reduction <add>, %276, %cst_106 [1] : vector<2x128xf32> to vector<2xf32>
      %278 = vector.shape_cast %277 : vector<2xf32> to vector<2x1xf32>
      %cst_107 = arith.constant 1.280000e+02 : f32
      %279 = vector.broadcast %cst_107 : f32 to vector<2x1xf32>
      %280 = arith.divf %278, %279 : vector<2x1xf32>
      %cst_108 = arith.constant 9.99999997E-7 : f32
      %281 = vector.broadcast %cst_108 : f32 to vector<2x1xf32>
      %282 = arith.addf %280, %281 : vector<2x1xf32>
      %283 = math.rsqrt %282 : vector<2x1xf32>
      %284 = vector.broadcast %283 : vector<2x1xf32> to vector<2x128xf32>
      %285 = arith.mulf %274, %284 : vector<2x128xf32>
      %286 = vector.broadcast %275 : vector<1x128xf32> to vector<2x128xf32>
      %287 = arith.mulf %285, %286 : vector<2x128xf32>
      %288 = arith.truncf %287 : vector<2x128xf32> to vector<2x128xbf16>
      %c0_109 = arith.constant 0 : index
      %c0_110 = arith.constant 0 : index
      %289 = vector.load %arg10[%c0_109, %c0_110] : memref<128x128xbf16, #tpu.memory_space<vmem>>, vector<128x128xbf16>
      %cst_111 = arith.constant dense<0.000000e+00> : vector<2x128xf32>
      %290 = tpu.matmul %288, %289, %cst_111 {dimension_numbers = #tpu.dot_dimension_numbers<[1], [0], [0], [1], [0, 0, 1, 1], [], []>} : vector<2x128xbf16>, vector<128x128xbf16>, vector<2x128xf32> -> vector<2x128xf32>
      %c0_112 = arith.constant 0 : index
      %c0_113 = arith.constant 0 : index
      %291 = vector.load %arg11[%c0_112, %c0_113] : memref<1x128xf32, #tpu.memory_space<vmem>>, vector<1x128xf32>
      %292 = vector.broadcast %291 : vector<1x128xf32> to vector<2x128xf32>
      %293 = arith.addf %290, %292 : vector<2x128xf32>
      %cst_114 = arith.constant dense<0xFF800000> : vector<2xf32>
      %294 = vector.multi_reduction <maximumf>, %293, %cst_114 [1] : vector<2x128xf32> to vector<2xf32>
      %295 = vector.shape_cast %294 : vector<2xf32> to vector<2x1xf32>
      %296 = vector.broadcast %295 : vector<2x1xf32> to vector<2x128xf32>
      %297 = arith.subf %293, %296 : vector<2x128xf32>
      %298 = math.exp %297 : vector<2x128xf32>
      %cst_115 = arith.constant dense<0.000000e+00> : vector<2xf32>
      %299 = vector.multi_reduction <add>, %298, %cst_115 [1] : vector<2x128xf32> to vector<2xf32>
      %300 = vector.shape_cast %299 : vector<2xf32> to vector<2x1xf32>
      %301 = vector.broadcast %300 : vector<2x1xf32> to vector<2x128xf32>
      %302 = arith.divf %298, %301 : vector<2x128xf32>
      %c0_116 = arith.constant 0 : index
      %c0_117 = arith.constant 0 : index
      %303 = vector.load %arg12[%c0_116, %c0_117] : memref<2x128xf32, #tpu.memory_space<vmem>>, vector<2x128xf32>
      tpu.vector_store %arg12[%c0_116, %c0_117], %302 {strides = array<i32>} : memref<2x128xf32, #tpu.memory_space<vmem>>, vector<2x128xf32>,
    } else {
    }
    return
  }
  func.func @transform_0(%arg0: i32) -> (i32, i32) {
    %c0_i32 = arith.constant 0 : i32
    %c0_i32_0 = arith.constant 0 : i32
    %c0_i32_1 = arith.constant 0 : i32
    return %c0_i32, %c0_i32_0 : i32, i32
  }
  func.func @transform_1(%arg0: i32) -> (i32, i32, i32) {
    %c0_i32 = arith.constant 0 : i32
    %c0_i32_0 = arith.constant 0 : i32
    %c0_i32_1 = arith.constant 0 : i32
    %c0_i32_2 = arith.constant 0 : i32
    return %c0_i32, %c0_i32_0, %c0_i32_1 : i32, i32, i32
  }
  func.func @transform_2(%arg0: i32) -> (i32, i32, i32) {
    %c0_i32 = arith.constant 0 : i32
    %c0_i32_0 = arith.constant 0 : i32
    %c0_i32_1 = arith.constant 0 : i32
    return %arg0, %c0_i32, %c0_i32_0 : i32, i32, i32
  }
  func.func @transform_3(%arg0: i32) -> (i32, i32, i32) {
    %c0_i32 = arith.constant 0 : i32
    %c0_i32_0 = arith.constant 0 : i32
    %c0_i32_1 = arith.constant 0 : i32
    return %arg0, %c0_i32, %c0_i32_0 : i32, i32, i32
  }
  func.func @transform_4(%arg0: i32) -> (i32, i32, i32) {
    %c0_i32 = arith.constant 0 : i32
    %c0_i32_0 = arith.constant 0 : i32
    %c0_i32_1 = arith.constant 0 : i32
    return %arg0, %c0_i32, %c0_i32_0 : i32, i32, i32
  }
  func.func @transform_5(%arg0: i32) -> (i32, i32, i32) {
    %c0_i32 = arith.constant 0 : i32
    %c0_i32_0 = arith.constant 0 : i32
    %c0_i32_1 = arith.constant 0 : i32
    return %arg0, %c0_i32, %c0_i32_0 : i32, i32, i32
  }
  func.func @transform_6(%arg0: i32) -> (i32, i32, i32) {
    %c0_i32 = arith.constant 0 : i32
    %c0_i32_0 = arith.constant 0 : i32
    %c0_i32_1 = arith.constant 0 : i32
    return %arg0, %c0_i32, %c0_i32_0 : i32, i32, i32
  }
  func.func @transform_7(%arg0: i32) -> (i32, i32, i32) {
    %c0_i32 = arith.constant 0 : i32
    %c0_i32_0 = arith.constant 0 : i32
    %c0_i32_1 = arith.constant 0 : i32
    return %arg0, %c0_i32, %c0_i32_0 : i32, i32, i32
  }
  func.func @transform_8(%arg0: i32) -> (i32, i32) {
    %c0_i32 = arith.constant 0 : i32
    %c0_i32_0 = arith.constant 0 : i32
    %c0_i32_1 = arith.constant 0 : i32
    return %c0_i32, %c0_i32_0 : i32, i32
  }
  func.func @transform_9(%arg0: i32) -> (i32, i32) {
    %c0_i32 = arith.constant 0 : i32
    %c0_i32_0 = arith.constant 0 : i32
    %c0_i32_1 = arith.constant 0 : i32
    return %c0_i32, %c0_i32_0 : i32, i32
  }
  func.func @transform_10(%arg0: i32) -> (i32, i32) {
    %c0_i32 = arith.constant 0 : i32
    %c0_i32_0 = arith.constant 0 : i32
    %c0_i32_1 = arith.constant 0 : i32
    return %c0_i32, %c0_i32_0 : i32, i32
  }
  func.func @transform_11(%arg0: i32) -> (i32, i32) {
    %c0_i32 = arith.constant 0 : i32
    %c0_i32_0 = arith.constant 0 : i32
    %c0_i32_1 = arith.constant 0 : i32
    return %c0_i32, %c0_i32_0 : i32, i32
  }
}

</mosaic_0001>

<llo_original>
// kernel: tpu_custom_call.1
$region0: #{tpu_custom_call.1}
  #allocation0 [shape = 'u32[]', space=smem, size = 0x4, offset = 0x4, fixed_abs, tag = 'smem constant byte address 0x4 - core index']
  #allocation1 [shape = 'u32[144,128]{1,0:T(1,128)}', space=vmem, size = 0x12000, scoped, tag = 'internal scratch']
  #allocation2 [shape = 'f32[16,128]{1,0:T(8,128)}', space=vmem, size = 0x2000, scoped, tag = 'scratch operand']
  %s0 = inlined_call_operand.hbm [shape: f32[16,128], index: 0, kind: input, shape index: {}]
  %s1 = inlined_call_operand.hbm [shape: f32[8,16,16], index: 1, kind: input, shape index: {}]
  %s2 = inlined_call_operand.hbm [shape: f32[3,1,128], index: 2, kind: input, shape index: {}]
  %s3 = inlined_call_operand.hbm [shape: bf16[3,128,1536], index: 3, kind: input, shape index: {}]
  %s4 = inlined_call_operand.hbm [shape: bf16[3,512,128], index: 4, kind: input, shape index: {}]
  %s5 = inlined_call_operand.hbm [shape: f32[3,1,128], index: 5, kind: input, shape index: {}]
  %s6 = inlined_call_operand.hbm [shape: bf16[3,128,256], index: 6, kind: input, shape index: {}]
  %s7 = inlined_call_operand.hbm [shape: bf16[3,256,128], index: 7, kind: input, shape index: {}]
  %s8 = inlined_call_operand.hbm [shape: f32[1,128], index: 8, kind: input, shape index: {}]
  %s9 = inlined_call_operand.hbm [shape: bf16[128,128], index: 9, kind: input, shape index: {}]
  %s10 = inlined_call_operand.hbm [shape: f32[1,128], index: 10, kind: input, shape index: {}]
  %s11 = inlined_call_operand.hbm [shape: f32[2,128], index: 11, kind: output, shape index: {}]
  %s12 = sld [smem:[#allocation0]]
  $region129: #{tpu_custom_call.1} parent=0
    _
  %s14 = ssub.s32 1, %s12
  %s15 = scalar_select 0, %s14, %s12
  $region1: #{tpu_custom_call.1} parent=0
    #allocation3 [shape = 'u8[8192]{0}', space=vmem, size = 0x2000, scoped, tag = 'input window, operand 0, single buffered']
    #allocation4 [shape = 's32[2]{0}', space=sflag, size = 0x8, scoped, tag = 'scoped memory for tpu_custom_call.1']
    #allocation5 [shape = 's32[2]{0}', space=sflag, size = 0x8, scoped, tag = 'scoped memory for tpu_custom_call.1']
    #allocation6 [shape = 'u8[65536]{0}', space=vmem, size = 0x10000, scoped, tag = 'input window, operand 1, single buffered']
    #allocation7 [shape = 's32[1]{0}', space=sflag, size = 0x4, scoped, tag = 'scoped memory for tpu_custom_call.1']
    #allocation8 [shape = 'u8[1024]{0}', space=vmem, size = 0x400, scoped, tag = 'input window, operand 2']
    #allocation9 [shape = 'u8[786432]{0}', space=vmem, size = 0xc0000, scoped, tag = 'input window, operand 3']
    #allocation10 [shape = 'u8[262144]{0}', space=vmem, size = 0x40000, scoped, tag = 'input window, operand 4']
    #allocation11 [shape = 'u8[1024]{0}', space=vmem, size = 0x400, scoped, tag = 'input window, operand 5']
    #allocation12 [shape = 'u8[131072]{0}', space=vmem, size = 0x20000, scoped, tag = 'input window, operand 6']
    #allocation13 [shape = 'u8[131072]{0}', space=vmem, size = 0x20000, scoped, tag = 'input window, operand 7']
    #allocation14 [shape = 'u8[512]{0}', space=vmem, size = 0x400, scoped, tag = 'input window, operand 8, single buffered']
    #allocation15 [shape = 'u8[32768]{0}', space=vmem, size = 0x8000, scoped, tag = 'input window, operand 9, single buffered']
    #allocation16 [shape = 's32[1]{0}', space=sflag, size = 0x4, scoped, tag = 'scoped memory for tpu_custom_call.1']
    #allocation17 [shape = 'u8[512]{0}', space=vmem, size = 0x400, scoped, tag = 'input window, operand 10, single buffered']
    #allocation18 [shape = 'u8[1024]{0}', space=vmem, size = 0x400, scoped, tag = 'output window, operand 0, single buffered']
    %16 = vsyncpa [#allocation4], 0
    %17 = vsyncpa [#allocation7], 0
    %18 = vsyncpa [#allocation16], 0
    %19 = vsyncpa [#allocation5], 0
    loop: start=0, step=1, limit=5
    $region2: #{tpu_custom_call.1} parent=1 // loop_pre_header
      _
    $region3: #{tpu_custom_call.1} parent=1 // loop_header
      %s21 = sphi 0, %s25
      %p22 = scmp.ge.s32.totalorder %s21, 5
      %s29 = sphi 0, %s29
      %s31 = sphi 0, %s29
      %s32 = sphi 0, %s31
      %s46 = sphi 0, %s32
      %s50 = sphi 0, %s50
      %s52 = sphi 0, %s50
      %s53 = sphi 0, %s52
      %s67 = sphi 0, %s53
      %s73 = sphi 0, %s75
      %s76 = sphi 0, %s73
      %s77 = sphi 0, %s76
      %s93 = sphi 0, %s77
      %s99 = sphi 0, %s101
      %s102 = sphi 0, %s99
      %s103 = sphi 0, %s102
      %s119 = sphi 0, %s103
      %s125 = sphi 0, %s127
      %s128 = sphi 0, %s125
      %s129 = sphi 0, %s128
      %s145 = sphi 0, %s129
      %s151 = sphi 0, %s153
      %s154 = sphi 0, %s151
      %s155 = sphi 0, %s154
      %s171 = sphi 0, %s155
      %s177 = sphi 0, %s179
      %s180 = sphi 0, %s177
      %s181 = sphi 0, %s180
      %s197 = sphi 0, %s181
      %s203 = sphi 0, %s205
      %s206 = sphi 0, %s203
      %s207 = sphi 0, %s206
      %s223 = sphi 0, %s207
      %s227 = sphi 0, %s227
      %s229 = sphi 0, %s227
      %s230 = sphi 0, %s229
      %s244 = sphi 0, %s230
      %s248 = sphi 0, %s248
      %s250 = sphi 0, %s248
      %s251 = sphi 0, %s250
      %s265 = sphi 0, %s251
      %s269 = sphi 0, %s269
      %s271 = sphi 0, %s269
      %s272 = sphi 0, %s271
      %s286 = sphi 0, %s272
      %s290 = sphi 0, %s290
      %s292 = sphi 0, %s290
      %s293 = sphi 0, %s292
      %s307 = sphi 0, %s293
    $region4: #{tpu_custom_call.1} parent=1 // loop_header_branch
      %24 = sbr.rel (%p22) target = $region8
    $region5: #{tpu_custom_call.1} parent=1 // loop_body
      %s26 = ssub.s32 %s21, 1
      %s27 = ssub.s32 %s21, 2
      %s28 = sadd.s32 %s21, 1
      %s30 = sadd.s32 %s29, 1
      %p33 = scmp.eq.s32.totalorder %s21, 2
      %p34 = scmp.ne.s32.totalorder %s29, %s31
      %p35 = scmp.eq.s32.totalorder %s21, 0
      %p36 = por %p34, %p35
      %p37 = scmp.ne.s32.totalorder %s29, %s31
      %p38 = scmp.eq.s32.totalorder %s26, 2
      %p39 = por %p37, %p38
      %p40 = scmp.ne.s32.totalorder %s31, %s32
      %p41 = scmp.eq.s32.totalorder %s26, 0
      %p42 = por %p40, %p41
      %p43 = scmp.ne.s32.totalorder %s31, %s32
      %p44 = scmp.eq.s32.totalorder %s27, 2
      %p45 = por %p43, %p44
      %p47 = scmp.ne.s32.totalorder %s32, %s46
      %p48 = scmp.eq.s32.totalorder %s27, 0
      %p49 = por %p47, %p48
      %s51 = sadd.s32 %s50, 1
      %p54 = scmp.eq.s32.totalorder %s21, 2
      %p55 = scmp.ne.s32.totalorder %s50, %s52
      %p56 = scmp.eq.s32.totalorder %s21, 0
      %p57 = por %p55, %p56
      %p58 = scmp.ne.s32.totalorder %s50, %s52
      %p59 = scmp.eq.s32.totalorder %s26, 2
      %p60 = por %p58, %p59
      %p61 = scmp.ne.s32.totalorder %s52, %s53
      %p62 = scmp.eq.s32.totalorder %s26, 0
      %p63 = por %p61, %p62
      %p64 = scmp.ne.s32.totalorder %s52, %s53
      %p65 = scmp.eq.s32.totalorder %s27, 2
      %p66 = por %p64, %p65
      %p68 = scmp.ne.s32.totalorder %s53, %s67
      %p69 = scmp.eq.s32.totalorder %s27, 0
      %p70 = por %p68, %p69
      %s71 = ssub.s32 %s21, %s28
      %p72 = scmp.eq.s32.totalorder %s71, 0
      %s74 = sadd.s32 %s73, 1
      %s75 = scalar_select %p72, %s73, %s74
      %p78 = pneg %p72
      %p79 = scmp.eq.s32.totalorder %s21, 2
      %p80 = por %p78, %p79
      %p81 = scmp.ne.s32.totalorder %s73, %s76
      %p82 = scmp.eq.s32.totalorder %s21, 0
      %p83 = por %p81, %p82
      %p84 = scmp.ne.s32.totalorder %s73, %s76
      %p85 = scmp.eq.s32.totalorder %s26, 2
      %p86 = por %p84, %p85
      %p87 = scmp.ne.s32.totalorder %s76, %s77
      %p88 = scmp.eq.s32.totalorder %s26, 0
      %p89 = por %p87, %p88
      %p90 = scmp.ne.s32.totalorder %s76, %s77
      %p91 = scmp.eq.s32.totalorder %s27, 2
      %p92 = por %p90, %p91
      %p94 = scmp.ne.s32.totalorder %s77, %s93
      %p95 = scmp.eq.s32.totalorder %s27, 0
      %p96 = por %p94, %p95
      %s97 = ssub.s32 %s21, %s28
      %p98 = scmp.eq.s32.totalorder %s97, 0
      %s100 = sadd.s32 %s99, 1
      %s101 = scalar_select %p98, %s99, %s100
      %p104 = pneg %p98
      %p105 = scmp.eq.s32.totalorder %s21, 2
      %p106 = por %p104, %p105
      %p107 = scmp.ne.s32.totalorder %s99, %s102
      %p108 = scmp.eq.s32.totalorder %s21, 0
      %p109 = por %p107, %p108
      %p110 = scmp.ne.s32.totalorder %s99, %s102
      %p111 = scmp.eq.s32.totalorder %s26, 2
      %p112 = por %p110, %p111
      %p113 = scmp.ne.s32.totalorder %s102, %s103
      %p114 = scmp.eq.s32.totalorder %s26, 0
      %p115 = por %p113, %p114
      %p116 = scmp.ne.s32.totalorder %s102, %s103
      %p117 = scmp.eq.s32.totalorder %s27, 2
      %p118 = por %p116, %p117
      %p120 = scmp.ne.s32.totalorder %s103, %s119
      %p121 = scmp.eq.s32.totalorder %s27, 0
      %p122 = por %p120, %p121
      %s123 = ssub.s32 %s21, %s28
      %p124 = scmp.eq.s32.totalorder %s123, 0
      %s126 = sadd.s32 %s125, 1
      %s127 = scalar_select %p124, %s125, %s126
      %p130 = pneg %p124
      %p131 = scmp.eq.s32.totalorder %s21, 2
      %p132 = por %p130, %p131
      %p133 = scmp.ne.s32.totalorder %s125, %s128
      %p134 = scmp.eq.s32.totalorder %s21, 0
      %p135 = por %p133, %p134
      %p136 = scmp.ne.s32.totalorder %s125, %s128
      %p137 = scmp.eq.s32.totalorder %s26, 2
      %p138 = por %p136, %p137
      %p139 = scmp.ne.s32.totalorder %s128, %s129
      %p140 = scmp.eq.s32.totalorder %s26, 0
      %p141 = por %p139, %p140
      %p142 = scmp.ne.s32.totalorder %s128, %s129
      %p143 = scmp.eq.s32.totalorder %s27, 2
      %p144 = por %p142, %p143
      %p146 = scmp.ne.s32.totalorder %s129, %s145
      %p147 = scmp.eq.s32.totalorder %s27, 0
      %p148 = por %p146, %p147
      %s149 = ssub.s32 %s21, %s28
      %p150 = scmp.eq.s32.totalorder %s149, 0
      %s152 = sadd.s32 %s151, 1
      %s153 = scalar_select %p150, %s151, %s152
      %p156 = pneg %p150
      %p157 = scmp.eq.s32.totalorder %s21, 2
      %p158 = por %p156, %p157
      %p159 = scmp.ne.s32.totalorder %s151, %s154
      %p160 = scmp.eq.s32.totalorder %s21, 0
      %p161 = por %p159, %p160
      %p162 = scmp.ne.s32.totalorder %s151, %s154
      %p163 = scmp.eq.s32.totalorder %s26, 2
      %p164 = por %p162, %p163
      %p165 = scmp.ne.s32.totalorder %s154, %s155
      %p166 = scmp.eq.s32.totalorder %s26, 0
      %p167 = por %p165, %p166
      %p168 = scmp.ne.s32.totalorder %s154, %s155
      %p169 = scmp.eq.s32.totalorder %s27, 2
      %p170 = por %p168, %p169
      %p172 = scmp.ne.s32.totalorder %s155, %s171
      %p173 = scmp.eq.s32.totalorder %s27, 0
      %p174 = por %p172, %p173
      %s175 = ssub.s32 %s21, %s28
      %p176 = scmp.eq.s32.totalorder %s175, 0
      %s178 = sadd.s32 %s177, 1
      %s179 = scalar_select %p176, %s177, %s178
      %p182 = pneg %p176
      %p183 = scmp.eq.s32.totalorder %s21, 2
      %p184 = por %p182, %p183
      %p185 = scmp.ne.s32.totalorder %s177, %s180
      %p186 = scmp.eq.s32.totalorder %s21, 0
      %p187 = por %p185, %p186
      %p188 = scmp.ne.s32.totalorder %s177, %s180
      %p189 = scmp.eq.s32.totalorder %s26, 2
      %p190 = por %p188, %p189
      %p191 = scmp.ne.s32.totalorder %s180, %s181
      %p192 = scmp.eq.s32.totalorder %s26, 0
      %p193 = por %p191, %p192
      %p194 = scmp.ne.s32.totalorder %s180, %s181
      %p195 = scmp.eq.s32.totalorder %s27, 2
      %p196 = por %p194, %p195
      %p198 = scmp.ne.s32.totalorder %s181, %s197
      %p199 = scmp.eq.s32.totalorder %s27, 0
      %p200 = por %p198, %p199
      %s201 = ssub.s32 %s21, %s28
      %p202 = scmp.eq.s32.totalorder %s201, 0
      %s204 = sadd.s32 %s203, 1
      %s205 = scalar_select %p202, %s203, %s204
      %p208 = pneg %p202
      %p209 = scmp.eq.s32.totalorder %s21, 2
      %p210 = por %p208, %p209
      %p211 = scmp.ne.s32.totalorder %s203, %s206
      %p212 = scmp.eq.s32.totalorder %s21, 0
      %p213 = por %p211, %p212
      %p214 = scmp.ne.s32.totalorder %s203, %s206
      %p215 = scmp.eq.s32.totalorder %s26, 2
      %p216 = por %p214, %p215
      %p217 = scmp.ne.s32.totalorder %s206, %s207
      %p218 = scmp.eq.s32.totalorder %s26, 0
      %p219 = por %p217, %p218
      %p220 = scmp.ne.s32.totalorder %s206, %s207
      %p221 = scmp.eq.s32.totalorder %s27, 2
      %p222 = por %p220, %p221
      %p224 = scmp.ne.s32.totalorder %s207, %s223
      %p225 = scmp.eq.s32.totalorder %s27, 0
      %p226 = por %p224, %p225
      %s228 = sadd.s32 %s227, 1
      %p231 = scmp.eq.s32.totalorder %s21, 2
      %p232 = scmp.ne.s32.totalorder %s227, %s229
      %p233 = scmp.eq.s32.totalorder %s21, 0
      %p234 = por %p232, %p233
      %p235 = scmp.ne.s32.totalorder %s227, %s229
      %p236 = scmp.eq.s32.totalorder %s26, 2
      %p237 = por %p235, %p236
      %p238 = scmp.ne.s32.totalorder %s229, %s230
      %p239 = scmp.eq.s32.totalorder %s26, 0
      %p240 = por %p238, %p239
      %p241 = scmp.ne.s32.totalorder %s229, %s230
      %p242 = scmp.eq.s32.totalorder %s27, 2
      %p243 = por %p241, %p242
      %p245 = scmp.ne.s32.totalorder %s230, %s244
      %p246 = scmp.eq.s32.totalorder %s27, 0
      %p247 = por %p245, %p246
      %s249 = sadd.s32 %s248, 1
      %p252 = scmp.eq.s32.totalorder %s21, 2
      %p253 = scmp.ne.s32.totalorder %s248, %s250
      %p254 = scmp.eq.s32.totalorder %s21, 0
      %p255 = por %p253, %p254
      %p256 = scmp.ne.s32.totalorder %s248, %s250
      %p257 = scmp.eq.s32.totalorder %s26, 2
      %p258 = por %p256, %p257
      %p259 = scmp.ne.s32.totalorder %s250, %s251
      %p260 = scmp.eq.s32.totalorder %s26, 0
      %p261 = por %p259, %p260
      %p262 = scmp.ne.s32.totalorder %s250, %s251
      %p263 = scmp.eq.s32.totalorder %s27, 2
      %p264 = por %p262, %p263
      %p266 = scmp.ne.s32.totalorder %s251, %s265
      %p267 = scmp.eq.s32.totalorder %s27, 0
      %p268 = por %p266, %p267
      %s270 = sadd.s32 %s269, 1
      %p273 = scmp.eq.s32.totalorder %s21, 2
      %p274 = scmp.ne.s32.totalorder %s269, %s271
      %p275 = scmp.eq.s32.totalorder %s21, 0
      %p276 = por %p274, %p275
      %p277 = scmp.ne.s32.totalorder %s269, %s271
      %p278 = scmp.eq.s32.totalorder %s26, 2
      %p279 = por %p277, %p278
      %p280 = scmp.ne.s32.totalorder %s271, %s272
      %p281 = scmp.eq.s32.totalorder %s26, 0
      %p282 = por %p280, %p281
      %p283 = scmp.ne.s32.totalorder %s271, %s272
      %p284 = scmp.eq.s32.totalorder %s27, 2
      %p285 = por %p283, %p284
      %p287 = scmp.ne.s32.totalorder %s272, %s286
      %p288 = scmp.eq.s32.totalorder %s27, 0
      %p289 = por %p287, %p288
      %s291 = sadd.s32 %s290, 1
      %p294 = scmp.eq.s32.totalorder %s21, 2
      %p295 = scmp.ne.s32.totalorder %s290, %s292
      %p296 = scmp.eq.s32.totalorder %s21, 0
      %p297 = por %p295, %p296
      %p298 = scmp.ne.s32.totalorder %s290, %s292
      %p299 = scmp.eq.s32.totalorder %s26, 2
      %p300 = por %p298, %p299
      %p301 = scmp.ne.s32.totalorder %s292, %s293
      %p302 = scmp.eq.s32.totalorder %s26, 0
      %p303 = por %p301, %p302
      %p304 = scmp.ne.s32.totalorder %s292, %s293
      %p305 = scmp.eq.s32.totalorder %s27, 2
      %p306 = por %p304, %p305
      %p308 = scmp.ne.s32.totalorder %s293, %s307
      %p309 = scmp.eq.s32.totalorder %s27, 0
      %p310 = por %p308, %p309
      %p311 = scmp.le.s32.totalorder 1, %s21
      %p312 = scmp.lt.s32.totalorder %s21, 4
      %p313 = pnand %p311, %p312
      %p314 = pneg %p313
      // Predicated region
      $region9: #{tpu_custom_call.1} parent=5 // pred_check
        _
      $region10: #{tpu_custom_call.1} parent=5 // pred_check_branch
        %316 = sbr.rel (%p313) target = $region12
      $region11: #{tpu_custom_call.1} parent=5 // pred_region
        %s317 = ssub.s32 %s21, 1
        // Predicated region
        $region13: #{tpu_custom_call.1} parent=11 // pred_check
          %p318 = pneg %p42
        $region14: #{tpu_custom_call.1} parent=11 // pred_check_branch
          %320 = sbr.rel (%p318) target = $region16
        $region15: #{tpu_custom_call.1} parent=11 // pred_region
          %s322 = ssub.s32 256, 256
          %323 = vsyncadd [#allocation4], %s322
          %s324 = sshll.u32 [#allocation3], 4
          %s325 = int_to_ptr.vmem [resolvable:$true] %s324
          %330 = dma.hbm_to_vmem [thread:$0]  %s0, 256, %s325, [#allocation4], 128, 128, 8
        $region16: #{tpu_custom_call.1} parent=11 // pred_fallthru
          _
        // Predicated region
        $region17: #{tpu_custom_call.1} parent=11 // pred_check
          %p331 = pneg %p63
        $region18: #{tpu_custom_call.1} parent=11 // pred_check_branch
          %333 = sbr.rel (%p331) target = $region20
        $region19: #{tpu_custom_call.1} parent=11 // pred_region
          %s335 = ssub.s32 2048, 2048
          %336 = vsyncadd [#allocation7], %s335
          %s337 = sshll.u32 [#allocation6], 4
          %s338 = int_to_ptr.vmem [resolvable:$true] %s337
          %343 = dma.hbm_to_vmem [thread:$0]  %s1, 2048, %s338, [#allocation7], 128, 128, 8
        $region20: #{tpu_custom_call.1} parent=11 // pred_fallthru
          _
        // Predicated region
        $region21: #{tpu_custom_call.1} parent=11 // pred_check
          %p344 = pneg %p240
        $region22: #{tpu_custom_call.1} parent=11 // pred_check_branch
          %346 = sbr.rel (%p344) target = $region24
        $region23: #{tpu_custom_call.1} parent=11 // pred_region
          %s348 = ssub.s32 16, 16
          %349 = vsyncadd [#allocation7], %s348
          %s351 = sshll.u32 [#allocation14], 4
          %s352 = int_to_ptr.vmem [resolvable:$true] %s351
          %354 = dma.hbm_to_vmem [thread:$0]  %s8, 16, %s352, [#allocation7]
        $region24: #{tpu_custom_call.1} parent=11 // pred_fallthru
          _
        // Predicated region
        $region25: #{tpu_custom_call.1} parent=11 // pred_check
          %p355 = pneg %p261
        $region26: #{tpu_custom_call.1} parent=11 // pred_check_branch
          %357 = sbr.rel (%p355) target = $region28
        $region27: #{tpu_custom_call.1} parent=11 // pred_region
          %s359 = ssub.s32 1024, 1024
          %360 = vsyncadd [#allocation16], %s359
          %s361 = sshll.u32 [#allocation15], 4
          %s362 = int_to_ptr.vmem [resolvable:$true] %s361
          %367 = dma.hbm_to_vmem [thread:$0]  %s9, 1024, %s362, [#allocation16], 64, 64, 4
        $region28: #{tpu_custom_call.1} parent=11 // pred_fallthru
          _
        // Predicated region
        $region29: #{tpu_custom_call.1} parent=11 // pred_check
          %p368 = pneg %p282
        $region30: #{tpu_custom_call.1} parent=11 // pred_check_branch
          %370 = sbr.rel (%p368) target = $region32
        $region31: #{tpu_custom_call.1} parent=11 // pred_region
          %s372 = ssub.s32 16, 16
          %373 = vsyncadd [#allocation16], %s372
          %s375 = sshll.u32 [#allocation17], 4
          %s376 = int_to_ptr.vmem [resolvable:$true] %s375
          %378 = dma.hbm_to_vmem [thread:$0]  %s10, 16, %s376, [#allocation16]
        $region32: #{tpu_custom_call.1} parent=11 // pred_fallthru
          _
      $region12: #{tpu_custom_call.1} parent=5 // pred_fallthru
        _
      %p379 = scmp.lt.s32.totalorder %s21, 3
      // Predicated region
      $region33: #{tpu_custom_call.1} parent=5 // pred_check
        %p380 = pneg %p379
      $region34: #{tpu_custom_call.1} parent=5 // pred_check_branch
        %382 = sbr.rel (%p380) target = $region36
      $region35: #{tpu_custom_call.1} parent=5 // pred_region
        // Predicated region
        $region37: #{tpu_custom_call.1} parent=35 // pred_check
          %p383 = pneg %p83
        $region38: #{tpu_custom_call.1} parent=35 // pred_check_branch
          %385 = sbr.rel (%p383) target = $region40
        $region39: #{tpu_custom_call.1} parent=35 // pred_region
          %s386 = sand.u32 %s21, 1
          %s387 = scalar_lea.sflag [#allocation4], %s386
          %s388 = sand.u32 %s73, 1
          %s389 = scalar_lea.vmem [#allocation8], %s388
          %s391 = ssub.s32 16, 16
          %392 = vsyncadd %s387, %s391
          %s393 = smul.addr %s21, 16
          %s394 = scalar_lea.hbm %s2, %s393
          %s396 = sshll.u32 %s389, 4
          %s397 = int_to_ptr.vmem [resolvable:$true] %s396
          %399 = dma.hbm_to_vmem [thread:$0]  %s394, 16, %s397, %s387
        $region40: #{tpu_custom_call.1} parent=35 // pred_fallthru
          _
        // Predicated region
        $region41: #{tpu_custom_call.1} parent=35 // pred_check
          %p400 = pneg %p109
        $region42: #{tpu_custom_call.1} parent=35 // pred_check_branch
          %402 = sbr.rel (%p400) target = $region44
        $region43: #{tpu_custom_call.1} parent=35 // pred_region
          %s403 = sand.u32 %s21, 1
          %s404 = scalar_lea.sflag [#allocation4], %s403
          %s405 = sand.u32 %s99, 1
          %s406 = smul.addr %s405, 768
          %s407 = scalar_lea.vmem [#allocation9], %s406
          %s409 = ssub.s32 12288, 12288
          %410 = vsyncadd %s404, %s409
          %s411 = smul.addr %s21, 192
          %s412 = smul.addr %s411, 64
          %s413 = scalar_lea.hbm %s3, %s412
          %s414 = sshll.u32 %s407, 4
          %s415 = int_to_ptr.vmem [resolvable:$true] %s414
          %420 = dma.hbm_to_vmem [thread:$0]  %s413, 12288, %s415, %s404, 768, 768, 48
        $region44: #{tpu_custom_call.1} parent=35 // pred_fallthru
          _
        // Predicated region
        $region45: #{tpu_custom_call.1} parent=35 // pred_check
          %p421 = pneg %p135
        $region46: #{tpu_custom_call.1} parent=35 // pred_check_branch
          %423 = sbr.rel (%p421) target = $region48
        $region47: #{tpu_custom_call.1} parent=35 // pred_region
          %s424 = sand.u32 %s21, 1
          %s425 = scalar_lea.sflag [#allocation4], %s424
          %s426 = sand.u32 %s125, 1
          %s427 = smul.addr %s426, 256
          %s428 = scalar_lea.vmem [#allocation10], %s427
          %s430 = ssub.s32 4096, 4096
          %431 = vsyncadd %s425, %s430
          %s432 = smul.addr %s21, 64
          %s433 = smul.addr %s432, 64
          %s434 = scalar_lea.hbm %s4, %s433
          %s435 = sshll.u32 %s428, 4
          %s436 = int_to_ptr.vmem [resolvable:$true] %s435
          %441 = dma.hbm_to_vmem [thread:$0]  %s434, 4096, %s436, %s425, 64, 64, 4
        $region48: #{tpu_custom_call.1} parent=35 // pred_fallthru
          _
        // Predicated region
        $region49: #{tpu_custom_call.1} parent=35 // pred_check
          %p442 = pneg %p161
        $region50: #{tpu_custom_call.1} parent=35 // pred_check_branch
          %444 = sbr.rel (%p442) target = $region52
        $region51: #{tpu_custom_call.1} parent=35 // pred_region
          %s445 = sand.u32 %s21, 1
          %s446 = scalar_lea.sflag [#allocation4], %s445
          %s447 = sand.u32 %s151, 1
          %s448 = scalar_lea.vmem [#allocation11], %s447
          %s450 = ssub.s32 16, 16
          %451 = vsyncadd %s446, %s450
          %s452 = smul.addr %s21, 16
          %s453 = scalar_lea.hbm %s5, %s452
          %s455 = sshll.u32 %s448, 4
          %s456 = int_to_ptr.vmem [resolvable:$true] %s455
          %458 = dma.hbm_to_vmem [thread:$0]  %s453, 16, %s456, %s446
        $region52: #{tpu_custom_call.1} parent=35 // pred_fallthru
          _
        // Predicated region
        $region53: #{tpu_custom_call.1} parent=35 // pred_check
          %p459 = pneg %p187
        $region54: #{tpu_custom_call.1} parent=35 // pred_check_branch
          %461 = sbr.rel (%p459) target = $region56
        $region55: #{tpu_custom_call.1} parent=35 // pred_region
          %s462 = sand.u32 %s21, 1
          %s463 = scalar_lea.sflag [#allocation4], %s462
          %s464 = sand.u32 %s177, 1
          %s465 = smul.addr %s464, 128
          %s466 = scalar_lea.vmem [#allocation12], %s465
          %s468 = ssub.s32 2048, 2048
          %469 = vsyncadd %s463, %s468
          %s470 = smul.addr %s21, 32
          %s471 = smul.addr %s470, 64
          %s472 = scalar_lea.hbm %s6, %s471
          %s473 = sshll.u32 %s466, 4
          %s474 = int_to_ptr.vmem [resolvable:$true] %s473
          %479 = dma.hbm_to_vmem [thread:$0]  %s472, 2048, %s474, %s463, 128, 128, 8
        $region56: #{tpu_custom_call.1} parent=35 // pred_fallthru
          _
        // Predicated region
        $region57: #{tpu_custom_call.1} parent=35 // pred_check
          %p480 = pneg %p213
        $region58: #{tpu_custom_call.1} parent=35 // pred_check_branch
          %482 = sbr.rel (%p480) target = $region60
        $region59: #{tpu_custom_call.1} parent=35 // pred_region
          %s483 = sand.u32 %s21, 1
          %s484 = scalar_lea.sflag [#allocation4], %s483
          %s485 = sand.u32 %s203, 1
          %s486 = smul.addr %s485, 128
          %s487 = scalar_lea.vmem [#allocation13], %s486
          %s489 = ssub.s32 2048, 2048
          %490 = vsyncadd %s484, %s489
          %s491 = smul.addr %s21, 32
          %s492 = smul.addr %s491, 64
          %s493 = scalar_lea.hbm %s7, %s492
          %s494 = sshll.u32 %s487, 4
          %s495 = int_to_ptr.vmem [resolvable:$true] %s494
          %500 = dma.hbm_to_vmem [thread:$0]  %s493, 2048, %s495, %s484, 64, 64, 4
        $region60: #{tpu_custom_call.1} parent=35 // pred_fallthru
          _
      $region36: #{tpu_custom_call.1} parent=5 // pred_fallthru
        _
      %p501 = scmp.le.s32.totalorder 1, %s21
      %p502 = scmp.lt.s32.totalorder %s21, 4
      %p503 = pnand %p501, %p502
      %p504 = pneg %p503
      // Predicated region
      $region61: #{tpu_custom_call.1} parent=5 // pred_check
        _
      $region62: #{tpu_custom_call.1} parent=5 // pred_check_branch
        %506 = sbr.rel (%p503) target = $region64
      $region63: #{tpu_custom_call.1} parent=5 // pred_region
        %s507 = ssub.s32 %s21, 1
        // Predicated region
        $region65: #{tpu_custom_call.1} parent=63 // pred_check
          %p508 = pneg %p42
        $region66: #{tpu_custom_call.1} parent=63 // pred_check_branch
          %510 = sbr.rel (%p508) target = $region68
        $region67: #{tpu_custom_call.1} parent=63 // pred_region
          %511 = dma.done [#allocation4], 256
        $region68: #{tpu_custom_call.1} parent=63 // pred_fallthru
          _
        // Predicated region
        $region69: #{tpu_custom_call.1} parent=63 // pred_check
          %p512 = pneg %p63
        $region70: #{tpu_custom_call.1} parent=63 // pred_check_branch
          %514 = sbr.rel (%p512) target = $region72
        $region71: #{tpu_custom_call.1} parent=63 // pred_region
          %515 = dma.done [#allocation7], 2048
        $region72: #{tpu_custom_call.1} parent=63 // pred_fallthru
          _
        %s516 = sand.u32 %s26, 1
        %s517 = scalar_lea.sflag [#allocation4], %s516
        %s518 = sand.u32 %s76, 1
        %s519 = scalar_lea.vmem [#allocation8], %s518
        // Predicated region
        $region73: #{tpu_custom_call.1} parent=63 // pred_check
          %p520 = pneg %p89
        $region74: #{tpu_custom_call.1} parent=63 // pred_check_branch
          %522 = sbr.rel (%p520) target = $region76
        $region75: #{tpu_custom_call.1} parent=63 // pred_region
          %523 = dma.done %s517, 16
        $region76: #{tpu_custom_call.1} parent=63 // pred_fallthru
          _
        %s524 = sand.u32 %s26, 1
        %s525 = scalar_lea.sflag [#allocation4], %s524
        %s526 = sand.u32 %s102, 1
        %s527 = smul.addr %s526, 768
        %s528 = scalar_lea.vmem [#allocation9], %s527
        // Predicated region
        $region77: #{tpu_custom_call.1} parent=63 // pred_check
          %p529 = pneg %p115
        $region78: #{tpu_custom_call.1} parent=63 // pred_check_branch
          %531 = sbr.rel (%p529) target = $region80
        $region79: #{tpu_custom_call.1} parent=63 // pred_region
          %532 = dma.done %s525, 12288
        $region80: #{tpu_custom_call.1} parent=63 // pred_fallthru
          _
        %s533 = sand.u32 %s26, 1
        %s534 = scalar_lea.sflag [#allocation4], %s533
        %s535 = sand.u32 %s128, 1
        %s536 = smul.addr %s535, 256
        %s537 = scalar_lea.vmem [#allocation10], %s536
        // Predicated region
        $region81: #{tpu_custom_call.1} parent=63 // pred_check
          %p538 = pneg %p141
        $region82: #{tpu_custom_call.1} parent=63 // pred_check_branch
          %540 = sbr.rel (%p538) target = $region84
        $region83: #{tpu_custom_call.1} parent=63 // pred_region
          %541 = dma.done %s534, 4096
        $region84: #{tpu_custom_call.1} parent=63 // pred_fallthru
          _
        %s542 = sand.u32 %s26, 1
        %s543 = scalar_lea.sflag [#allocation4], %s542
        %s544 = sand.u32 %s154, 1
        %s545 = scalar_lea.vmem [#allocation11], %s544
        // Predicated region
        $region85: #{tpu_custom_call.1} parent=63 // pred_check
          %p546 = pneg %p167
        $region86: #{tpu_custom_call.1} parent=63 // pred_check_branch
          %548 = sbr.rel (%p546) target = $region88
        $region87: #{tpu_custom_call.1} parent=63 // pred_region
          %549 = dma.done %s543, 16
        $region88: #{tpu_custom_call.1} parent=63 // pred_fallthru
          _
        %s550 = sand.u32 %s26, 1
        %s551 = scalar_lea.sflag [#allocation4], %s550
        %s552 = sand.u32 %s180, 1
        %s553 = smul.addr %s552, 128
        %s554 = scalar_lea.vmem [#allocation12], %s553
        // Predicated region
        $region89: #{tpu_custom_call.1} parent=63 // pred_check
          %p555 = pneg %p193
        $region90: #{tpu_custom_call.1} parent=63 // pred_check_branch
          %557 = sbr.rel (%p555) target = $region92
        $region91: #{tpu_custom_call.1} parent=63 // pred_region
          %558 = dma.done %s551, 2048
        $region92: #{tpu_custom_call.1} parent=63 // pred_fallthru
          _
        %s559 = sand.u32 %s26, 1
        %s560 = scalar_lea.sflag [#allocation4], %s559
        %s561 = sand.u32 %s206, 1
        %s562 = smul.addr %s561, 128
        %s563 = scalar_lea.vmem [#allocation13], %s562
        // Predicated region
        $region93: #{tpu_custom_call.1} parent=63 // pred_check
          %p564 = pneg %p219
        $region94: #{tpu_custom_call.1} parent=63 // pred_check_branch
          %566 = sbr.rel (%p564) target = $region96
        $region95: #{tpu_custom_call.1} parent=63 // pred_region
          %567 = dma.done %s560, 2048
        $region96: #{tpu_custom_call.1} parent=63 // pred_fallthru
          _
        // Predicated region
        $region97: #{tpu_custom_call.1} parent=63 // pred_check
          %p568 = pneg %p240
        $region98: #{tpu_custom_call.1} parent=63 // pred_check_branch
          %570 = sbr.rel (%p568) target = $region100
        $region99: #{tpu_custom_call.1} parent=63 // pred_region
          %571 = dma.done [#allocation7], 16
        $region100: #{tpu_custom_call.1} parent=63 // pred_fallthru
          _
        // Predicated region
        $region101: #{tpu_custom_call.1} parent=63 // pred_check
          %p572 = pneg %p261
        $region102: #{tpu_custom_call.1} parent=63 // pred_check_branch
          %574 = sbr.rel (%p572) target = $region104
        $region103: #{tpu_custom_call.1} parent=63 // pred_region
          %575 = dma.done [#allocation16], 1024
        $region104: #{tpu_custom_call.1} parent=63 // pred_fallthru
          _
        // Predicated region
        $region105: #{tpu_custom_call.1} parent=63 // pred_check
          %p576 = pneg %p282
        $region106: #{tpu_custom_call.1} parent=63 // pred_check_branch
          %578 = sbr.rel (%p576) target = $region108
        $region107: #{tpu_custom_call.1} parent=63 // pred_region
          %579 = dma.done [#allocation16], 16
        $region108: #{tpu_custom_call.1} parent=63 // pred_fallthru
          _
        %p580 = pneg %p42
        %p581 = pneg %p39
        %p582 = pneg %p63
        %p583 = pneg %p60
        %s584 = sand.u32 %s26, 1
        %s585 = scalar_lea.sflag [#allocation4], %s584
        %s586 = sand.u32 %s76, 1
        %s587 = scalar_lea.vmem [#allocation8], %s586
        %p588 = pneg %p89
        %p589 = pneg %p86
        %s590 = sand.u32 %s26, 1
        %s591 = scalar_lea.sflag [#allocation4], %s590
        %s592 = sand.u32 %s102, 1
        %s593 = smul.addr %s592, 768
        %s594 = scalar_lea.vmem [#allocation9], %s593
        %p595 = pneg %p115
        %p596 = pneg %p112
        %s597 = sand.u32 %s26, 1
        %s598 = scalar_lea.sflag [#allocation4], %s597
        %s599 = sand.u32 %s128, 1
        %s600 = smul.addr %s599, 256
        %s601 = scalar_lea.vmem [#allocation10], %s600
        %p602 = pneg %p141
        %p603 = pneg %p138
        %s604 = sand.u32 %s26, 1
        %s605 = scalar_lea.sflag [#allocation4], %s604
        %s606 = sand.u32 %s154, 1
        %s607 = scalar_lea.vmem [#allocation11], %s606
        %p608 = pneg %p167
        %p609 = pneg %p164
        %s610 = sand.u32 %s26, 1
        %s611 = scalar_lea.sflag [#allocation4], %s610
        %s612 = sand.u32 %s180, 1
        %s613 = smul.addr %s612, 128
        %s614 = scalar_lea.vmem [#allocation12], %s613
        %p615 = pneg %p193
        %p616 = pneg %p190
        %s617 = sand.u32 %s26, 1
        %s618 = scalar_lea.sflag [#allocation4], %s617
        %s619 = sand.u32 %s206, 1
        %s620 = smul.addr %s619, 128
        %s621 = scalar_lea.vmem [#allocation13], %s620
        %p622 = pneg %p219
        %p623 = pneg %p216
        %p624 = pneg %p240
        %p625 = pneg %p237
        %p626 = pneg %p261
        %p627 = pneg %p258
        %p628 = pneg %p282
        %p629 = pneg %p279
        %p630 = pneg %p303
        %p631 = pneg %p300
        %p633 = scmp.eq.s32.totalorder %s26, 0
        // Predicated region
        $region109: #{tpu_custom_call.1} parent=63 // pred_check
          %p634 = pneg %p633
        $region110: #{tpu_custom_call.1} parent=63 // pred_check_branch
          %636 = sbr.rel (%p634) target = $region112
        $region111: #{tpu_custom_call.1} parent=63 // pred_region
          %v637 = vld [vmem:[#allocation3] sm:$0xff]
          %v638 = vld [vmem:[#allocation3 + $0x8] sm:$0xff]
          %639 = vst [vmem:[#allocation2] sm:$0xff] %v637
          %640 = vst [vmem:[#allocation2 + $0x8] sm:$0xff] %v638
        $region112: #{tpu_custom_call.1} parent=63 // pred_fallthru
          _
        %v641 = vld [vmem:[#allocation2] sm:$0xff]
        %v642 = vld [vmem:[#allocation2 + $0x8] sm:$0xff]
        %v643 = vld [vmem:[%s519] sm:$0x1]
        %v644 = vmul.f32 %v641, %v641
        %v645 = vmul.f32 %v642, %v642
        %646 = vadd.xlane.f32.xlu0 %v644
        %v647 = vpop.xlane.xlu0 %646
        %648 = vadd.xlane.f32.xlu0 %v645
        %v649 = vpop.xlane.xlu0 %648
        %v650 = vrcp.pop 128.0
        %v651 = vmul.f32 %v647, %v650
        %v652 = vmul.f32 %v649, %v650
        %v653 = vadd.f32 %v651, 1e-06
        %v654 = vadd.f32 %v652, 1e-06
        %v655 = vrsqrt.pop %v653
        %v656 = vrsqrt.pop %v654
        %v657 = vmul.f32 %v641, %v655
        %v658 = vmul.f32 %v642, %v656
        %v660 = vlaneseq
        %v661 = vshrl.u32 %v660, 7
        %v662 = vsub.s32 0, %v661
        %v663 = vrot.slane %v643, %v662
        %v665 = vmul.f32 %v657, %v663
        %v666 = vmul.f32 %v658, %v663
        %v667 = vpack.c.bf16 %v666, %v665
        %v668 = vld [vmem:[%s528] sm:$0xff]
        %v669 = vld [vmem:[%s528 + $0x8] sm:$0xff]
        %v670 = vld [vmem:[%s528 + $0x10] sm:$0xff]
        %v671 = vld [vmem:[%s528 + $0x18] sm:$0xff]
        %v672 = vld [vmem:[%s528 + $0x20] sm:$0xff]
        %v673 = vld [vmem:[%s528 + $0x28] sm:$0xff]
        %v674 = vld [vmem:[%s528 + $0x30] sm:$0xff]
        %v675 = vld [vmem:[%s528 + $0x38] sm:$0xff]
        %v676 = vld [vmem:[%s528 + $0x40] sm:$0xff]
        %v677 = vld [vmem:[%s528 + $0x48] sm:$0xff]
        %v678 = vld [vmem:[%s528 + $0x50] sm:$0xff]
        %v679 = vld [vmem:[%s528 + $0x58] sm:$0xff]
        %v680 = vld [vmem:[%s528 + $0x60] sm:$0xff]
        %v681 = vld [vmem:[%s528 + $0x68] sm:$0xff]
        %v682 = vld [vmem:[%s528 + $0x70] sm:$0xff]
        %v683 = vld [vmem:[%s528 + $0x78] sm:$0xff]
        %v684 = vld [vmem:[%s528 + $0x80] sm:$0xff]
        %v685 = vld [vmem:[%s528 + $0x88] sm:$0xff]
        %v686 = vld [vmem:[%s528 + $0x90] sm:$0xff]
        %v687 = vld [vmem:[%s528 + $0x98] sm:$0xff]
        %v688 = vld [vmem:[%s528 + $0xa0] sm:$0xff]
        %v689 = vld [vmem:[%s528 + $0xa8] sm:$0xff]
        %v690 = vld [vmem:[%s528 + $0xb0] sm:$0xff]
        %v691 = vld [vmem:[%s528 + $0xb8] sm:$0xff]
        %v692 = vld [vmem:[%s528 + $0xc0] sm:$0xff]
        %v693 = vld [vmem:[%s528 + $0xc8] sm:$0xff]
        %v694 = vld [vmem:[%s528 + $0xd0] sm:$0xff]
        %v695 = vld [vmem:[%s528 + $0xd8] sm:$0xff]
        %v696 = vld [vmem:[%s528 + $0xe0] sm:$0xff]
        %v697 = vld [vmem:[%s528 + $0xe8] sm:$0xff]
        %v698 = vld [vmem:[%s528 + $0xf0] sm:$0xff]
        %v699 = vld [vmem:[%s528 + $0xf8] sm:$0xff]
        %v700 = vld [vmem:[%s528 + $0x100] sm:$0xff]
        %v701 = vld [vmem:[%s528 + $0x108] sm:$0xff]
        %v702 = vld [vmem:[%s528 + $0x110] sm:$0xff]
        %v703 = vld [vmem:[%s528 + $0x118] sm:$0xff]
        %v704 = vld [vmem:[%s528 + $0x120] sm:$0xff]
        %v705 = vld [vmem:[%s528 + $0x128] sm:$0xff]
        %v706 = vld [vmem:[%s528 + $0x130] sm:$0xff]
        %v707 = vld [vmem:[%s528 + $0x138] sm:$0xff]
        %v708 = vld [vmem:[%s528 + $0x140] sm:$0xff]
        %v709 = vld [vmem:[%s528 + $0x148] sm:$0xff]
        %v710 = vld [vmem:[%s528 + $0x150] sm:$0xff]
        %v711 = vld [vmem:[%s528 + $0x158] sm:$0xff]
        %v712 = vld [vmem:[%s528 + $0x160] sm:$0xff]
        %v713 = vld [vmem:[%s528 + $0x168] sm:$0xff]
        %v714 = vld [vmem:[%s528 + $0x170] sm:$0xff]
        %v715 = vld [vmem:[%s528 + $0x178] sm:$0xff]
        %v716 = vld [vmem:[%s528 + $0x180] sm:$0xff]
        %v717 = vld [vmem:[%s528 + $0x188] sm:$0xff]
        %v718 = vld [vmem:[%s528 + $0x190] sm:$0xff]
        %v719 = vld [vmem:[%s528 + $0x198] sm:$0xff]
        %v720 = vld [vmem:[%s528 + $0x1a0] sm:$0xff]
        %v721 = vld [vmem:[%s528 + $0x1a8] sm:$0xff]
        %v722 = vld [vmem:[%s528 + $0x1b0] sm:$0xff]
        %v723 = vld [vmem:[%s528 + $0x1b8] sm:$0xff]
        %v724 = vld [vmem:[%s528 + $0x1c0] sm:$0xff]
        %v725 = vld [vmem:[%s528 + $0x1c8] sm:$0xff]
        %v726 = vld [vmem:[%s528 + $0x1d0] sm:$0xff]
        %v727 = vld [vmem:[%s528 + $0x1d8] sm:$0xff]
        %v728 = vld [vmem:[%s528 + $0x1e0] sm:$0xff]
        %v729 = vld [vmem:[%s528 + $0x1e8] sm:$0xff]
        %v730 = vld [vmem:[%s528 + $0x1f0] sm:$0xff]
        %v731 = vld [vmem:[%s528 + $0x1f8] sm:$0xff]
        %v732 = vld [vmem:[%s528 + $0x200] sm:$0xff]
        %v733 = vld [vmem:[%s528 + $0x208] sm:$0xff]
        %v734 = vld [vmem:[%s528 + $0x210] sm:$0xff]
        %v735 = vld [vmem:[%s528 + $0x218] sm:$0xff]
        %v736 = vld [vmem:[%s528 + $0x220] sm:$0xff]
        %v737 = vld [vmem:[%s528 + $0x228] sm:$0xff]
        %v738 = vld [vmem:[%s528 + $0x230] sm:$0xff]
        %v739 = vld [vmem:[%s528 + $0x238] sm:$0xff]
        %v740 = vld [vmem:[%s528 + $0x240] sm:$0xff]
        %v741 = vld [vmem:[%s528 + $0x248] sm:$0xff]
        %v742 = vld [vmem:[%s528 + $0x250] sm:$0xff]
        %v743 = vld [vmem:[%s528 + $0x258] sm:$0xff]
        %v744 = vld [vmem:[%s528 + $0x260] sm:$0xff]
        %v745 = vld [vmem:[%s528 + $0x268] sm:$0xff]
        %v746 = vld [vmem:[%s528 + $0x270] sm:$0xff]
        %v747 = vld [vmem:[%s528 + $0x278] sm:$0xff]
        %v748 = vld [vmem:[%s528 + $0x280] sm:$0xff]
        %v749 = vld [vmem:[%s528 + $0x288] sm:$0xff]
        %v750 = vld [vmem:[%s528 + $0x290] sm:$0xff]
        %v751 = vld [vmem:[%s528 + $0x298] sm:$0xff]
        %v752 = vld [vmem:[%s528 + $0x2a0] sm:$0xff]
        %v753 = vld [vmem:[%s528 + $0x2a8] sm:$0xff]
        %v754 = vld [vmem:[%s528 + $0x2b0] sm:$0xff]
        %v755 = vld [vmem:[%s528 + $0x2b8] sm:$0xff]
        %v756 = vld [vmem:[%s528 + $0x2c0] sm:$0xff]
        %v757 = vld [vmem:[%s528 + $0x2c8] sm:$0xff]
        %v758 = vld [vmem:[%s528 + $0x2d0] sm:$0xff]
        %v759 = vld [vmem:[%s528 + $0x2d8] sm:$0xff]
        %v760 = vld [vmem:[%s528 + $0x2e0] sm:$0xff]
        %v761 = vld [vmem:[%s528 + $0x2e8] sm:$0xff]
        %v762 = vld [vmem:[%s528 + $0x2f0] sm:$0xff]
        %v763 = vld [vmem:[%s528 + $0x2f8] sm:$0xff]
        %v860 = vunpack.c.l.b16 %v668
        %v861 = vunpack.c.h.b16 %v668
        %v862 = vunpack.c.l.b16 %v669
        %v863 = vunpack.c.h.b16 %v669
        %v864 = vunpack.c.l.b16 %v670
        %v865 = vunpack.c.h.b16 %v670
        %v866 = vunpack.c.l.b16 %v671
        %v867 = vunpack.c.h.b16 %v671
        %v868 = vunpack.c.l.b16 %v672
        %v869 = vunpack.c.h.b16 %v672
        %v870 = vunpack.c.l.b16 %v673
        %v871 = vunpack.c.h.b16 %v673
        %v872 = vunpack.c.l.b16 %v674
        %v873 = vunpack.c.h.b16 %v674
        %v874 = vunpack.c.l.b16 %v675
        %v875 = vunpack.c.h.b16 %v675
        %v876 = vunpack.c.l.b16 %v676
        %v877 = vunpack.c.h.b16 %v676
        %v878 = vunpack.c.l.b16 %v677
        %v879 = vunpack.c.h.b16 %v677
        %v880 = vunpack.c.l.b16 %v678
        %v881 = vunpack.c.h.b16 %v678
        %v882 = vunpack.c.l.b16 %v679
        %v883 = vunpack.c.h.b16 %v679
        %v884 = vunpack.c.l.b16 %v680
        %v885 = vunpack.c.h.b16 %v680
        %v886 = vunpack.c.l.b16 %v681
        %v887 = vunpack.c.h.b16 %v681
        %v888 = vunpack.c.l.b16 %v682
        %v889 = vunpack.c.h.b16 %v682
        %v890 = vunpack.c.l.b16 %v683
        %v891 = vunpack.c.h.b16 %v683
        %v892 = vunpack.c.l.b16 %v684
        %v893 = vunpack.c.h.b16 %v684
        %v894 = vunpack.c.l.b16 %v685
        %v895 = vunpack.c.h.b16 %v685
        %v896 = vunpack.c.l.b16 %v686
        %v897 = vunpack.c.h.b16 %v686
        %v898 = vunpack.c.l.b16 %v687
        %v899 = vunpack.c.h.b16 %v687
        %v900 = vunpack.c.l.b16 %v688
        %v901 = vunpack.c.h.b16 %v688
        %v902 = vunpack.c.l.b16 %v689
        %v903 = vunpack.c.h.b16 %v689
        %v904 = vunpack.c.l.b16 %v690
        %v905 = vunpack.c.h.b16 %v690
        %v906 = vunpack.c.l.b16 %v691
        %v907 = vunpack.c.h.b16 %v691
        %v908 = vunpack.c.l.b16 %v692
        %v909 = vunpack.c.h.b16 %v692
        %v910 = vunpack.c.l.b16 %v693
        %v911 = vunpack.c.h.b16 %v693
        %v912 = vunpack.c.l.b16 %v694
        %v913 = vunpack.c.h.b16 %v694
        %v914 = vunpack.c.l.b16 %v695
        %v915 = vunpack.c.h.b16 %v695
        %v916 = vunpack.c.l.b16 %v696
        %v917 = vunpack.c.h.b16 %v696
        %v918 = vunpack.c.l.b16 %v697
        %v919 = vunpack.c.h.b16 %v697
        %v920 = vunpack.c.l.b16 %v698
        %v921 = vunpack.c.h.b16 %v698
        %v922 = vunpack.c.l.b16 %v699
        %v923 = vunpack.c.h.b16 %v699
        %v924 = vunpack.c.l.b16 %v700
        %v925 = vunpack.c.h.b16 %v700
        %v926 = vunpack.c.l.b16 %v701
        %v927 = vunpack.c.h.b16 %v701
        %v928 = vunpack.c.l.b16 %v702
        %v929 = vunpack.c.h.b16 %v702
        %v930 = vunpack.c.l.b16 %v703
        %v931 = vunpack.c.h.b16 %v703
        %v932 = vunpack.c.l.b16 %v704
        %v933 = vunpack.c.h.b16 %v704
        %v934 = vunpack.c.l.b16 %v705
        %v935 = vunpack.c.h.b16 %v705
        %v936 = vunpack.c.l.b16 %v706
        %v937 = vunpack.c.h.b16 %v706
        %v938 = vunpack.c.l.b16 %v707
        %v939 = vunpack.c.h.b16 %v707
        %v940 = vunpack.c.l.b16 %v708
        %v941 = vunpack.c.h.b16 %v708
        %v942 = vunpack.c.l.b16 %v709
        %v943 = vunpack.c.h.b16 %v709
        %v944 = vunpack.c.l.b16 %v710
        %v945 = vunpack.c.h.b16 %v710
        %v946 = vunpack.c.l.b16 %v711
        %v947 = vunpack.c.h.b16 %v711
        %v948 = vunpack.c.l.b16 %v712
        %v949 = vunpack.c.h.b16 %v712
        %v950 = vunpack.c.l.b16 %v713
        %v951 = vunpack.c.h.b16 %v713
        %v952 = vunpack.c.l.b16 %v714
        %v953 = vunpack.c.h.b16 %v714
        %v954 = vunpack.c.l.b16 %v715
        %v955 = vunpack.c.h.b16 %v715
        %v956 = vunpack.c.l.b16 %v716
        %v957 = vunpack.c.h.b16 %v716
        %v958 = vunpack.c.l.b16 %v717
        %v959 = vunpack.c.h.b16 %v717
        %v960 = vunpack.c.l.b16 %v718
        %v961 = vunpack.c.h.b16 %v718
        %v962 = vunpack.c.l.b16 %v719
        %v963 = vunpack.c.h.b16 %v719
        %v964 = vunpack.c.l.b16 %v720
        %v965 = vunpack.c.h.b16 %v720
        %v966 = vunpack.c.l.b16 %v721
        %v967 = vunpack.c.h.b16 %v721
        %v968 = vunpack.c.l.b16 %v722
        %v969 = vunpack.c.h.b16 %v722
        %v970 = vunpack.c.l.b16 %v723
        %v971 = vunpack.c.h.b16 %v723
        %v972 = vunpack.c.l.b16 %v724
        %v973 = vunpack.c.h.b16 %v724
        %v974 = vunpack.c.l.b16 %v725
        %v975 = vunpack.c.h.b16 %v725
        %v976 = vunpack.c.l.b16 %v726
        %v977 = vunpack.c.h.b16 %v726
        %v978 = vunpack.c.l.b16 %v727
        %v979 = vunpack.c.h.b16 %v727
        %v980 = vunpack.c.l.b16 %v728
        %v981 = vunpack.c.h.b16 %v728
        %v982 = vunpack.c.l.b16 %v729
        %v983 = vunpack.c.h.b16 %v729
        %v984 = vunpack.c.l.b16 %v730
        %v985 = vunpack.c.h.b16 %v730
        %v986 = vunpack.c.l.b16 %v731
        %v987 = vunpack.c.h.b16 %v731
        %v988 = vunpack.c.l.b16 %v732
        %v989 = vunpack.c.h.b16 %v732
        %v990 = vunpack.c.l.b16 %v733
        %v991 = vunpack.c.h.b16 %v733
        %v992 = vunpack.c.l.b16 %v734
        %v993 = vunpack.c.h.b16 %v734
        %v994 = vunpack.c.l.b16 %v735
        %v995 = vunpack.c.h.b16 %v735
        %v996 = vunpack.c.l.b16 %v736
        %v997 = vunpack.c.h.b16 %v736
        %v998 = vunpack.c.l.b16 %v737
        %v999 = vunpack.c.h.b16 %v737
        %v1000 = vunpack.c.l.b16 %v738
        %v1001 = vunpack.c.h.b16 %v738
        %v1002 = vunpack.c.l.b16 %v739
        %v1003 = vunpack.c.h.b16 %v739
        %v1004 = vunpack.c.l.b16 %v740
        %v1005 = vunpack.c.h.b16 %v740
        %v1006 = vunpack.c.l.b16 %v741
        %v1007 = vunpack.c.h.b16 %v741
        %v1008 = vunpack.c.l.b16 %v742
        %v1009 = vunpack.c.h.b16 %v742
        %v1010 = vunpack.c.l.b16 %v743
        %v1011 = vunpack.c.h.b16 %v743
        %v1012 = vunpack.c.l.b16 %v744
        %v1013 = vunpack.c.h.b16 %v744
        %v1014 = vunpack.c.l.b16 %v745
        %v1015 = vunpack.c.h.b16 %v745
        %v1016 = vunpack.c.l.b16 %v746
        %v1017 = vunpack.c.h.b16 %v746
        %v1018 = vunpack.c.l.b16 %v747
        %v1019 = vunpack.c.h.b16 %v747
        %v1020 = vunpack.c.l.b16 %v748
        %v1021 = vunpack.c.h.b16 %v748
        %v1022 = vunpack.c.l.b16 %v749
        %v1023 = vunpack.c.h.b16 %v749
        %v1024 = vunpack.c.l.b16 %v750
        %v1025 = vunpack.c.h.b16 %v750
        %v1026 = vunpack.c.l.b16 %v751
        %v1027 = vunpack.c.h.b16 %v751
        %v1028 = vunpack.c.l.b16 %v752
        %v1029 = vunpack.c.h.b16 %v752
        %v1030 = vunpack.c.l.b16 %v753
        %v1031 = vunpack.c.h.b16 %v753
        %v1032 = vunpack.c.l.b16 %v754
        %v1033 = vunpack.c.h.b16 %v754
        %v1034 = vunpack.c.l.b16 %v755
        %v1035 = vunpack.c.h.b16 %v755
        %v1036 = vunpack.c.l.b16 %v756
        %v1037 = vunpack.c.h.b16 %v756
        %v1038 = vunpack.c.l.b16 %v757
        %v1039 = vunpack.c.h.b16 %v757
        %v1040 = vunpack.c.l.b16 %v758
        %v1041 = vunpack.c.h.b16 %v758
        %v1042 = vunpack.c.l.b16 %v759
        %v1043 = vunpack.c.h.b16 %v759
        %v1044 = vunpack.c.l.b16 %v760
        %v1045 = vunpack.c.h.b16 %v760
        %v1046 = vunpack.c.l.b16 %v761
        %v1047 = vunpack.c.h.b16 %v761
        %v1048 = vunpack.c.l.b16 %v762
        %v1049 = vunpack.c.h.b16 %v762
        %v1050 = vunpack.c.l.b16 %v763
        %v1051 = vunpack.c.h.b16 %v763
        %v1052 = vpack.c.b16 %v872, %v860
        %v1053 = vpack.c.b16 %v873, %v861
        %v1054 = vpack.c.b16 %v874, %v862
        %v1055 = vpack.c.b16 %v875, %v863
        %v1056 = vpack.c.b16 %v876, %v864
        %v1057 = vpack.c.b16 %v877, %v865
        %v1058 = vpack.c.b16 %v878, %v866
        %v1059 = vpack.c.b16 %v879, %v867
        %v1060 = vpack.c.b16 %v880, %v868
        %v1061 = vpack.c.b16 %v881, %v869
        %v1062 = vpack.c.b16 %v882, %v870
        %v1063 = vpack.c.b16 %v883, %v871
        %v1064 = vpack.c.b16 %v896, %v884
        %v1065 = vpack.c.b16 %v897, %v885
        %v1066 = vpack.c.b16 %v898, %v886
        %v1067 = vpack.c.b16 %v899, %v887
        %v1068 = vpack.c.b16 %v900, %v888
        %v1069 = vpack.c.b16 %v901, %v889
        %v1070 = vpack.c.b16 %v902, %v890
        %v1071 = vpack.c.b16 %v903, %v891
        %v1072 = vpack.c.b16 %v904, %v892
        %v1073 = vpack.c.b16 %v905, %v893
        %v1074 = vpack.c.b16 %v906, %v894
        %v1075 = vpack.c.b16 %v907, %v895
        %v1076 = vpack.c.b16 %v920, %v908
        %v1077 = vpack.c.b16 %v921, %v909
        %v1078 = vpack.c.b16 %v922, %v910
        %v1079 = vpack.c.b16 %v923, %v911
        %v1080 = vpack.c.b16 %v924, %v912
        %v1081 = vpack.c.b16 %v925, %v913
        %v1082 = vpack.c.b16 %v926, %v914
        %v1083 = vpack.c.b16 %v927, %v915
        %v1084 = vpack.c.b16 %v928, %v916
        %v1085 = vpack.c.b16 %v929, %v917
        %v1086 = vpack.c.b16 %v930, %v918
        %v1087 = vpack.c.b16 %v931, %v919
        %v1088 = vpack.c.b16 %v944, %v932
        %v1089 = vpack.c.b16 %v945, %v933
        %v1090 = vpack.c.b16 %v946, %v934
        %v1091 = vpack.c.b16 %v947, %v935
        %v1092 = vpack.c.b16 %v948, %v936
        %v1093 = vpack.c.b16 %v949, %v937
        %v1094 = vpack.c.b16 %v950, %v938
        %v1095 = vpack.c.b16 %v951, %v939
        %v1096 = vpack.c.b16 %v952, %v940
        %v1097 = vpack.c.b16 %v953, %v941
        %v1098 = vpack.c.b16 %v954, %v942
        %v1099 = vpack.c.b16 %v955, %v943
        %v1100 = vpack.c.b16 %v968, %v956
        %v1101 = vpack.c.b16 %v969, %v957
        %v1102 = vpack.c.b16 %v970, %v958
        %v1103 = vpack.c.b16 %v971, %v959
        %v1104 = vpack.c.b16 %v972, %v960
        %v1105 = vpack.c.b16 %v973, %v961
        %v1106 = vpack.c.b16 %v974, %v962
        %v1107 = vpack.c.b16 %v975, %v963
        %v1108 = vpack.c.b16 %v976, %v964
        %v1109 = vpack.c.b16 %v977, %v965
        %v1110 = vpack.c.b16 %v978, %v966
        %v1111 = vpack.c.b16 %v979, %v967
        %v1112 = vpack.c.b16 %v992, %v980
        %v1113 = vpack.c.b16 %v993, %v981
        %v1114 = vpack.c.b16 %v994, %v982
        %v1115 = vpack.c.b16 %v995, %v983
        %v1116 = vpack.c.b16 %v996, %v984
        %v1117 = vpack.c.b16 %v997, %v985
        %v1118 = vpack.c.b16 %v998, %v986
        %v1119 = vpack.c.b16 %v999, %v987
        %v1120 = vpack.c.b16 %v1000, %v988
        %v1121 = vpack.c.b16 %v1001, %v989
        %v1122 = vpack.c.b16 %v1002, %v990
        %v1123 = vpack.c.b16 %v1003, %v991
        %v1124 = vpack.c.b16 %v1016, %v1004
        %v1125 = vpack.c.b16 %v1017, %v1005
        %v1126 = vpack.c.b16 %v1018, %v1006
        %v1127 = vpack.c.b16 %v1019, %v1007
        %v1128 = vpack.c.b16 %v1020, %v1008
        %v1129 = vpack.c.b16 %v1021, %v1009
        %v1130 = vpack.c.b16 %v1022, %v1010
        %v1131 = vpack.c.b16 %v1023, %v1011
        %v1132 = vpack.c.b16 %v1024, %v1012
        %v1133 = vpack.c.b16 %v1025, %v1013
        %v1134 = vpack.c.b16 %v1026, %v1014
        %v1135 = vpack.c.b16 %v1027, %v1015
        %v1136 = vpack.c.b16 %v1040, %v1028
        %v1137 = vpack.c.b16 %v1041, %v1029
        %v1138 = vpack.c.b16 %v1042, %v1030
        %v1139 = vpack.c.b16 %v1043, %v1031
        %v1140 = vpack.c.b16 %v1044, %v1032
        %v1141 = vpack.c.b16 %v1045, %v1033
        %v1142 = vpack.c.b16 %v1046, %v1034
        %v1143 = vpack.c.b16 %v1047, %v1035
        %v1144 = vpack.c.b16 %v1048, %v1036
        %v1145 = vpack.c.b16 %v1049, %v1037
        %v1146 = vpack.c.b16 %v1050, %v1038
        %v1147 = vpack.c.b16 %v1051, %v1039
        %1244 = vmatprep.subr.bf16.mxu0 %v1053
        %1245 = vmatpush1.bf16.msra.mxu0 %v1052
        %1246 = vmatprep.subr.bf16.mxu0 %v1065
        %1247 = vmatpush1.bf16.msra.mxu0 %v1064
        %1248 = vmatprep.subr.bf16.mxu0 %v1077
        %1249 = vmatpush1.bf16.msra.mxu0 %v1076
        %1250 = vmatprep.subr.bf16.mxu0 %v1089
        %1251 = vmatpush1.bf16.msra.mxu0 %v1088
        %1252 = vmatprep.subr.bf16.mxu0 %v1101
        %1253 = vmatpush1.bf16.msra.mxu0 %v1100
        %1254 = vmatprep.subr.bf16.mxu0 %v1113
        %1255 = vmatpush1.bf16.msra.mxu0 %v1112
        %1256 = vmatprep.subr.bf16.mxu0 %v1125
        %1257 = vmatpush1.bf16.msra.mxu0 %v1124
        %1258 = vmatprep.subr.bf16.mxu0 %v1137
        %1259 = vmatpush1.bf16.msra.mxu0 %v1136
        %1260 = vmatprep.subr.bf16.mxu0 0
        %1261 = vmatpush1.bf16.msra.mxu0 0
        %1262 = vmatprep.subr.bf16.mxu0 0
        %1263 = vmatpush1.bf16.msra.mxu0 0
        %1264 = vmatprep.subr.bf16.mxu0 0
        %1265 = vmatpush1.bf16.msra.mxu0 0
        %1266 = vmatprep.subr.bf16.mxu0 0
        %1267 = vmatpush1.bf16.msra.mxu0 0
        %1268 = vmatprep.subr.bf16.mxu0 0
        %1269 = vmatpush1.bf16.msra.mxu0 0
        %1270 = vmatprep.subr.bf16.mxu0 0
        %1271 = vmatpush1.bf16.msra.mxu0 0
        %1272 = vmatprep.subr.bf16.mxu0 0
        %1273 = vmatpush1.bf16.msra.mxu0 0
        %1274 = vmatprep.subr.bf16.mxu0 0
        %1275 = vmatpush1.bf16.msra.mxu0 0
        %1276 = vmatprep.mubr.bf16.mxu0 0
        %1277 = vmatmul.mubr.bf16.gmra.mrb[0].mxu0 %v667
        %v1278 = vpop.f32.mrb[0].mxu0
        %v1279 = vadd.f32 0.0, %v1278
        %v1280 = vpop.f32.mrb[0].mxu0
        %v1281 = vadd.f32 0.0, %v1280
        %v1282 = vpop.f32.mrb[0].mxu0
        %v1283 = vadd.f32 0.0, %v1282
        %v1284 = vpop.f32.mrb[0].mxu0
        %v1285 = vadd.f32 0.0, %v1284
        %1286 = vdwg.mxu0
        %1287 = vmatprep.subr.bf16.mxu0 %v1055
        %1288 = vmatpush1.bf16.msra.mxu0 %v1054
        %1289 = vmatprep.subr.bf16.mxu0 %v1067
        %1290 = vmatpush1.bf16.msra.mxu0 %v1066
        %1291 = vmatprep.subr.bf16.mxu0 %v1079
        %1292 = vmatpush1.bf16.msra.mxu0 %v1078
        %1293 = vmatprep.subr.bf16.mxu0 %v1091
        %1294 = vmatpush1.bf16.msra.mxu0 %v1090
        %1295 = vmatprep.subr.bf16.mxu0 %v1103
        %1296 = vmatpush1.bf16.msra.mxu0 %v1102
        %1297 = vmatprep.subr.bf16.mxu0 %v1115
        %1298 = vmatpush1.bf16.msra.mxu0 %v1114
        %1299 = vmatprep.subr.bf16.mxu0 %v1127
        %1300 = vmatpush1.bf16.msra.mxu0 %v1126
        %1301 = vmatprep.subr.bf16.mxu0 %v1139
        %1302 = vmatpush1.bf16.msra.mxu0 %v1138
        %1303 = vmatprep.subr.bf16.mxu0 0
        %1304 = vmatpush1.bf16.msra.mxu0 0
        %1305 = vmatprep.subr.bf16.mxu0 0
        %1306 = vmatpush1.bf16.msra.mxu0 0
        %1307 = vmatprep.subr.bf16.mxu0 0
        %1308 = vmatpush1.bf16.msra.mxu0 0
        %1309 = vmatprep.subr.bf16.mxu0 0
        %1310 = vmatpush1.bf16.msra.mxu0 0
        %1311 = vmatprep.subr.bf16.mxu0 0
        %1312 = vmatpush1.bf16.msra.mxu0 0
        %1313 = vmatprep.subr.bf16.mxu0 0
        %1314 = vmatpush1.bf16.msra.mxu0 0
        %1315 = vmatprep.subr.bf16.mxu0 0
        %1316 = vmatpush1.bf16.msra.mxu0 0
        %1317 = vmatprep.subr.bf16.mxu0 0
        %1318 = vmatpush1.bf16.msra.mxu0 0
        %1319 = vmatprep.mubr.bf16.mxu0 0
        %1320 = vmatmul.mubr.bf16.gmra.mrb[0].mxu0 %v667
        %v1321 = vpop.f32.mrb[0].mxu0
        %v1322 = vadd.f32 0.0, %v1321
        %v1323 = vpop.f32.mrb[0].mxu0
        %v1324 = vadd.f32 0.0, %v1323
        %v1325 = vpop.f32.mrb[0].mxu0
        %v1326 = vadd.f32 0.0, %v1325
        %v1327 = vpop.f32.mrb[0].mxu0
        %v1328 = vadd.f32 0.0, %v1327
        %1329 = vdwg.mxu0
        %1330 = vmatprep.subr.bf16.mxu0 %v1057
        %1331 = vmatpush1.bf16.msra.mxu0 %v1056
        %1332 = vmatprep.subr.bf16.mxu0 %v1069
        %1333 = vmatpush1.bf16.msra.mxu0 %v1068
        %1334 = vmatprep.subr.bf16.mxu0 %v1081
        %1335 = vmatpush1.bf16.msra.mxu0 %v1080
        %1336 = vmatprep.subr.bf16.mxu0 %v1093
        %1337 = vmatpush1.bf16.msra.mxu0 %v1092
        %1338 = vmatprep.subr.bf16.mxu0 %v1105
        %1339 = vmatpush1.bf16.msra.mxu0 %v1104
        %1340 = vmatprep.subr.bf16.mxu0 %v1117
        %1341 = vmatpush1.bf16.msra.mxu0 %v1116
        %1342 = vmatprep.subr.bf16.mxu0 %v1129
        %1343 = vmatpush1.bf16.msra.mxu0 %v1128
        %1344 = vmatprep.subr.bf16.mxu0 %v1141
        %1345 = vmatpush1.bf16.msra.mxu0 %v1140
        %1346 = vmatprep.subr.bf16.mxu0 0
        %1347 = vmatpush1.bf16.msra.mxu0 0
        %1348 = vmatprep.subr.bf16.mxu0 0
        %1349 = vmatpush1.bf16.msra.mxu0 0
        %1350 = vmatprep.subr.bf16.mxu0 0
        %1351 = vmatpush1.bf16.msra.mxu0 0
        %1352 = vmatprep.subr.bf16.mxu0 0
        %1353 = vmatpush1.bf16.msra.mxu0 0
        %1354 = vmatprep.subr.bf16.mxu0 0
        %1355 = vmatpush1.bf16.msra.mxu0 0
        %1356 = vmatprep.subr.bf16.mxu0 0
        %1357 = vmatpush1.bf16.msra.mxu0 0
        %1358 = vmatprep.subr.bf16.mxu0 0
        %1359 = vmatpush1.bf16.msra.mxu0 0
        %1360 = vmatprep.subr.bf16.mxu0 0
        %1361 = vmatpush1.bf16.msra.mxu0 0
        %1362 = vmatprep.mubr.bf16.mxu0 0
        %1363 = vmatmul.mubr.bf16.gmra.mrb[0].mxu0 %v667
        %v1364 = vpop.f32.mrb[0].mxu0
        %v1365 = vadd.f32 0.0, %v1364
        %v1366 = vpop.f32.mrb[0].mxu0
        %v1367 = vadd.f32 0.0, %v1366
        %v1368 = vpop.f32.mrb[0].mxu0
        %v1369 = vadd.f32 0.0, %v1368
        %v1370 = vpop.f32.mrb[0].mxu0
        %v1371 = vadd.f32 0.0, %v1370
        %1372 = vdwg.mxu0
        %1373 = vmatprep.subr.bf16.mxu0 %v1059
        %1374 = vmatpush1.bf16.msra.mxu0 %v1058
        %1375 = vmatprep.subr.bf16.mxu0 %v1071
        %1376 = vmatpush1.bf16.msra.mxu0 %v1070
        %1377 = vmatprep.subr.bf16.mxu0 %v1083
        %1378 = vmatpush1.bf16.msra.mxu0 %v1082
        %1379 = vmatprep.subr.bf16.mxu0 %v1095
        %1380 = vmatpush1.bf16.msra.mxu0 %v1094
        %1381 = vmatprep.subr.bf16.mxu0 %v1107
        %1382 = vmatpush1.bf16.msra.mxu0 %v1106
        %1383 = vmatprep.subr.bf16.mxu0 %v1119
        %1384 = vmatpush1.bf16.msra.mxu0 %v1118
        %1385 = vmatprep.subr.bf16.mxu0 %v1131
        %1386 = vmatpush1.bf16.msra.mxu0 %v1130
        %1387 = vmatprep.subr.bf16.mxu0 %v1143
        %1388 = vmatpush1.bf16.msra.mxu0 %v1142
        %1389 = vmatprep.subr.bf16.mxu0 0
        %1390 = vmatpush1.bf16.msra.mxu0 0
        %1391 = vmatprep.subr.bf16.mxu0 0
        %1392 = vmatpush1.bf16.msra.mxu0 0
        %1393 = vmatprep.subr.bf16.mxu0 0
        %1394 = vmatpush1.bf16.msra.mxu0 0
        %1395 = vmatprep.subr.bf16.mxu0 0
        %1396 = vmatpush1.bf16.msra.mxu0 0
        %1397 = vmatprep.subr.bf16.mxu0 0
        %1398 = vmatpush1.bf16.msra.mxu0 0
        %1399 = vmatprep.subr.bf16.mxu0 0
        %1400 = vmatpush1.bf16.msra.mxu0 0
        %1401 = vmatprep.subr.bf16.mxu0 0
        %1402 = vmatpush1.bf16.msra.mxu0 0
        %1403 = vmatprep.subr.bf16.mxu0 0
        %1404 = vmatpush1.bf16.msra.mxu0 0
        %1405 = vmatprep.mubr.bf16.mxu0 0
        %1406 = vmatmul.mubr.bf16.gmra.mrb[0].mxu0 %v667
        %v1407 = vpop.f32.mrb[0].mxu0
        %v1408 = vadd.f32 0.0, %v1407
        %v1409 = vpop.f32.mrb[0].mxu0
        %v1410 = vadd.f32 0.0, %v1409
        %v1411 = vpop.f32.mrb[0].mxu0
        %v1412 = vadd.f32 0.0, %v1411
        %v1413 = vpop.f32.mrb[0].mxu0
        %v1414 = vadd.f32 0.0, %v1413
        %1415 = vdwg.mxu0
        %1416 = vmatprep.subr.bf16.mxu0 %v1061
        %1417 = vmatpush1.bf16.msra.mxu0 %v1060
        %1418 = vmatprep.subr.bf16.mxu0 %v1073
        %1419 = vmatpush1.bf16.msra.mxu0 %v1072
        %1420 = vmatprep.subr.bf16.mxu0 %v1085
        %1421 = vmatpush1.bf16.msra.mxu0 %v1084
        %1422 = vmatprep.subr.bf16.mxu0 %v1097
        %1423 = vmatpush1.bf16.msra.mxu0 %v1096
        %1424 = vmatprep.subr.bf16.mxu0 %v1109
        %1425 = vmatpush1.bf16.msra.mxu0 %v1108
        %1426 = vmatprep.subr.bf16.mxu0 %v1121
        %1427 = vmatpush1.bf16.msra.mxu0 %v1120
        %1428 = vmatprep.subr.bf16.mxu0 %v1133
        %1429 = vmatpush1.bf16.msra.mxu0 %v1132
        %1430 = vmatprep.subr.bf16.mxu0 %v1145
        %1431 = vmatpush1.bf16.msra.mxu0 %v1144
        %1432 = vmatprep.subr.bf16.mxu0 0
        %1433 = vmatpush1.bf16.msra.mxu0 0
        %1434 = vmatprep.subr.bf16.mxu0 0
        %1435 = vmatpush1.bf16.msra.mxu0 0
        %1436 = vmatprep.subr.bf16.mxu0 0
        %1437 = vmatpush1.bf16.msra.mxu0 0
        %1438 = vmatprep.subr.bf16.mxu0 0
        %1439 = vmatpush1.bf16.msra.mxu0 0
        %1440 = vmatprep.subr.bf16.mxu0 0
        %1441 = vmatpush1.bf16.msra.mxu0 0
        %1442 = vmatprep.subr.bf16.mxu0 0
        %1443 = vmatpush1.bf16.msra.mxu0 0
        %1444 = vmatprep.subr.bf16.mxu0 0
        %1445 = vmatpush1.bf16.msra.mxu0 0
        %1446 = vmatprep.subr.bf16.mxu0 0
        %1447 = vmatpush1.bf16.msra.mxu0 0
        %1448 = vmatprep.mubr.bf16.mxu0 0
        %1449 = vmatmul.mubr.bf16.gmra.mrb[0].mxu0 %v667
        %v1450 = vpop.f32.mrb[0].mxu0
        %v1451 = vadd.f32 0.0, %v1450
        %v1452 = vpop.f32.mrb[0].mxu0
        %v1453 = vadd.f32 0.0, %v1452
        %v1454 = vpop.f32.mrb[0].mxu0
        %v1455 = vadd.f32 0.0, %v1454
        %v1456 = vpop.f32.mrb[0].mxu0
        %v1457 = vadd.f32 0.0, %v1456
        %1458 = vdwg.mxu0
        %1459 = vmatprep.subr.bf16.mxu0 %v1063
        %1460 = vmatpush1.bf16.msra.mxu0 %v1062
        %1461 = vmatprep.subr.bf16.mxu0 %v1075
        %1462 = vmatpush1.bf16.msra.mxu0 %v1074
        %1463 = vmatprep.subr.bf16.mxu0 %v1087
        %1464 = vmatpush1.bf16.msra.mxu0 %v1086
        %1465 = vmatprep.subr.bf16.mxu0 %v1099
        %1466 = vmatpush1.bf16.msra.mxu0 %v1098
        %1467 = vmatprep.subr.bf16.mxu0 %v1111
        %1468 = vmatpush1.bf16.msra.mxu0 %v1110
        %1469 = vmatprep.subr.bf16.mxu0 %v1123
        %1470 = vmatpush1.bf16.msra.mxu0 %v1122
        %1471 = vmatprep.subr.bf16.mxu0 %v1135
        %1472 = vmatpush1.bf16.msra.mxu0 %v1134
        %1473 = vmatprep.subr.bf16.mxu0 %v1147
        %1474 = vmatpush1.bf16.msra.mxu0 %v1146
        %1475 = vmatprep.subr.bf16.mxu0 0
        %1476 = vmatpush1.bf16.msra.mxu0 0
        %1477 = vmatprep.subr.bf16.mxu0 0
        %1478 = vmatpush1.bf16.msra.mxu0 0
        %1479 = vmatprep.subr.bf16.mxu0 0
        %1480 = vmatpush1.bf16.msra.mxu0 0
        %1481 = vmatprep.subr.bf16.mxu0 0
        %1482 = vmatpush1.bf16.msra.mxu0 0
        %1483 = vmatprep.subr.bf16.mxu0 0
        %1484 = vmatpush1.bf16.msra.mxu0 0
        %1485 = vmatprep.subr.bf16.mxu0 0
        %1486 = vmatpush1.bf16.msra.mxu0 0
        %1487 = vmatprep.subr.bf16.mxu0 0
        %1488 = vmatpush1.bf16.msra.mxu0 0
        %1489 = vmatprep.subr.bf16.mxu0 0
        %1490 = vmatpush1.bf16.msra.mxu0 0
        %1491 = vmatprep.mubr.bf16.mxu0 0
        %1492 = vmatmul.mubr.bf16.gmra.mrb[0].mxu0 %v667
        %v1493 = vpop.f32.mrb[0].mxu0
        %v1494 = vadd.f32 0.0, %v1493
        %v1495 = vpop.f32.mrb[0].mxu0
        %v1496 = vadd.f32 0.0, %v1495
        %v1497 = vpop.f32.mrb[0].mxu0
        %v1498 = vadd.f32 0.0, %v1497
        %v1499 = vpop.f32.mrb[0].mxu0
        %v1500 = vadd.f32 0.0, %v1499
        %1501 = vdwg.mxu0
        %v1502 = vpack.c.bf16 %v1283, %v1279
        %v1503 = vpack.c.bf16 %v1369, %v1365
        %v1504 = vpack.c.bf16 %v1455, %v1451
        %v1505 = vld [vmem:[#allocation6] sm:$0xff]
        %v1506 = vld [vmem:[#allocation6 + $0x8] sm:$0xff]
        %vm1507 = vcmask 523264
        %v1509 = vsel %vm1507, %v1502, 0
        %v1512 = vsel %vm1507, %v1503, 0
        %1514 = vmatprep.subr.bf16.mxu0 0
        %1515 = vmatpush1.bf16.xpose.msra.mxu0 %v1512
        %1516 = vmatprep.subr.bf16.mxu0 0
        %1517 = vmatpush1.bf16.xpose.msra.mxu0 0
        %1518 = vmatprep.subr.bf16.mxu0 0
        %1519 = vmatpush1.bf16.xpose.msra.mxu0 0
        %1520 = vmatprep.subr.bf16.mxu0 0
        %1521 = vmatpush1.bf16.xpose.msra.mxu0 0
        %1522 = vmatprep.subr.bf16.mxu0 0
        %1523 = vmatpush1.bf16.xpose.msra.mxu0 0
        %1524 = vmatprep.subr.bf16.mxu0 0
        %1525 = vmatpush1.bf16.xpose.msra.mxu0 0
        %1526 = vmatprep.subr.bf16.mxu0 0
        %1527 = vmatpush1.bf16.xpose.msra.mxu0 0
        %1528 = vmatprep.subr.bf16.mxu0 0
        %1529 = vmatpush1.bf16.xpose.msra.mxu0 0
        %1530 = vmatprep.subr.bf16.mxu0 0
        %1531 = vmatpush1.bf16.xpose.msra.mxu0 0
        %1532 = vmatprep.subr.bf16.mxu0 0
        %1533 = vmatpush1.bf16.xpose.msra.mxu0 0
        %1534 = vmatprep.subr.bf16.mxu0 0
        %1535 = vmatpush1.bf16.xpose.msra.mxu0 0
        %1536 = vmatprep.subr.bf16.mxu0 0
        %1537 = vmatpush1.bf16.xpose.msra.mxu0 0
        %1538 = vmatprep.subr.bf16.mxu0 0
        %1539 = vmatpush1.bf16.xpose.msra.mxu0 0
        %1540 = vmatprep.subr.bf16.mxu0 0
        %1541 = vmatpush1.bf16.xpose.msra.mxu0 0
        %1542 = vmatprep.subr.bf16.mxu0 0
        %1543 = vmatpush1.bf16.xpose.msra.mxu0 0
        %1544 = vmatprep.subr.bf16.mxu0 0
        %1545 = vmatpush1.bf16.xpose.msra.mxu0 0
        %1546 = vmatprep.mubr.bf16.mxu0 0
        %1547 = vmatmul.mubr.bf16.gmra.mrb[0].mxu0 %v1509
        %v1548 = vpop.f32.mrb[0].mxu0
        %v1549 = vadd.f32 %v1505, %v1548
        %v1550 = vpop.f32.mrb[0].mxu0
        %v1551 = vpop.f32.mrb[0].mxu0
        %v1552 = vadd.f32 %v1506, %v1551
        %v1553 = vpop.f32.mrb[0].mxu0
        %1554 = vdwg.mxu0
        %vm1555 = vcmask 130048
        %v1556 = vsel %vm1555, %v1549, -inf
        %1557 = vmax.xlane.f32.xlu0 %v1556
        %v1558 = vpop.xlane.xlu0 %1557
        %v1559 = vsel %vm1555, %v1552, -inf
        %1560 = vmax.xlane.f32.xlu0 %v1559
        %v1561 = vpop.xlane.xlu0 %1560
        %v1562 = vsub.f32 %v1549, %v1558
        %v1563 = vsub.f32 %v1552, %v1561
        %v1564 = vmul.f32 %v1562, 1.442695
        %v1565 = vpow.pop %v1564
        %v1566 = vmul.f32 %v1563, 1.442695
        %v1567 = vpow.pop %v1566
        %v1568 = vsel %vm1555, %v1565, 0.0
        %1569 = vadd.xlane.f32.xlu0 %v1568
        %v1570 = vpop.xlane.xlu0 %1569
        %v1571 = vsel %vm1555, %v1567, 0.0
        %1572 = vadd.xlane.f32.xlu0 %v1571
        %v1573 = vpop.xlane.xlu0 %1572
        %v1574 = vrcp.pop %v1570
        %v1575 = vrcp.pop %v1573
        %v1576 = vmul.f32 %v1565, %v1574
        %v1577 = vmul.f32 %v1567, %v1575
        %v1578 = vpack.c.bf16 %v1577, %v1576
        %v1580 = vsel %vm1555, %v1578, 0
        %1582 = vmatprep.subr.bf16.mxu0 0
        %1583 = vmatpush1.bf16.msra.mxu0 %v1504
        %1584 = vmatprep.subr.bf16.mxu0 0
        %1585 = vmatpush1.bf16.msra.mxu0 0
        %1586 = vmatprep.subr.bf16.mxu0 0
        %1587 = vmatpush1.bf16.msra.mxu0 0
        %1588 = vmatprep.subr.bf16.mxu0 0
        %1589 = vmatpush1.bf16.msra.mxu0 0
        %1590 = vmatprep.subr.bf16.mxu0 0
        %1591 = vmatpush1.bf16.msra.mxu0 0
        %1592 = vmatprep.subr.bf16.mxu0 0
        %1593 = vmatpush1.bf16.msra.mxu0 0
        %1594 = vmatprep.subr.bf16.mxu0 0
        %1595 = vmatpush1.bf16.msra.mxu0 0
        %1596 = vmatprep.subr.bf16.mxu0 0
        %1597 = vmatpush1.bf16.msra.mxu0 0
        %1598 = vmatprep.subr.bf16.mxu0 0
        %1599 = vmatpush1.bf16.msra.mxu0 0
        %1600 = vmatprep.subr.bf16.mxu0 0
        %1601 = vmatpush1.bf16.msra.mxu0 0
        %1602 = vmatprep.subr.bf16.mxu0 0
        %1603 = vmatpush1.bf16.msra.mxu0 0
        %1604 = vmatprep.subr.bf16.mxu0 0
        %1605 = vmatpush1.bf16.msra.mxu0 0
        %1606 = vmatprep.subr.bf16.mxu0 0
        %1607 = vmatpush1.bf16.msra.mxu0 0
        %1608 = vmatprep.subr.bf16.mxu0 0
        %1609 = vmatpush1.bf16.msra.mxu0 0
        %1610 = vmatprep.subr.bf16.mxu0 0
        %1611 = vmatpush1.bf16.msra.mxu0 0
        %1612 = vmatprep.subr.bf16.mxu0 0
        %1613 = vmatpush1.bf16.msra.mxu0 0
        %1614 = vmatprep.mubr.bf16.mxu0 0
        %1615 = vmatmul.mubr.bf16.gmra.mrb[0].mxu0 %v1580
        %v1616 = vpop.f32.mrb[0].mxu0
        %v1617 = vadd.f32 0.0, %v1616
        %v1618 = vpop.f32.mrb[0].mxu0
        %v1619 = vpop.f32.mrb[0].mxu0
        %v1620 = vadd.f32 0.0, %v1619
        %v1621 = vpop.f32.mrb[0].mxu0
        %1622 = vdwg.mxu0
        %v1623 = vpack.c.bf16 %v1620, %v1617
        %v1624 = vld [vmem:[%s537] sm:$0xf]
        %v1625 = vld [vmem:[%s537 + $0x4] sm:$0xf]
        %v1626 = vld [vmem:[%s537 + $0x8] sm:$0xf]
        %v1627 = vld [vmem:[%s537 + $0xc] sm:$0xf]
        %v1628 = vld [vmem:[%s537 + $0x10] sm:$0xf]
        %v1629 = vld [vmem:[%s537 + $0x14] sm:$0xf]
        %v1630 = vld [vmem:[%s537 + $0x18] sm:$0xf]
        %v1631 = vld [vmem:[%s537 + $0x1c] sm:$0xf]
        %s1632 = scalar_lea.vmem [#allocation6], 16
        %v1633 = vld [vmem:[%s1632] sm:$0xff]
        %v1634 = vld [vmem:[%s1632 + $0x8] sm:$0xff]
        %1636 = vrot.lane.b32.xlu0 %v1502, 64
        %v1637 = vpop.permute.xlu0 %1636
        %1639 = vrot.lane.b32.xlu0 %v1503, 64
        %v1640 = vpop.permute.xlu0 %1639
        %v1642 = vsel %vm1507, %v1637, 0
        %v1645 = vsel %vm1507, %v1640, 0
        %1647 = vmatprep.subr.bf16.mxu0 0
        %1648 = vmatpush1.bf16.xpose.msra.mxu0 %v1645
        %1649 = vmatprep.subr.bf16.mxu0 0
        %1650 = vmatpush1.bf16.xpose.msra.mxu0 0
        %1651 = vmatprep.subr.bf16.mxu0 0
        %1652 = vmatpush1.bf16.xpose.msra.mxu0 0
        %1653 = vmatprep.subr.bf16.mxu0 0
        %1654 = vmatpush1.bf16.xpose.msra.mxu0 0
        %1655 = vmatprep.subr.bf16.mxu0 0
        %1656 = vmatpush1.bf16.xpose.msra.mxu0 0
        %1657 = vmatprep.subr.bf16.mxu0 0
        %1658 = vmatpush1.bf16.xpose.msra.mxu0 0
        %1659 = vmatprep.subr.bf16.mxu0 0
        %1660 = vmatpush1.bf16.xpose.msra.mxu0 0
        %1661 = vmatprep.subr.bf16.mxu0 0
        %1662 = vmatpush1.bf16.xpose.msra.mxu0 0
        %1663 = vmatprep.subr.bf16.mxu0 0
        %1664 = vmatpush1.bf16.xpose.msra.mxu0 0
        %1665 = vmatprep.subr.bf16.mxu0 0
        %1666 = vmatpush1.bf16.xpose.msra.mxu0 0
        %1667 = vmatprep.subr.bf16.mxu0 0
        %1668 = vmatpush1.bf16.xpose.msra.mxu0 0
        %1669 = vmatprep.subr.bf16.mxu0 0
        %1670 = vmatpush1.bf16.xpose.msra.mxu0 0
        %1671 = vmatprep.subr.bf16.mxu0 0
        %1672 = vmatpush1.bf16.xpose.msra.mxu0 0
        %1673 = vmatprep.subr.bf16.mxu0 0
        %1674 = vmatpush1.bf16.xpose.msra.mxu0 0
        %1675 = vmatprep.subr.bf16.mxu0 0
        %1676 = vmatpush1.bf16.xpose.msra.mxu0 0
        %1677 = vmatprep.subr.bf16.mxu0 0
        %1678 = vmatpush1.bf16.xpose.msra.mxu0 0
        %1679 = vmatprep.mubr.bf16.mxu0 0
        %1680 = vmatmul.mubr.bf16.gmra.mrb[0].mxu0 %v1642
        %v1681 = vpop.f32.mrb[0].mxu0
        %v1682 = vadd.f32 %v1633, %v1681
        %v1683 = vpop.f32.mrb[0].mxu0
        %v1684 = vpop.f32.mrb[0].mxu0
        %v1685 = vadd.f32 %v1634, %v1684
        %v1686 = vpop.f32.mrb[0].mxu0
        %1687 = vdwg.mxu0
        %v1688 = vsel %vm1555, %v1682, -inf
        %1689 = vmax.xlane.f32.xlu0 %v1688
        %v1690 = vpop.xlane.xlu0 %1689
        %v1691 = vsel %vm1555, %v1685, -inf
        %1692 = vmax.xlane.f32.xlu0 %v1691
        %v1693 = vpop.xlane.xlu0 %1692
        %v1694 = vsub.f32 %v1682, %v1690
        %v1695 = vsub.f32 %v1685, %v1693
        %v1696 = vmul.f32 %v1694, 1.442695
        %v1697 = vpow.pop %v1696
        %v1698 = vmul.f32 %v1695, 1.442695
        %v1699 = vpow.pop %v1698
        %v1700 = vsel %vm1555, %v1697, 0.0
        %1701 = vadd.xlane.f32.xlu0 %v1700
        %v1702 = vpop.xlane.xlu0 %1701
        %v1703 = vsel %vm1555, %v1699, 0.0
        %1704 = vadd.xlane.f32.xlu0 %v1703
        %v1705 = vpop.xlane.xlu0 %1704
        %v1706 = vrcp.pop %v1702
        %v1707 = vrcp.pop %v1705
        %v1708 = vmul.f32 %v1697, %v1706
        %v1709 = vmul.f32 %v1699, %v1707
        %v1710 = vpack.c.bf16 %v1709, %v1708
        %1712 = vrot.lane.b32.xlu0 %v1504, 64
        %v1713 = vpop.permute.xlu0 %1712
        %v1716 = vsel %vm1555, %v1710, 0
        %1718 = vmatprep.subr.bf16.mxu0 0
        %1719 = vmatpush1.bf16.msra.mxu0 %v1713
        %1720 = vmatprep.subr.bf16.mxu0 0
        %1721 = vmatpush1.bf16.msra.mxu0 0
        %1722 = vmatprep.subr.bf16.mxu0 0
        %1723 = vmatpush1.bf16.msra.mxu0 0
        %1724 = vmatprep.subr.bf16.mxu0 0
        %1725 = vmatpush1.bf16.msra.mxu0 0
        %1726 = vmatprep.subr.bf16.mxu0 0
        %1727 = vmatpush1.bf16.msra.mxu0 0
        %1728 = vmatprep.subr.bf16.mxu0 0
        %1729 = vmatpush1.bf16.msra.mxu0 0
        %1730 = vmatprep.subr.bf16.mxu0 0
        %1731 = vmatpush1.bf16.msra.mxu0 0
        %1732 = vmatprep.subr.bf16.mxu0 0
        %1733 = vmatpush1.bf16.msra.mxu0 0
        %1734 = vmatprep.subr.bf16.mxu0 0
        %1735 = vmatpush1.bf16.msra.mxu0 0
        %1736 = vmatprep.subr.bf16.mxu0 0
        %1737 = vmatpush1.bf16.msra.mxu0 0
        %1738 = vmatprep.subr.bf16.mxu0 0
        %1739 = vmatpush1.bf16.msra.mxu0 0
        %1740 = vmatprep.subr.bf16.mxu0 0
        %1741 = vmatpush1.bf16.msra.mxu0 0
        %1742 = vmatprep.subr.bf16.mxu0 0
        %1743 = vmatpush1.bf16.msra.mxu0 0
        %1744 = vmatprep.subr.bf16.mxu0 0
        %1745 = vmatpush1.bf16.msra.mxu0 0
        %1746 = vmatprep.subr.bf16.mxu0 0
        %1747 = vmatpush1.bf16.msra.mxu0 0
        %1748 = vmatprep.subr.bf16.mxu0 0
        %1749 = vmatpush1.bf16.msra.mxu0 0
        %1750 = vmatprep.mubr.bf16.mxu0 0
        %1751 = vmatmul.mubr.bf16.gmra.mrb[0].mxu0 %v1716
        %v1752 = vpop.f32.mrb[0].mxu0
        %v1753 = vadd.f32 0.0, %v1752
        %v1754 = vpop.f32.mrb[0].mxu0
        %v1755 = vpop.f32.mrb[0].mxu0
        %v1756 = vadd.f32 0.0, %v1755
        %v1757 = vpop.f32.mrb[0].mxu0
        %1758 = vdwg.mxu0
        %v1759 = vpack.c.bf16 %v1756, %v1753
        %v1760 = vld [vmem:[%s537 + $0x20] sm:$0xf]
        %v1761 = vld [vmem:[%s537 + $0x24] sm:$0xf]
        %v1762 = vld [vmem:[%s537 + $0x28] sm:$0xf]
        %v1763 = vld [vmem:[%s537 + $0x2c] sm:$0xf]
        %v1764 = vld [vmem:[%s537 + $0x30] sm:$0xf]
        %v1765 = vld [vmem:[%s537 + $0x34] sm:$0xf]
        %v1766 = vld [vmem:[%s537 + $0x38] sm:$0xf]
        %v1767 = vld [vmem:[%s537 + $0x3c] sm:$0xf]
        %v1776 = vunpack.c.l.b16 %v1760
        %v1777 = vunpack.c.l.b16 %v1761
        %v1778 = vunpack.c.l.b16 %v1762
        %v1779 = vunpack.c.l.b16 %v1763
        %v1780 = vunpack.c.l.b16 %v1764
        %v1781 = vunpack.c.l.b16 %v1765
        %v1782 = vunpack.c.l.b16 %v1766
        %v1783 = vunpack.c.l.b16 %v1767
        %v1784 = vpack.c.b16 %v1777, %v1776
        %v1785 = vpack.c.b16 %v1779, %v1778
        %v1786 = vpack.c.b16 %v1781, %v1780
        %v1787 = vpack.c.b16 %v1783, %v1782
        %v1793 = vsel %vm1507, %v1759, 0
        %1795 = vmatprep.subr.bf16.mxu0 0
        %1796 = vmatpush1.bf16.msra.mxu0 %v1784
        %1797 = vmatprep.subr.bf16.mxu0 0
        %1798 = vmatpush1.bf16.msra.mxu0 %v1785
        %1799 = vmatprep.subr.bf16.mxu0 0
        %1800 = vmatpush1.bf16.msra.mxu0 %v1786
        %1801 = vmatprep.subr.bf16.mxu0 0
        %1802 = vmatpush1.bf16.msra.mxu0 %v1787
        %1803 = vmatprep.subr.bf16.mxu0 0
        %1804 = vmatpush1.bf16.msra.mxu0 0
        %1805 = vmatprep.subr.bf16.mxu0 0
        %1806 = vmatpush1.bf16.msra.mxu0 0
        %1807 = vmatprep.subr.bf16.mxu0 0
        %1808 = vmatpush1.bf16.msra.mxu0 0
        %1809 = vmatprep.subr.bf16.mxu0 0
        %1810 = vmatpush1.bf16.msra.mxu0 0
        %1811 = vmatprep.subr.bf16.mxu0 0
        %1812 = vmatpush1.bf16.msra.mxu0 0
        %1813 = vmatprep.subr.bf16.mxu0 0
        %1814 = vmatpush1.bf16.msra.mxu0 0
        %1815 = vmatprep.subr.bf16.mxu0 0
        %1816 = vmatpush1.bf16.msra.mxu0 0
        %1817 = vmatprep.subr.bf16.mxu0 0
        %1818 = vmatpush1.bf16.msra.mxu0 0
        %1819 = vmatprep.subr.bf16.mxu0 0
        %1820 = vmatpush1.bf16.msra.mxu0 0
        %1821 = vmatprep.subr.bf16.mxu0 0
        %1822 = vmatpush1.bf16.msra.mxu0 0
        %1823 = vmatprep.subr.bf16.mxu0 0
        %1824 = vmatpush1.bf16.msra.mxu0 0
        %1825 = vmatprep.subr.bf16.mxu0 0
        %1826 = vmatpush1.bf16.msra.mxu0 0
        %1827 = vmatprep.mubr.bf16.mxu0 0
        %1828 = vmatmul.mubr.bf16.gmra.mrb[0].mxu0 %v1793
        %v1829 = vpop.f32.mrb[0].mxu0
        %v1830 = vadd.f32 0.0, %v1829
        %v1831 = vpop.f32.mrb[0].mxu0
        %v1832 = vpop.f32.mrb[0].mxu0
        %v1833 = vadd.f32 0.0, %v1832
        %v1834 = vpop.f32.mrb[0].mxu0
        %1835 = vdwg.mxu0
        %v1844 = vunpack.c.l.b16 %v1624
        %v1845 = vunpack.c.l.b16 %v1625
        %v1846 = vunpack.c.l.b16 %v1626
        %v1847 = vunpack.c.l.b16 %v1627
        %v1848 = vunpack.c.l.b16 %v1628
        %v1849 = vunpack.c.l.b16 %v1629
        %v1850 = vunpack.c.l.b16 %v1630
        %v1851 = vunpack.c.l.b16 %v1631
        %v1852 = vpack.c.b16 %v1845, %v1844
        %v1853 = vpack.c.b16 %v1847, %v1846
        %v1854 = vpack.c.b16 %v1849, %v1848
        %v1855 = vpack.c.b16 %v1851, %v1850
        %v1861 = vsel %vm1507, %v1623, 0
        %1863 = vmatprep.subr.bf16.mxu0 0
        %1864 = vmatpush1.bf16.msra.mxu0 %v1852
        %1865 = vmatprep.subr.bf16.mxu0 0
        %1866 = vmatpush1.bf16.msra.mxu0 %v1853
        %1867 = vmatprep.subr.bf16.mxu0 0
        %1868 = vmatpush1.bf16.msra.mxu0 %v1854
        %1869 = vmatprep.subr.bf16.mxu0 0
        %1870 = vmatpush1.bf16.msra.mxu0 %v1855
        %1871 = vmatprep.subr.bf16.mxu0 0
        %1872 = vmatpush1.bf16.msra.mxu0 0
        %1873 = vmatprep.subr.bf16.mxu0 0
        %1874 = vmatpush1.bf16.msra.mxu0 0
        %1875 = vmatprep.subr.bf16.mxu0 0
        %1876 = vmatpush1.bf16.msra.mxu0 0
        %1877 = vmatprep.subr.bf16.mxu0 0
        %1878 = vmatpush1.bf16.msra.mxu0 0
        %1879 = vmatprep.subr.bf16.mxu0 0
        %1880 = vmatpush1.bf16.msra.mxu0 0
        %1881 = vmatprep.subr.bf16.mxu0 0
        %1882 = vmatpush1.bf16.msra.mxu0 0
        %1883 = vmatprep.subr.bf16.mxu0 0
        %1884 = vmatpush1.bf16.msra.mxu0 0
        %1885 = vmatprep.subr.bf16.mxu0 0
        %1886 = vmatpush1.bf16.msra.mxu0 0
        %1887 = vmatprep.subr.bf16.mxu0 0
        %1888 = vmatpush1.bf16.msra.mxu0 0
        %1889 = vmatprep.subr.bf16.mxu0 0
        %1890 = vmatpush1.bf16.msra.mxu0 0
        %1891 = vmatprep.subr.bf16.mxu0 0
        %1892 = vmatpush1.bf16.msra.mxu0 0
        %1893 = vmatprep.subr.bf16.mxu0 0
        %1894 = vmatpush1.bf16.msra.mxu0 0
        %1895 = vmatprep.mubr.bf16.mxu0 0
        %1896 = vmatmul.mubr.bf16.gmra.mrb[0].mxu0 %v1861
        %v1897 = vpop.f32.mrb[0].mxu0
        %v1898 = vadd.f32 %v1830, %v1897
        %v1899 = vpop.f32.mrb[0].mxu0
        %v1900 = vpop.f32.mrb[0].mxu0
        %v1901 = vadd.f32 %v1833, %v1900
        %v1902 = vpop.f32.mrb[0].mxu0
        %1903 = vdwg.mxu0
        %v1904 = vpack.c.bf16 %v1285, %v1281
        %v1905 = vpack.c.bf16 %v1371, %v1367
        %v1906 = vpack.c.bf16 %v1457, %v1453
        %s1907 = scalar_lea.vmem [#allocation6], 32
        %v1908 = vld [vmem:[%s1907] sm:$0xff]
        %v1909 = vld [vmem:[%s1907 + $0x8] sm:$0xff]
        %v1911 = vsel %vm1507, %v1904, 0
        %v1914 = vsel %vm1507, %v1905, 0
        %1916 = vmatprep.subr.bf16.mxu0 0
        %1917 = vmatpush1.bf16.xpose.msra.mxu0 %v1914
        %1918 = vmatprep.subr.bf16.mxu0 0
        %1919 = vmatpush1.bf16.xpose.msra.mxu0 0
        %1920 = vmatprep.subr.bf16.mxu0 0
        %1921 = vmatpush1.bf16.xpose.msra.mxu0 0
        %1922 = vmatprep.subr.bf16.mxu0 0
        %1923 = vmatpush1.bf16.xpose.msra.mxu0 0
        %1924 = vmatprep.subr.bf16.mxu0 0
        %1925 = vmatpush1.bf16.xpose.msra.mxu0 0
        %1926 = vmatprep.subr.bf16.mxu0 0
        %1927 = vmatpush1.bf16.xpose.msra.mxu0 0
        %1928 = vmatprep.subr.bf16.mxu0 0
        %1929 = vmatpush1.bf16.xpose.msra.mxu0 0
        %1930 = vmatprep.subr.bf16.mxu0 0
        %1931 = vmatpush1.bf16.xpose.msra.mxu0 0
        %1932 = vmatprep.subr.bf16.mxu0 0
        %1933 = vmatpush1.bf16.xpose.msra.mxu0 0
        %1934 = vmatprep.subr.bf16.mxu0 0
        %1935 = vmatpush1.bf16.xpose.msra.mxu0 0
        %1936 = vmatprep.subr.bf16.mxu0 0
        %1937 = vmatpush1.bf16.xpose.msra.mxu0 0
        %1938 = vmatprep.subr.bf16.mxu0 0
        %1939 = vmatpush1.bf16.xpose.msra.mxu0 0
        %1940 = vmatprep.subr.bf16.mxu0 0
        %1941 = vmatpush1.bf16.xpose.msra.mxu0 0
        %1942 = vmatprep.subr.bf16.mxu0 0
        %1943 = vmatpush1.bf16.xpose.msra.mxu0 0
        %1944 = vmatprep.subr.bf16.mxu0 0
        %1945 = vmatpush1.bf16.xpose.msra.mxu0 0
        %1946 = vmatprep.subr.bf16.mxu0 0
        %1947 = vmatpush1.bf16.xpose.msra.mxu0 0
        %1948 = vmatprep.mubr.bf16.mxu0 0
        %1949 = vmatmul.mubr.bf16.gmra.mrb[0].mxu0 %v1911
        %v1950 = vpop.f32.mrb[0].mxu0
        %v1951 = vadd.f32 %v1908, %v1950
        %v1952 = vpop.f32.mrb[0].mxu0
        %v1953 = vpop.f32.mrb[0].mxu0
        %v1954 = vadd.f32 %v1909, %v1953
        %v1955 = vpop.f32.mrb[0].mxu0
        %1956 = vdwg.mxu0
        %v1957 = vsel %vm1555, %v1951, -inf
        %1958 = vmax.xlane.f32.xlu0 %v1957
        %v1959 = vpop.xlane.xlu0 %1958
        %v1960 = vsel %vm1555, %v1954, -inf
        %1961 = vmax.xlane.f32.xlu0 %v1960
        %v1962 = vpop.xlane.xlu0 %1961
        %v1963 = vsub.f32 %v1951, %v1959
        %v1964 = vsub.f32 %v1954, %v1962
        %v1965 = vmul.f32 %v1963, 1.442695
        %v1966 = vpow.pop %v1965
        %v1967 = vmul.f32 %v1964, 1.442695
        %v1968 = vpow.pop %v1967
        %v1969 = vsel %vm1555, %v1966, 0.0
        %1970 = vadd.xlane.f32.xlu0 %v1969
        %v1971 = vpop.xlane.xlu0 %1970
        %v1972 = vsel %vm1555, %v1968, 0.0
        %1973 = vadd.xlane.f32.xlu0 %v1972
        %v1974 = vpop.xlane.xlu0 %1973
        %v1975 = vrcp.pop %v1971
        %v1976 = vrcp.pop %v1974
        %v1977 = vmul.f32 %v1966, %v1975
        %v1978 = vmul.f32 %v1968, %v1976
        %v1979 = vpack.c.bf16 %v1978, %v1977
        %v1981 = vsel %vm1555, %v1979, 0
        %1983 = vmatprep.subr.bf16.mxu0 0
        %1984 = vmatpush1.bf16.msra.mxu0 %v1906
        %1985 = vmatprep.subr.bf16.mxu0 0
        %1986 = vmatpush1.bf16.msra.mxu0 0
        %1987 = vmatprep.subr.bf16.mxu0 0
        %1988 = vmatpush1.bf16.msra.mxu0 0
        %1989 = vmatprep.subr.bf16.mxu0 0
        %1990 = vmatpush1.bf16.msra.mxu0 0
        %1991 = vmatprep.subr.bf16.mxu0 0
        %1992 = vmatpush1.bf16.msra.mxu0 0
        %1993 = vmatprep.subr.bf16.mxu0 0
        %1994 = vmatpush1.bf16.msra.mxu0 0
        %1995 = vmatprep.subr.bf16.mxu0 0
        %1996 = vmatpush1.bf16.msra.mxu0 0
        %1997 = vmatprep.subr.bf16.mxu0 0
        %1998 = vmatpush1.bf16.msra.mxu0 0
        %1999 = vmatprep.subr.bf16.mxu0 0
        %2000 = vmatpush1.bf16.msra.mxu0 0
        %2001 = vmatprep.subr.bf16.mxu0 0
        %2002 = vmatpush1.bf16.msra.mxu0 0
        %2003 = vmatprep.subr.bf16.mxu0 0
        %2004 = vmatpush1.bf16.msra.mxu0 0
        %2005 = vmatprep.subr.bf16.mxu0 0
        %2006 = vmatpush1.bf16.msra.mxu0 0
        %2007 = vmatprep.subr.bf16.mxu0 0
        %2008 = vmatpush1.bf16.msra.mxu0 0
        %2009 = vmatprep.subr.bf16.mxu0 0
        %2010 = vmatpush1.bf16.msra.mxu0 0
        %2011 = vmatprep.subr.bf16.mxu0 0
        %2012 = vmatpush1.bf16.msra.mxu0 0
        %2013 = vmatprep.subr.bf16.mxu0 0
        %2014 = vmatpush1.bf16.msra.mxu0 0
        %2015 = vmatprep.mubr.bf16.mxu0 0
        %2016 = vmatmul.mubr.bf16.gmra.mrb[0].mxu0 %v1981
        %v2017 = vpop.f32.mrb[0].mxu0
        %v2018 = vadd.f32 0.0, %v2017
        %v2019 = vpop.f32.mrb[0].mxu0
        %v2020 = vpop.f32.mrb[0].mxu0
        %v2021 = vadd.f32 0.0, %v2020
        %v2022 = vpop.f32.mrb[0].mxu0
        %2023 = vdwg.mxu0
        %v2024 = vpack.c.bf16 %v2021, %v2018
        %v2025 = vld [vmem:[%s537 + $0x40] sm:$0xf]
        %v2026 = vld [vmem:[%s537 + $0x44] sm:$0xf]
        %v2027 = vld [vmem:[%s537 + $0x48] sm:$0xf]
        %v2028 = vld [vmem:[%s537 + $0x4c] sm:$0xf]
        %v2029 = vld [vmem:[%s537 + $0x50] sm:$0xf]
        %v2030 = vld [vmem:[%s537 + $0x54] sm:$0xf]
        %v2031 = vld [vmem:[%s537 + $0x58] sm:$0xf]
        %v2032 = vld [vmem:[%s537 + $0x5c] sm:$0xf]
        %v2041 = vunpack.c.l.b16 %v2025
        %v2042 = vunpack.c.l.b16 %v2026
        %v2043 = vunpack.c.l.b16 %v2027
        %v2044 = vunpack.c.l.b16 %v2028
        %v2045 = vunpack.c.l.b16 %v2029
        %v2046 = vunpack.c.l.b16 %v2030
        %v2047 = vunpack.c.l.b16 %v2031
        %v2048 = vunpack.c.l.b16 %v2032
        %v2049 = vpack.c.b16 %v2042, %v2041
        %v2050 = vpack.c.b16 %v2044, %v2043
        %v2051 = vpack.c.b16 %v2046, %v2045
        %v2052 = vpack.c.b16 %v2048, %v2047
        %v2058 = vsel %vm1507, %v2024, 0
        %2060 = vmatprep.subr.bf16.mxu0 0
        %2061 = vmatpush1.bf16.msra.mxu0 %v2049
        %2062 = vmatprep.subr.bf16.mxu0 0
        %2063 = vmatpush1.bf16.msra.mxu0 %v2050
        %2064 = vmatprep.subr.bf16.mxu0 0
        %2065 = vmatpush1.bf16.msra.mxu0 %v2051
        %2066 = vmatprep.subr.bf16.mxu0 0
        %2067 = vmatpush1.bf16.msra.mxu0 %v2052
        %2068 = vmatprep.subr.bf16.mxu0 0
        %2069 = vmatpush1.bf16.msra.mxu0 0
        %2070 = vmatprep.subr.bf16.mxu0 0
        %2071 = vmatpush1.bf16.msra.mxu0 0
        %2072 = vmatprep.subr.bf16.mxu0 0
        %2073 = vmatpush1.bf16.msra.mxu0 0
        %2074 = vmatprep.subr.bf16.mxu0 0
        %2075 = vmatpush1.bf16.msra.mxu0 0
        %2076 = vmatprep.subr.bf16.mxu0 0
        %2077 = vmatpush1.bf16.msra.mxu0 0
        %2078 = vmatprep.subr.bf16.mxu0 0
        %2079 = vmatpush1.bf16.msra.mxu0 0
        %2080 = vmatprep.subr.bf16.mxu0 0
        %2081 = vmatpush1.bf16.msra.mxu0 0
        %2082 = vmatprep.subr.bf16.mxu0 0
        %2083 = vmatpush1.bf16.msra.mxu0 0
        %2084 = vmatprep.subr.bf16.mxu0 0
        %2085 = vmatpush1.bf16.msra.mxu0 0
        %2086 = vmatprep.subr.bf16.mxu0 0
        %2087 = vmatpush1.bf16.msra.mxu0 0
        %2088 = vmatprep.subr.bf16.mxu0 0
        %2089 = vmatpush1.bf16.msra.mxu0 0
        %2090 = vmatprep.subr.bf16.mxu0 0
        %2091 = vmatpush1.bf16.msra.mxu0 0
        %2092 = vmatprep.mubr.bf16.mxu0 0
        %2093 = vmatmul.mubr.bf16.gmra.mrb[0].mxu0 %v2058
        %v2094 = vpop.f32.mrb[0].mxu0
        %v2095 = vadd.f32 0.0, %v2094
        %v2096 = vpop.f32.mrb[0].mxu0
        %v2097 = vpop.f32.mrb[0].mxu0
        %v2098 = vadd.f32 0.0, %v2097
        %v2099 = vpop.f32.mrb[0].mxu0
        %2100 = vdwg.mxu0
        %v2101 = vadd.f32 %v1898, %v2095
        %v2102 = vadd.f32 %v1901, %v2098
        %s2103 = scalar_lea.vmem [#allocation6], 48
        %v2104 = vld [vmem:[%s2103] sm:$0xff]
        %v2105 = vld [vmem:[%s2103 + $0x8] sm:$0xff]
        %2107 = vrot.lane.b32.xlu0 %v1904, 64
        %v2108 = vpop.permute.xlu0 %2107
        %2110 = vrot.lane.b32.xlu0 %v1905, 64
        %v2111 = vpop.permute.xlu0 %2110
        %v2113 = vsel %vm1507, %v2108, 0
        %v2116 = vsel %vm1507, %v2111, 0
        %2118 = vmatprep.subr.bf16.mxu0 0
        %2119 = vmatpush1.bf16.xpose.msra.mxu0 %v2116
        %2120 = vmatprep.subr.bf16.mxu0 0
        %2121 = vmatpush1.bf16.xpose.msra.mxu0 0
        %2122 = vmatprep.subr.bf16.mxu0 0
        %2123 = vmatpush1.bf16.xpose.msra.mxu0 0
        %2124 = vmatprep.subr.bf16.mxu0 0
        %2125 = vmatpush1.bf16.xpose.msra.mxu0 0
        %2126 = vmatprep.subr.bf16.mxu0 0
        %2127 = vmatpush1.bf16.xpose.msra.mxu0 0
        %2128 = vmatprep.subr.bf16.mxu0 0
        %2129 = vmatpush1.bf16.xpose.msra.mxu0 0
        %2130 = vmatprep.subr.bf16.mxu0 0
        %2131 = vmatpush1.bf16.xpose.msra.mxu0 0
        %2132 = vmatprep.subr.bf16.mxu0 0
        %2133 = vmatpush1.bf16.xpose.msra.mxu0 0
        %2134 = vmatprep.subr.bf16.mxu0 0
        %2135 = vmatpush1.bf16.xpose.msra.mxu0 0
        %2136 = vmatprep.subr.bf16.mxu0 0
        %2137 = vmatpush1.bf16.xpose.msra.mxu0 0
        %2138 = vmatprep.subr.bf16.mxu0 0
        %2139 = vmatpush1.bf16.xpose.msra.mxu0 0
        %2140 = vmatprep.subr.bf16.mxu0 0
        %2141 = vmatpush1.bf16.xpose.msra.mxu0 0
        %2142 = vmatprep.subr.bf16.mxu0 0
        %2143 = vmatpush1.bf16.xpose.msra.mxu0 0
        %2144 = vmatprep.subr.bf16.mxu0 0
        %2145 = vmatpush1.bf16.xpose.msra.mxu0 0
        %2146 = vmatprep.subr.bf16.mxu0 0
        %2147 = vmatpush1.bf16.xpose.msra.mxu0 0
        %2148 = vmatprep.subr.bf16.mxu0 0
        %2149 = vmatpush1.bf16.xpose.msra.mxu0 0
        %2150 = vmatprep.mubr.bf16.mxu0 0
        %2151 = vmatmul.mubr.bf16.gmra.mrb[0].mxu0 %v2113
        %v2152 = vpop.f32.mrb[0].mxu0
        %v2153 = vadd.f32 %v2104, %v2152
        %v2154 = vpop.f32.mrb[0].mxu0
        %v2155 = vpop.f32.mrb[0].mxu0
        %v2156 = vadd.f32 %v2105, %v2155
        %v2157 = vpop.f32.mrb[0].mxu0
        %2158 = vdwg.mxu0
        %v2159 = vsel %vm1555, %v2153, -inf
        %2160 = vmax.xlane.f32.xlu0 %v2159
        %v2161 = vpop.xlane.xlu0 %2160
        %v2162 = vsel %vm1555, %v2156, -inf
        %2163 = vmax.xlane.f32.xlu0 %v2162
        %v2164 = vpop.xlane.xlu0 %2163
        %v2165 = vsub.f32 %v2153, %v2161
        %v2166 = vsub.f32 %v2156, %v2164
        %v2167 = vmul.f32 %v2165, 1.442695
        %v2168 = vpow.pop %v2167
        %v2169 = vmul.f32 %v2166, 1.442695
        %v2170 = vpow.pop %v2169
        %v2171 = vsel %vm1555, %v2168, 0.0
        %2172 = vadd.xlane.f32.xlu0 %v2171
        %v2173 = vpop.xlane.xlu0 %2172
        %v2174 = vsel %vm1555, %v2170, 0.0
        %2175 = vadd.xlane.f32.xlu0 %v2174
        %v2176 = vpop.xlane.xlu0 %2175
        %v2177 = vrcp.pop %v2173
        %v2178 = vrcp.pop %v2176
        %v2179 = vmul.f32 %v2168, %v2177
        %v2180 = vmul.f32 %v2170, %v2178
        %v2181 = vpack.c.bf16 %v2180, %v2179
        %2183 = vrot.lane.b32.xlu0 %v1906, 64
        %v2184 = vpop.permute.xlu0 %2183
        %v2187 = vsel %vm1555, %v2181, 0
        %2189 = vmatprep.subr.bf16.mxu0 0
        %2190 = vmatpush1.bf16.msra.mxu0 %v2184
        %2191 = vmatprep.subr.bf16.mxu0 0
        %2192 = vmatpush1.bf16.msra.mxu0 0
        %2193 = vmatprep.subr.bf16.mxu0 0
        %2194 = vmatpush1.bf16.msra.mxu0 0
        %2195 = vmatprep.subr.bf16.mxu0 0
        %2196 = vmatpush1.bf16.msra.mxu0 0
        %2197 = vmatprep.subr.bf16.mxu0 0
        %2198 = vmatpush1.bf16.msra.mxu0 0
        %2199 = vmatprep.subr.bf16.mxu0 0
        %2200 = vmatpush1.bf16.msra.mxu0 0
        %2201 = vmatprep.subr.bf16.mxu0 0
        %2202 = vmatpush1.bf16.msra.mxu0 0
        %2203 = vmatprep.subr.bf16.mxu0 0
        %2204 = vmatpush1.bf16.msra.mxu0 0
        %2205 = vmatprep.subr.bf16.mxu0 0
        %2206 = vmatpush1.bf16.msra.mxu0 0
        %2207 = vmatprep.subr.bf16.mxu0 0
        %2208 = vmatpush1.bf16.msra.mxu0 0
        %2209 = vmatprep.subr.bf16.mxu0 0
        %2210 = vmatpush1.bf16.msra.mxu0 0
        %2211 = vmatprep.subr.bf16.mxu0 0
        %2212 = vmatpush1.bf16.msra.mxu0 0
        %2213 = vmatprep.subr.bf16.mxu0 0
        %2214 = vmatpush1.bf16.msra.mxu0 0
        %2215 = vmatprep.subr.bf16.mxu0 0
        %2216 = vmatpush1.bf16.msra.mxu0 0
        %2217 = vmatprep.subr.bf16.mxu0 0
        %2218 = vmatpush1.bf16.msra.mxu0 0
        %2219 = vmatprep.subr.bf16.mxu0 0
        %2220 = vmatpush1.bf16.msra.mxu0 0
        %2221 = vmatprep.mubr.bf16.mxu0 0
        %2222 = vmatmul.mubr.bf16.gmra.mrb[0].mxu0 %v2187
        %v2223 = vpop.f32.mrb[0].mxu0
        %v2224 = vadd.f32 0.0, %v2223
        %v2225 = vpop.f32.mrb[0].mxu0
        %v2226 = vpop.f32.mrb[0].mxu0
        %v2227 = vadd.f32 0.0, %v2226
        %v2228 = vpop.f32.mrb[0].mxu0
        %2229 = vdwg.mxu0
        %v2230 = vpack.c.bf16 %v2227, %v2224
        %v2231 = vld [vmem:[%s537 + $0x60] sm:$0xf]
        %v2232 = vld [vmem:[%s537 + $0x64] sm:$0xf]
        %v2233 = vld [vmem:[%s537 + $0x68] sm:$0xf]
        %v2234 = vld [vmem:[%s537 + $0x6c] sm:$0xf]
        %v2235 = vld [vmem:[%s537 + $0x70] sm:$0xf]
        %v2236 = vld [vmem:[%s537 + $0x74] sm:$0xf]
        %v2237 = vld [vmem:[%s537 + $0x78] sm:$0xf]
        %v2238 = vld [vmem:[%s537 + $0x7c] sm:$0xf]
        %v2247 = vunpack.c.l.b16 %v2231
        %v2248 = vunpack.c.l.b16 %v2232
        %v2249 = vunpack.c.l.b16 %v2233
        %v2250 = vunpack.c.l.b16 %v2234
        %v2251 = vunpack.c.l.b16 %v2235
        %v2252 = vunpack.c.l.b16 %v2236
        %v2253 = vunpack.c.l.b16 %v2237
        %v2254 = vunpack.c.l.b16 %v2238
        %v2255 = vpack.c.b16 %v2248, %v2247
        %v2256 = vpack.c.b16 %v2250, %v2249
        %v2257 = vpack.c.b16 %v2252, %v2251
        %v2258 = vpack.c.b16 %v2254, %v2253
        %v2264 = vsel %vm1507, %v2230, 0
        %2266 = vmatprep.subr.bf16.mxu0 0
        %2267 = vmatpush1.bf16.msra.mxu0 %v2255
        %2268 = vmatprep.subr.bf16.mxu0 0
        %2269 = vmatpush1.bf16.msra.mxu0 %v2256
        %2270 = vmatprep.subr.bf16.mxu0 0
        %2271 = vmatpush1.bf16.msra.mxu0 %v2257
        %2272 = vmatprep.subr.bf16.mxu0 0
        %2273 = vmatpush1.bf16.msra.mxu0 %v2258
        %2274 = vmatprep.subr.bf16.mxu0 0
        %2275 = vmatpush1.bf16.msra.mxu0 0
        %2276 = vmatprep.subr.bf16.mxu0 0
        %2277 = vmatpush1.bf16.msra.mxu0 0
        %2278 = vmatprep.subr.bf16.mxu0 0
        %2279 = vmatpush1.bf16.msra.mxu0 0
        %2280 = vmatprep.subr.bf16.mxu0 0
        %2281 = vmatpush1.bf16.msra.mxu0 0
        %2282 = vmatprep.subr.bf16.mxu0 0
        %2283 = vmatpush1.bf16.msra.mxu0 0
        %2284 = vmatprep.subr.bf16.mxu0 0
        %2285 = vmatpush1.bf16.msra.mxu0 0
        %2286 = vmatprep.subr.bf16.mxu0 0
        %2287 = vmatpush1.bf16.msra.mxu0 0
        %2288 = vmatprep.subr.bf16.mxu0 0
        %2289 = vmatpush1.bf16.msra.mxu0 0
        %2290 = vmatprep.subr.bf16.mxu0 0
        %2291 = vmatpush1.bf16.msra.mxu0 0
        %2292 = vmatprep.subr.bf16.mxu0 0
        %2293 = vmatpush1.bf16.msra.mxu0 0
        %2294 = vmatprep.subr.bf16.mxu0 0
        %2295 = vmatpush1.bf16.msra.mxu0 0
        %2296 = vmatprep.subr.bf16.mxu0 0
        %2297 = vmatpush1.bf16.msra.mxu0 0
        %2298 = vmatprep.mubr.bf16.mxu0 0
        %2299 = vmatmul.mubr.bf16.gmra.mrb[0].mxu0 %v2264
        %v2300 = vpop.f32.mrb[0].mxu0
        %v2301 = vadd.f32 0.0, %v2300
        %v2302 = vpop.f32.mrb[0].mxu0
        %v2303 = vpop.f32.mrb[0].mxu0
        %v2304 = vadd.f32 0.0, %v2303
        %v2305 = vpop.f32.mrb[0].mxu0
        %2306 = vdwg.mxu0
        %v2307 = vadd.f32 %v2101, %v2301
        %v2308 = vadd.f32 %v2102, %v2304
        %v2309 = vpack.c.bf16 %v1326, %v1322
        %v2310 = vpack.c.bf16 %v1412, %v1408
        %v2311 = vpack.c.bf16 %v1498, %v1494
        %s2312 = scalar_lea.vmem [#allocation6], 64
        %v2313 = vld [vmem:[%s2312] sm:$0xff]
        %v2314 = vld [vmem:[%s2312 + $0x8] sm:$0xff]
        %v2316 = vsel %vm1507, %v2309, 0
        %v2319 = vsel %vm1507, %v2310, 0
        %2321 = vmatprep.subr.bf16.mxu0 0
        %2322 = vmatpush1.bf16.xpose.msra.mxu0 %v2319
        %2323 = vmatprep.subr.bf16.mxu0 0
        %2324 = vmatpush1.bf16.xpose.msra.mxu0 0
        %2325 = vmatprep.subr.bf16.mxu0 0
        %2326 = vmatpush1.bf16.xpose.msra.mxu0 0
        %2327 = vmatprep.subr.bf16.mxu0 0
        %2328 = vmatpush1.bf16.xpose.msra.mxu0 0
        %2329 = vmatprep.subr.bf16.mxu0 0
        %2330 = vmatpush1.bf16.xpose.msra.mxu0 0
        %2331 = vmatprep.subr.bf16.mxu0 0
        %2332 = vmatpush1.bf16.xpose.msra.mxu0 0
        %2333 = vmatprep.subr.bf16.mxu0 0
        %2334 = vmatpush1.bf16.xpose.msra.mxu0 0
        %2335 = vmatprep.subr.bf16.mxu0 0
        %2336 = vmatpush1.bf16.xpose.msra.mxu0 0
        %2337 = vmatprep.subr.bf16.mxu0 0
        %2338 = vmatpush1.bf16.xpose.msra.mxu0 0
        %2339 = vmatprep.subr.bf16.mxu0 0
        %2340 = vmatpush1.bf16.xpose.msra.mxu0 0
        %2341 = vmatprep.subr.bf16.mxu0 0
        %2342 = vmatpush1.bf16.xpose.msra.mxu0 0
        %2343 = vmatprep.subr.bf16.mxu0 0
        %2344 = vmatpush1.bf16.xpose.msra.mxu0 0
        %2345 = vmatprep.subr.bf16.mxu0 0
        %2346 = vmatpush1.bf16.xpose.msra.mxu0 0
        %2347 = vmatprep.subr.bf16.mxu0 0
        %2348 = vmatpush1.bf16.xpose.msra.mxu0 0
        %2349 = vmatprep.subr.bf16.mxu0 0
        %2350 = vmatpush1.bf16.xpose.msra.mxu0 0
        %2351 = vmatprep.subr.bf16.mxu0 0
        %2352 = vmatpush1.bf16.xpose.msra.mxu0 0
        %2353 = vmatprep.mubr.bf16.mxu0 0
        %2354 = vmatmul.mubr.bf16.gmra.mrb[0].mxu0 %v2316
        %v2355 = vpop.f32.mrb[0].mxu0
        %v2356 = vadd.f32 %v2313, %v2355
        %v2357 = vpop.f32.mrb[0].mxu0
        %v2358 = vpop.f32.mrb[0].mxu0
        %v2359 = vadd.f32 %v2314, %v2358
        %v2360 = vpop.f32.mrb[0].mxu0
        %2361 = vdwg.mxu0
        %v2362 = vsel %vm1555, %v2356, -inf
        %2363 = vmax.xlane.f32.xlu0 %v2362
        %v2364 = vpop.xlane.xlu0 %2363
        %v2365 = vsel %vm1555, %v2359, -inf
        %2366 = vmax.xlane.f32.xlu0 %v2365
        %v2367 = vpop.xlane.xlu0 %2366
        %v2368 = vsub.f32 %v2356, %v2364
        %v2369 = vsub.f32 %v2359, %v2367
        %v2370 = vmul.f32 %v2368, 1.442695
        %v2371 = vpow.pop %v2370
        %v2372 = vmul.f32 %v2369, 1.442695
        %v2373 = vpow.pop %v2372
        %v2374 = vsel %vm1555, %v2371, 0.0
        %2375 = vadd.xlane.f32.xlu0 %v2374
        %v2376 = vpop.xlane.xlu0 %2375
        %v2377 = vsel %vm1555, %v2373, 0.0
        %2378 = vadd.xlane.f32.xlu0 %v2377
        %v2379 = vpop.xlane.xlu0 %2378
        %v2380 = vrcp.pop %v2376
        %v2381 = vrcp.pop %v2379
        %v2382 = vmul.f32 %v2371, %v2380
        %v2383 = vmul.f32 %v2373, %v2381
        %v2384 = vpack.c.bf16 %v2383, %v2382
        %v2386 = vsel %vm1555, %v2384, 0
        %2388 = vmatprep.subr.bf16.mxu0 0
        %2389 = vmatpush1.bf16.msra.mxu0 %v2311
        %2390 = vmatprep.subr.bf16.mxu0 0
        %2391 = vmatpush1.bf16.msra.mxu0 0
        %2392 = vmatprep.subr.bf16.mxu0 0
        %2393 = vmatpush1.bf16.msra.mxu0 0
        %2394 = vmatprep.subr.bf16.mxu0 0
        %2395 = vmatpush1.bf16.msra.mxu0 0
        %2396 = vmatprep.subr.bf16.mxu0 0
        %2397 = vmatpush1.bf16.msra.mxu0 0
        %2398 = vmatprep.subr.bf16.mxu0 0
        %2399 = vmatpush1.bf16.msra.mxu0 0
        %2400 = vmatprep.subr.bf16.mxu0 0
        %2401 = vmatpush1.bf16.msra.mxu0 0
        %2402 = vmatprep.subr.bf16.mxu0 0
        %2403 = vmatpush1.bf16.msra.mxu0 0
        %2404 = vmatprep.subr.bf16.mxu0 0
        %2405 = vmatpush1.bf16.msra.mxu0 0
        %2406 = vmatprep.subr.bf16.mxu0 0
        %2407 = vmatpush1.bf16.msra.mxu0 0
        %2408 = vmatprep.subr.bf16.mxu0 0
        %2409 = vmatpush1.bf16.msra.mxu0 0
        %2410 = vmatprep.subr.bf16.mxu0 0
        %2411 = vmatpush1.bf16.msra.mxu0 0
        %2412 = vmatprep.subr.bf16.mxu0 0
        %2413 = vmatpush1.bf16.msra.mxu0 0
        %2414 = vmatprep.subr.bf16.mxu0 0
        %2415 = vmatpush1.bf16.msra.mxu0 0
        %2416 = vmatprep.subr.bf16.mxu0 0
        %2417 = vmatpush1.bf16.msra.mxu0 0
        %2418 = vmatprep.subr.bf16.mxu0 0
        %2419 = vmatpush1.bf16.msra.mxu0 0
        %2420 = vmatprep.mubr.bf16.mxu0 0
        %2421 = vmatmul.mubr.bf16.gmra.mrb[0].mxu0 %v2386
        %v2422 = vpop.f32.mrb[0].mxu0
        %v2423 = vadd.f32 0.0, %v2422
        %v2424 = vpop.f32.mrb[0].mxu0
        %v2425 = vpop.f32.mrb[0].mxu0
        %v2426 = vadd.f32 0.0, %v2425
        %v2427 = vpop.f32.mrb[0].mxu0
        %2428 = vdwg.mxu0
        %v2429 = vpack.c.bf16 %v2426, %v2423
        %v2430 = vld [vmem:[%s537 + $0x80] sm:$0xf]
        %v2431 = vld [vmem:[%s537 + $0x84] sm:$0xf]
        %v2432 = vld [vmem:[%s537 + $0x88] sm:$0xf]
        %v2433 = vld [vmem:[%s537 + $0x8c] sm:$0xf]
        %v2434 = vld [vmem:[%s537 + $0x90] sm:$0xf]
        %v2435 = vld [vmem:[%s537 + $0x94] sm:$0xf]
        %v2436 = vld [vmem:[%s537 + $0x98] sm:$0xf]
        %v2437 = vld [vmem:[%s537 + $0x9c] sm:$0xf]
        %v2446 = vunpack.c.l.b16 %v2430
        %v2447 = vunpack.c.l.b16 %v2431
        %v2448 = vunpack.c.l.b16 %v2432
        %v2449 = vunpack.c.l.b16 %v2433
        %v2450 = vunpack.c.l.b16 %v2434
        %v2451 = vunpack.c.l.b16 %v2435
        %v2452 = vunpack.c.l.b16 %v2436
        %v2453 = vunpack.c.l.b16 %v2437
        %v2454 = vpack.c.b16 %v2447, %v2446
        %v2455 = vpack.c.b16 %v2449, %v2448
        %v2456 = vpack.c.b16 %v2451, %v2450
        %v2457 = vpack.c.b16 %v2453, %v2452
        %v2463 = vsel %vm1507, %v2429, 0
        %2465 = vmatprep.subr.bf16.mxu0 0
        %2466 = vmatpush1.bf16.msra.mxu0 %v2454
        %2467 = vmatprep.subr.bf16.mxu0 0
        %2468 = vmatpush1.bf16.msra.mxu0 %v2455
        %2469 = vmatprep.subr.bf16.mxu0 0
        %2470 = vmatpush1.bf16.msra.mxu0 %v2456
        %2471 = vmatprep.subr.bf16.mxu0 0
        %2472 = vmatpush1.bf16.msra.mxu0 %v2457
        %2473 = vmatprep.subr.bf16.mxu0 0
        %2474 = vmatpush1.bf16.msra.mxu0 0
        %2475 = vmatprep.subr.bf16.mxu0 0
        %2476 = vmatpush1.bf16.msra.mxu0 0
        %2477 = vmatprep.subr.bf16.mxu0 0
        %2478 = vmatpush1.bf16.msra.mxu0 0
        %2479 = vmatprep.subr.bf16.mxu0 0
        %2480 = vmatpush1.bf16.msra.mxu0 0
        %2481 = vmatprep.subr.bf16.mxu0 0
        %2482 = vmatpush1.bf16.msra.mxu0 0
        %2483 = vmatprep.subr.bf16.mxu0 0
        %2484 = vmatpush1.bf16.msra.mxu0 0
        %2485 = vmatprep.subr.bf16.mxu0 0
        %2486 = vmatpush1.bf16.msra.mxu0 0
        %2487 = vmatprep.subr.bf16.mxu0 0
        %2488 = vmatpush1.bf16.msra.mxu0 0
        %2489 = vmatprep.subr.bf16.mxu0 0
        %2490 = vmatpush1.bf16.msra.mxu0 0
        %2491 = vmatprep.subr.bf16.mxu0 0
        %2492 = vmatpush1.bf16.msra.mxu0 0
        %2493 = vmatprep.subr.bf16.mxu0 0
        %2494 = vmatpush1.bf16.msra.mxu0 0
        %2495 = vmatprep.subr.bf16.mxu0 0
        %2496 = vmatpush1.bf16.msra.mxu0 0
        %2497 = vmatprep.mubr.bf16.mxu0 0
        %2498 = vmatmul.mubr.bf16.gmra.mrb[0].mxu0 %v2463
        %v2499 = vpop.f32.mrb[0].mxu0
        %v2500 = vadd.f32 0.0, %v2499
        %v2501 = vpop.f32.mrb[0].mxu0
        %v2502 = vpop.f32.mrb[0].mxu0
        %v2503 = vadd.f32 0.0, %v2502
        %v2504 = vpop.f32.mrb[0].mxu0
        %2505 = vdwg.mxu0
        %v2506 = vadd.f32 %v2307, %v2500
        %v2507 = vadd.f32 %v2308, %v2503
        %s2508 = scalar_lea.vmem [#allocation6], 80
        %v2509 = vld [vmem:[%s2508] sm:$0xff]
        %v2510 = vld [vmem:[%s2508 + $0x8] sm:$0xff]
        %2512 = vrot.lane.b32.xlu0 %v2309, 64
        %v2513 = vpop.permute.xlu0 %2512
        %2515 = vrot.lane.b32.xlu0 %v2310, 64
        %v2516 = vpop.permute.xlu0 %2515
        %v2518 = vsel %vm1507, %v2513, 0
        %v2521 = vsel %vm1507, %v2516, 0
        %2523 = vmatprep.subr.bf16.mxu0 0
        %2524 = vmatpush1.bf16.xpose.msra.mxu0 %v2521
        %2525 = vmatprep.subr.bf16.mxu0 0
        %2526 = vmatpush1.bf16.xpose.msra.mxu0 0
        %2527 = vmatprep.subr.bf16.mxu0 0
        %2528 = vmatpush1.bf16.xpose.msra.mxu0 0
        %2529 = vmatprep.subr.bf16.mxu0 0
        %2530 = vmatpush1.bf16.xpose.msra.mxu0 0
        %2531 = vmatprep.subr.bf16.mxu0 0
        %2532 = vmatpush1.bf16.xpose.msra.mxu0 0
        %2533 = vmatprep.subr.bf16.mxu0 0
        %2534 = vmatpush1.bf16.xpose.msra.mxu0 0
        %2535 = vmatprep.subr.bf16.mxu0 0
        %2536 = vmatpush1.bf16.xpose.msra.mxu0 0
        %2537 = vmatprep.subr.bf16.mxu0 0
        %2538 = vmatpush1.bf16.xpose.msra.mxu0 0
        %2539 = vmatprep.subr.bf16.mxu0 0
        %2540 = vmatpush1.bf16.xpose.msra.mxu0 0
        %2541 = vmatprep.subr.bf16.mxu0 0
        %2542 = vmatpush1.bf16.xpose.msra.mxu0 0
        %2543 = vmatprep.subr.bf16.mxu0 0
        %2544 = vmatpush1.bf16.xpose.msra.mxu0 0
        %2545 = vmatprep.subr.bf16.mxu0 0
        %2546 = vmatpush1.bf16.xpose.msra.mxu0 0
        %2547 = vmatprep.subr.bf16.mxu0 0
        %2548 = vmatpush1.bf16.xpose.msra.mxu0 0
        %2549 = vmatprep.subr.bf16.mxu0 0
        %2550 = vmatpush1.bf16.xpose.msra.mxu0 0
        %2551 = vmatprep.subr.bf16.mxu0 0
        %2552 = vmatpush1.bf16.xpose.msra.mxu0 0
        %2553 = vmatprep.subr.bf16.mxu0 0
        %2554 = vmatpush1.bf16.xpose.msra.mxu0 0
        %2555 = vmatprep.mubr.bf16.mxu0 0
        %2556 = vmatmul.mubr.bf16.gmra.mrb[0].mxu0 %v2518
        %v2557 = vpop.f32.mrb[0].mxu0
        %v2558 = vadd.f32 %v2509, %v2557
        %v2559 = vpop.f32.mrb[0].mxu0
        %v2560 = vpop.f32.mrb[0].mxu0
        %v2561 = vadd.f32 %v2510, %v2560
        %v2562 = vpop.f32.mrb[0].mxu0
        %2563 = vdwg.mxu0
        %v2564 = vsel %vm1555, %v2558, -inf
        %2565 = vmax.xlane.f32.xlu0 %v2564
        %v2566 = vpop.xlane.xlu0 %2565
        %v2567 = vsel %vm1555, %v2561, -inf
        %2568 = vmax.xlane.f32.xlu0 %v2567
        %v2569 = vpop.xlane.xlu0 %2568
        %v2570 = vsub.f32 %v2558, %v2566
        %v2571 = vsub.f32 %v2561, %v2569
        %v2572 = vmul.f32 %v2570, 1.442695
        %v2573 = vpow.pop %v2572
        %v2574 = vmul.f32 %v2571, 1.442695
        %v2575 = vpow.pop %v2574
        %v2576 = vsel %vm1555, %v2573, 0.0
        %2577 = vadd.xlane.f32.xlu0 %v2576
        %v2578 = vpop.xlane.xlu0 %2577
        %v2579 = vsel %vm1555, %v2575, 0.0
        %2580 = vadd.xlane.f32.xlu0 %v2579
        %v2581 = vpop.xlane.xlu0 %2580
        %v2582 = vrcp.pop %v2578
        %v2583 = vrcp.pop %v2581
        %v2584 = vmul.f32 %v2573, %v2582
        %v2585 = vmul.f32 %v2575, %v2583
        %v2586 = vpack.c.bf16 %v2585, %v2584
        %2588 = vrot.lane.b32.xlu0 %v2311, 64
        %v2589 = vpop.permute.xlu0 %2588
        %v2592 = vsel %vm1555, %v2586, 0
        %2594 = vmatprep.subr.bf16.mxu0 0
        %2595 = vmatpush1.bf16.msra.mxu0 %v2589
        %2596 = vmatprep.subr.bf16.mxu0 0
        %2597 = vmatpush1.bf16.msra.mxu0 0
        %2598 = vmatprep.subr.bf16.mxu0 0
        %2599 = vmatpush1.bf16.msra.mxu0 0
        %2600 = vmatprep.subr.bf16.mxu0 0
        %2601 = vmatpush1.bf16.msra.mxu0 0
        %2602 = vmatprep.subr.bf16.mxu0 0
        %2603 = vmatpush1.bf16.msra.mxu0 0
        %2604 = vmatprep.subr.bf16.mxu0 0
        %2605 = vmatpush1.bf16.msra.mxu0 0
        %2606 = vmatprep.subr.bf16.mxu0 0
        %2607 = vmatpush1.bf16.msra.mxu0 0
        %2608 = vmatprep.subr.bf16.mxu0 0
        %2609 = vmatpush1.bf16.msra.mxu0 0
        %2610 = vmatprep.subr.bf16.mxu0 0
        %2611 = vmatpush1.bf16.msra.mxu0 0
        %2612 = vmatprep.subr.bf16.mxu0 0
        %2613 = vmatpush1.bf16.msra.mxu0 0
        %2614 = vmatprep.subr.bf16.mxu0 0
        %2615 = vmatpush1.bf16.msra.mxu0 0
        %2616 = vmatprep.subr.bf16.mxu0 0
        %2617 = vmatpush1.bf16.msra.mxu0 0
        %2618 = vmatprep.subr.bf16.mxu0 0
        %2619 = vmatpush1.bf16.msra.mxu0 0
        %2620 = vmatprep.subr.bf16.mxu0 0
        %2621 = vmatpush1.bf16.msra.mxu0 0
        %2622 = vmatprep.subr.bf16.mxu0 0
        %2623 = vmatpush1.bf16.msra.mxu0 0
        %2624 = vmatprep.subr.bf16.mxu0 0
        %2625 = vmatpush1.bf16.msra.mxu0 0
        %2626 = vmatprep.mubr.bf16.mxu0 0
        %2627 = vmatmul.mubr.bf16.gmra.mrb[0].mxu0 %v2592
        %v2628 = vpop.f32.mrb[0].mxu0
        %v2629 = vadd.f32 0.0, %v2628
        %v2630 = vpop.f32.mrb[0].mxu0
        %v2631 = vpop.f32.mrb[0].mxu0
        %v2632 = vadd.f32 0.0, %v2631
        %v2633 = vpop.f32.mrb[0].mxu0
        %2634 = vdwg.mxu0
        %v2635 = vpack.c.bf16 %v2632, %v2629
        %v2636 = vld [vmem:[%s537 + $0xa0] sm:$0xf]
        %v2637 = vld [vmem:[%s537 + $0xa4] sm:$0xf]
        %v2638 = vld [vmem:[%s537 + $0xa8] sm:$0xf]
        %v2639 = vld [vmem:[%s537 + $0xac] sm:$0xf]
        %v2640 = vld [vmem:[%s537 + $0xb0] sm:$0xf]
        %v2641 = vld [vmem:[%s537 + $0xb4] sm:$0xf]
        %v2642 = vld [vmem:[%s537 + $0xb8] sm:$0xf]
        %v2643 = vld [vmem:[%s537 + $0xbc] sm:$0xf]
        %v2652 = vunpack.c.l.b16 %v2636
        %v2653 = vunpack.c.l.b16 %v2637
        %v2654 = vunpack.c.l.b16 %v2638
        %v2655 = vunpack.c.l.b16 %v2639
        %v2656 = vunpack.c.l.b16 %v2640
        %v2657 = vunpack.c.l.b16 %v2641
        %v2658 = vunpack.c.l.b16 %v2642
        %v2659 = vunpack.c.l.b16 %v2643
        %v2660 = vpack.c.b16 %v2653, %v2652
        %v2661 = vpack.c.b16 %v2655, %v2654
        %v2662 = vpack.c.b16 %v2657, %v2656
        %v2663 = vpack.c.b16 %v2659, %v2658
        %v2669 = vsel %vm1507, %v2635, 0
        %2671 = vmatprep.subr.bf16.mxu0 0
        %2672 = vmatpush1.bf16.msra.mxu0 %v2660
        %2673 = vmatprep.subr.bf16.mxu0 0
        %2674 = vmatpush1.bf16.msra.mxu0 %v2661
        %2675 = vmatprep.subr.bf16.mxu0 0
        %2676 = vmatpush1.bf16.msra.mxu0 %v2662
        %2677 = vmatprep.subr.bf16.mxu0 0
        %2678 = vmatpush1.bf16.msra.mxu0 %v2663
        %2679 = vmatprep.subr.bf16.mxu0 0
        %2680 = vmatpush1.bf16.msra.mxu0 0
        %2681 = vmatprep.subr.bf16.mxu0 0
        %2682 = vmatpush1.bf16.msra.mxu0 0
        %2683 = vmatprep.subr.bf16.mxu0 0
        %2684 = vmatpush1.bf16.msra.mxu0 0
        %2685 = vmatprep.subr.bf16.mxu0 0
        %2686 = vmatpush1.bf16.msra.mxu0 0
        %2687 = vmatprep.subr.bf16.mxu0 0
        %2688 = vmatpush1.bf16.msra.mxu0 0
        %2689 = vmatprep.subr.bf16.mxu0 0
        %2690 = vmatpush1.bf16.msra.mxu0 0
        %2691 = vmatprep.subr.bf16.mxu0 0
        %2692 = vmatpush1.bf16.msra.mxu0 0
        %2693 = vmatprep.subr.bf16.mxu0 0
        %2694 = vmatpush1.bf16.msra.mxu0 0
        %2695 = vmatprep.subr.bf16.mxu0 0
        %2696 = vmatpush1.bf16.msra.mxu0 0
        %2697 = vmatprep.subr.bf16.mxu0 0
        %2698 = vmatpush1.bf16.msra.mxu0 0
        %2699 = vmatprep.subr.bf16.mxu0 0
        %2700 = vmatpush1.bf16.msra.mxu0 0
        %2701 = vmatprep.subr.bf16.mxu0 0
        %2702 = vmatpush1.bf16.msra.mxu0 0
        %2703 = vmatprep.mubr.bf16.mxu0 0
        %2704 = vmatmul.mubr.bf16.gmra.mrb[0].mxu0 %v2669
        %v2705 = vpop.f32.mrb[0].mxu0
        %v2706 = vadd.f32 0.0, %v2705
        %v2707 = vpop.f32.mrb[0].mxu0
        %v2708 = vpop.f32.mrb[0].mxu0
        %v2709 = vadd.f32 0.0, %v2708
        %v2710 = vpop.f32.mrb[0].mxu0
        %2711 = vdwg.mxu0
        %v2712 = vadd.f32 %v2506, %v2706
        %v2713 = vadd.f32 %v2507, %v2709
        %v2714 = vpack.c.bf16 %v1328, %v1324
        %v2715 = vpack.c.bf16 %v1414, %v1410
        %v2716 = vpack.c.bf16 %v1500, %v1496
        %s2717 = scalar_lea.vmem [#allocation6], 96
        %v2718 = vld [vmem:[%s2717] sm:$0xff]
        %v2719 = vld [vmem:[%s2717 + $0x8] sm:$0xff]
        %v2721 = vsel %vm1507, %v2714, 0
        %v2724 = vsel %vm1507, %v2715, 0
        %2726 = vmatprep.subr.bf16.mxu0 0
        %2727 = vmatpush1.bf16.xpose.msra.mxu0 %v2724
        %2728 = vmatprep.subr.bf16.mxu0 0
        %2729 = vmatpush1.bf16.xpose.msra.mxu0 0
        %2730 = vmatprep.subr.bf16.mxu0 0
        %2731 = vmatpush1.bf16.xpose.msra.mxu0 0
        %2732 = vmatprep.subr.bf16.mxu0 0
        %2733 = vmatpush1.bf16.xpose.msra.mxu0 0
        %2734 = vmatprep.subr.bf16.mxu0 0
        %2735 = vmatpush1.bf16.xpose.msra.mxu0 0
        %2736 = vmatprep.subr.bf16.mxu0 0
        %2737 = vmatpush1.bf16.xpose.msra.mxu0 0
        %2738 = vmatprep.subr.bf16.mxu0 0
        %2739 = vmatpush1.bf16.xpose.msra.mxu0 0
        %2740 = vmatprep.subr.bf16.mxu0 0
        %2741 = vmatpush1.bf16.xpose.msra.mxu0 0
        %2742 = vmatprep.subr.bf16.mxu0 0
        %2743 = vmatpush1.bf16.xpose.msra.mxu0 0
        %2744 = vmatprep.subr.bf16.mxu0 0
        %2745 = vmatpush1.bf16.xpose.msra.mxu0 0
        %2746 = vmatprep.subr.bf16.mxu0 0
        %2747 = vmatpush1.bf16.xpose.msra.mxu0 0
        %2748 = vmatprep.subr.bf16.mxu0 0
        %2749 = vmatpush1.bf16.xpose.msra.mxu0 0
        %2750 = vmatprep.subr.bf16.mxu0 0
        %2751 = vmatpush1.bf16.xpose.msra.mxu0 0
        %2752 = vmatprep.subr.bf16.mxu0 0
        %2753 = vmatpush1.bf16.xpose.msra.mxu0 0
        %2754 = vmatprep.subr.bf16.mxu0 0
        %2755 = vmatpush1.bf16.xpose.msra.mxu0 0
        %2756 = vmatprep.subr.bf16.mxu0 0
        %2757 = vmatpush1.bf16.xpose.msra.mxu0 0
        %2758 = vmatprep.mubr.bf16.mxu0 0
        %2759 = vmatmul.mubr.bf16.gmra.mrb[0].mxu0 %v2721
        %v2760 = vpop.f32.mrb[0].mxu0
        %v2761 = vadd.f32 %v2718, %v2760
        %v2762 = vpop.f32.mrb[0].mxu0
        %v2763 = vpop.f32.mrb[0].mxu0
        %v2764 = vadd.f32 %v2719, %v2763
        %v2765 = vpop.f32.mrb[0].mxu0
        %2766 = vdwg.mxu0
        %v2767 = vsel %vm1555, %v2761, -inf
        %2768 = vmax.xlane.f32.xlu0 %v2767
        %v2769 = vpop.xlane.xlu0 %2768
        %v2770 = vsel %vm1555, %v2764, -inf
        %2771 = vmax.xlane.f32.xlu0 %v2770
        %v2772 = vpop.xlane.xlu0 %2771
        %v2773 = vsub.f32 %v2761, %v2769
        %v2774 = vsub.f32 %v2764, %v2772
        %v2775 = vmul.f32 %v2773, 1.442695
        %v2776 = vpow.pop %v2775
        %v2777 = vmul.f32 %v2774, 1.442695
        %v2778 = vpow.pop %v2777
        %v2779 = vsel %vm1555, %v2776, 0.0
        %2780 = vadd.xlane.f32.xlu0 %v2779
        %v2781 = vpop.xlane.xlu0 %2780
        %v2782 = vsel %vm1555, %v2778, 0.0
        %2783 = vadd.xlane.f32.xlu0 %v2782
        %v2784 = vpop.xlane.xlu0 %2783
        %v2785 = vrcp.pop %v2781
        %v2786 = vrcp.pop %v2784
        %v2787 = vmul.f32 %v2776, %v2785
        %v2788 = vmul.f32 %v2778, %v2786
        %v2789 = vpack.c.bf16 %v2788, %v2787
        %v2791 = vsel %vm1555, %v2789, 0
        %2793 = vmatprep.subr.bf16.mxu0 0
        %2794 = vmatpush1.bf16.msra.mxu0 %v2716
        %2795 = vmatprep.subr.bf16.mxu0 0
        %2796 = vmatpush1.bf16.msra.mxu0 0
        %2797 = vmatprep.subr.bf16.mxu0 0
        %2798 = vmatpush1.bf16.msra.mxu0 0
        %2799 = vmatprep.subr.bf16.mxu0 0
        %2800 = vmatpush1.bf16.msra.mxu0 0
        %2801 = vmatprep.subr.bf16.mxu0 0
        %2802 = vmatpush1.bf16.msra.mxu0 0
        %2803 = vmatprep.subr.bf16.mxu0 0
        %2804 = vmatpush1.bf16.msra.mxu0 0
        %2805 = vmatprep.subr.bf16.mxu0 0
        %2806 = vmatpush1.bf16.msra.mxu0 0
        %2807 = vmatprep.subr.bf16.mxu0 0
        %2808 = vmatpush1.bf16.msra.mxu0 0
        %2809 = vmatprep.subr.bf16.mxu0 0
        %2810 = vmatpush1.bf16.msra.mxu0 0
        %2811 = vmatprep.subr.bf16.mxu0 0
        %2812 = vmatpush1.bf16.msra.mxu0 0
        %2813 = vmatprep.subr.bf16.mxu0 0
        %2814 = vmatpush1.bf16.msra.mxu0 0
        %2815 = vmatprep.subr.bf16.mxu0 0
        %2816 = vmatpush1.bf16.msra.mxu0 0
        %2817 = vmatprep.subr.bf16.mxu0 0
        %2818 = vmatpush1.bf16.msra.mxu0 0
        %2819 = vmatprep.subr.bf16.mxu0 0
        %2820 = vmatpush1.bf16.msra.mxu0 0
        %2821 = vmatprep.subr.bf16.mxu0 0
        %2822 = vmatpush1.bf16.msra.mxu0 0
        %2823 = vmatprep.subr.bf16.mxu0 0
        %2824 = vmatpush1.bf16.msra.mxu0 0
        %2825 = vmatprep.mubr.bf16.mxu0 0
        %2826 = vmatmul.mubr.bf16.gmra.mrb[0].mxu0 %v2791
        %v2827 = vpop.f32.mrb[0].mxu0
        %v2828 = vadd.f32 0.0, %v2827
        %v2829 = vpop.f32.mrb[0].mxu0
        %v2830 = vpop.f32.mrb[0].mxu0
        %v2831 = vadd.f32 0.0, %v2830
        %v2832 = vpop.f32.mrb[0].mxu0
        %2833 = vdwg.mxu0
        %v2834 = vpack.c.bf16 %v2831, %v2828
        %v2835 = vld [vmem:[%s537 + $0xc0] sm:$0xf]
        %v2836 = vld [vmem:[%s537 + $0xc4] sm:$0xf]
        %v2837 = vld [vmem:[%s537 + $0xc8] sm:$0xf]
        %v2838 = vld [vmem:[%s537 + $0xcc] sm:$0xf]
        %v2839 = vld [vmem:[%s537 + $0xd0] sm:$0xf]
        %v2840 = vld [vmem:[%s537 + $0xd4] sm:$0xf]
        %v2841 = vld [vmem:[%s537 + $0xd8] sm:$0xf]
        %v2842 = vld [vmem:[%s537 + $0xdc] sm:$0xf]
        %v2851 = vunpack.c.l.b16 %v2835
        %v2852 = vunpack.c.l.b16 %v2836
        %v2853 = vunpack.c.l.b16 %v2837
        %v2854 = vunpack.c.l.b16 %v2838
        %v2855 = vunpack.c.l.b16 %v2839
        %v2856 = vunpack.c.l.b16 %v2840
        %v2857 = vunpack.c.l.b16 %v2841
        %v2858 = vunpack.c.l.b16 %v2842
        %v2859 = vpack.c.b16 %v2852, %v2851
        %v2860 = vpack.c.b16 %v2854, %v2853
        %v2861 = vpack.c.b16 %v2856, %v2855
        %v2862 = vpack.c.b16 %v2858, %v2857
        %v2868 = vsel %vm1507, %v2834, 0
        %2870 = vmatprep.subr.bf16.mxu0 0
        %2871 = vmatpush1.bf16.msra.mxu0 %v2859
        %2872 = vmatprep.subr.bf16.mxu0 0
        %2873 = vmatpush1.bf16.msra.mxu0 %v2860
        %2874 = vmatprep.subr.bf16.mxu0 0
        %2875 = vmatpush1.bf16.msra.mxu0 %v2861
        %2876 = vmatprep.subr.bf16.mxu0 0
        %2877 = vmatpush1.bf16.msra.mxu0 %v2862
        %2878 = vmatprep.subr.bf16.mxu0 0
        %2879 = vmatpush1.bf16.msra.mxu0 0
        %2880 = vmatprep.subr.bf16.mxu0 0
        %2881 = vmatpush1.bf16.msra.mxu0 0
        %2882 = vmatprep.subr.bf16.mxu0 0
        %2883 = vmatpush1.bf16.msra.mxu0 0
        %2884 = vmatprep.subr.bf16.mxu0 0
        %2885 = vmatpush1.bf16.msra.mxu0 0
        %2886 = vmatprep.subr.bf16.mxu0 0
        %2887 = vmatpush1.bf16.msra.mxu0 0
        %2888 = vmatprep.subr.bf16.mxu0 0
        %2889 = vmatpush1.bf16.msra.mxu0 0
        %2890 = vmatprep.subr.bf16.mxu0 0
        %2891 = vmatpush1.bf16.msra.mxu0 0
        %2892 = vmatprep.subr.bf16.mxu0 0
        %2893 = vmatpush1.bf16.msra.mxu0 0
        %2894 = vmatprep.subr.bf16.mxu0 0
        %2895 = vmatpush1.bf16.msra.mxu0 0
        %2896 = vmatprep.subr.bf16.mxu0 0
        %2897 = vmatpush1.bf16.msra.mxu0 0
        %2898 = vmatprep.subr.bf16.mxu0 0
        %2899 = vmatpush1.bf16.msra.mxu0 0
        %2900 = vmatprep.subr.bf16.mxu0 0
        %2901 = vmatpush1.bf16.msra.mxu0 0
        %2902 = vmatprep.mubr.bf16.mxu0 0
        %2903 = vmatmul.mubr.bf16.gmra.mrb[0].mxu0 %v2868
        %v2904 = vpop.f32.mrb[0].mxu0
        %v2905 = vadd.f32 0.0, %v2904
        %v2906 = vpop.f32.mrb[0].mxu0
        %v2907 = vpop.f32.mrb[0].mxu0
        %v2908 = vadd.f32 0.0, %v2907
        %v2909 = vpop.f32.mrb[0].mxu0
        %2910 = vdwg.mxu0
        %v2911 = vadd.f32 %v2712, %v2905
        %v2912 = vadd.f32 %v2713, %v2908
        %s2913 = scalar_lea.vmem [#allocation6], 112
        %v2914 = vld [vmem:[%s2913] sm:$0xff]
        %v2915 = vld [vmem:[%s2913 + $0x8] sm:$0xff]
        %2917 = vrot.lane.b32.xlu0 %v2714, 64
        %v2918 = vpop.permute.xlu0 %2917
        %2920 = vrot.lane.b32.xlu0 %v2715, 64
        %v2921 = vpop.permute.xlu0 %2920
        %v2923 = vsel %vm1507, %v2918, 0
        %v2926 = vsel %vm1507, %v2921, 0
        %2928 = vmatprep.subr.bf16.mxu0 0
        %2929 = vmatpush1.bf16.xpose.msra.mxu0 %v2926
        %2930 = vmatprep.subr.bf16.mxu0 0
        %2931 = vmatpush1.bf16.xpose.msra.mxu0 0
        %2932 = vmatprep.subr.bf16.mxu0 0
        %2933 = vmatpush1.bf16.xpose.msra.mxu0 0
        %2934 = vmatprep.subr.bf16.mxu0 0
        %2935 = vmatpush1.bf16.xpose.msra.mxu0 0
        %2936 = vmatprep.subr.bf16.mxu0 0
        %2937 = vmatpush1.bf16.xpose.msra.mxu0 0
        %2938 = vmatprep.subr.bf16.mxu0 0
        %2939 = vmatpush1.bf16.xpose.msra.mxu0 0
        %2940 = vmatprep.subr.bf16.mxu0 0
        %2941 = vmatpush1.bf16.xpose.msra.mxu0 0
        %2942 = vmatprep.subr.bf16.mxu0 0
        %2943 = vmatpush1.bf16.xpose.msra.mxu0 0
        %2944 = vmatprep.subr.bf16.mxu0 0
        %2945 = vmatpush1.bf16.xpose.msra.mxu0 0
        %2946 = vmatprep.subr.bf16.mxu0 0
        %2947 = vmatpush1.bf16.xpose.msra.mxu0 0
        %2948 = vmatprep.subr.bf16.mxu0 0
        %2949 = vmatpush1.bf16.xpose.msra.mxu0 0
        %2950 = vmatprep.subr.bf16.mxu0 0
        %2951 = vmatpush1.bf16.xpose.msra.mxu0 0
        %2952 = vmatprep.subr.bf16.mxu0 0
        %2953 = vmatpush1.bf16.xpose.msra.mxu0 0
        %2954 = vmatprep.subr.bf16.mxu0 0
        %2955 = vmatpush1.bf16.xpose.msra.mxu0 0
        %2956 = vmatprep.subr.bf16.mxu0 0
        %2957 = vmatpush1.bf16.xpose.msra.mxu0 0
        %2958 = vmatprep.subr.bf16.mxu0 0
        %2959 = vmatpush1.bf16.xpose.msra.mxu0 0
        %2960 = vmatprep.mubr.bf16.mxu0 0
        %2961 = vmatmul.mubr.bf16.gmra.mrb[0].mxu0 %v2923
        %v2962 = vpop.f32.mrb[0].mxu0
        %v2963 = vadd.f32 %v2914, %v2962
        %v2964 = vpop.f32.mrb[0].mxu0
        %v2965 = vpop.f32.mrb[0].mxu0
        %v2966 = vadd.f32 %v2915, %v2965
        %v2967 = vpop.f32.mrb[0].mxu0
        %2968 = vdwg.mxu0
        %v2969 = vsel %vm1555, %v2963, -inf
        %2970 = vmax.xlane.f32.xlu0 %v2969
        %v2971 = vpop.xlane.xlu0 %2970
        %v2972 = vsel %vm1555, %v2966, -inf
        %2973 = vmax.xlane.f32.xlu0 %v2972
        %v2974 = vpop.xlane.xlu0 %2973
        %v2975 = vsub.f32 %v2963, %v2971
        %v2976 = vsub.f32 %v2966, %v2974
        %v2977 = vmul.f32 %v2975, 1.442695
        %v2978 = vpow.pop %v2977
        %v2979 = vmul.f32 %v2976, 1.442695
        %v2980 = vpow.pop %v2979
        %v2981 = vsel %vm1555, %v2978, 0.0
        %2982 = vadd.xlane.f32.xlu0 %v2981
        %v2983 = vpop.xlane.xlu0 %2982
        %v2984 = vsel %vm1555, %v2980, 0.0
        %2985 = vadd.xlane.f32.xlu0 %v2984
        %v2986 = vpop.xlane.xlu0 %2985
        %v2987 = vrcp.pop %v2983
        %v2988 = vrcp.pop %v2986
        %v2989 = vmul.f32 %v2978, %v2987
        %v2990 = vmul.f32 %v2980, %v2988
        %v2991 = vpack.c.bf16 %v2990, %v2989
        %2993 = vrot.lane.b32.xlu0 %v2716, 64
        %v2994 = vpop.permute.xlu0 %2993
        %v2997 = vsel %vm1555, %v2991, 0
        %2999 = vmatprep.subr.bf16.mxu0 0
        %3000 = vmatpush1.bf16.msra.mxu0 %v2994
        %3001 = vmatprep.subr.bf16.mxu0 0
        %3002 = vmatpush1.bf16.msra.mxu0 0
        %3003 = vmatprep.subr.bf16.mxu0 0
        %3004 = vmatpush1.bf16.msra.mxu0 0
        %3005 = vmatprep.subr.bf16.mxu0 0
        %3006 = vmatpush1.bf16.msra.mxu0 0
        %3007 = vmatprep.subr.bf16.mxu0 0
        %3008 = vmatpush1.bf16.msra.mxu0 0
        %3009 = vmatprep.subr.bf16.mxu0 0
        %3010 = vmatpush1.bf16.msra.mxu0 0
        %3011 = vmatprep.subr.bf16.mxu0 0
        %3012 = vmatpush1.bf16.msra.mxu0 0
        %3013 = vmatprep.subr.bf16.mxu0 0
        %3014 = vmatpush1.bf16.msra.mxu0 0
        %3015 = vmatprep.subr.bf16.mxu0 0
        %3016 = vmatpush1.bf16.msra.mxu0 0
        %3017 = vmatprep.subr.bf16.mxu0 0
        %3018 = vmatpush1.bf16.msra.mxu0 0
        %3019 = vmatprep.subr.bf16.mxu0 0
        %3020 = vmatpush1.bf16.msra.mxu0 0
        %3021 = vmatprep.subr.bf16.mxu0 0
        %3022 = vmatpush1.bf16.msra.mxu0 0
        %3023 = vmatprep.subr.bf16.mxu0 0
        %3024 = vmatpush1.bf16.msra.mxu0 0
        %3025 = vmatprep.subr.bf16.mxu0 0
        %3026 = vmatpush1.bf16.msra.mxu0 0
        %3027 = vmatprep.subr.bf16.mxu0 0
        %3028 = vmatpush1.bf16.msra.mxu0 0
        %3029 = vmatprep.subr.bf16.mxu0 0
        %3030 = vmatpush1.bf16.msra.mxu0 0
        %3031 = vmatprep.mubr.bf16.mxu0 0
        %3032 = vmatmul.mubr.bf16.gmra.mrb[0].mxu0 %v2997
        %v3033 = vpop.f32.mrb[0].mxu0
        %v3034 = vadd.f32 0.0, %v3033
        %v3035 = vpop.f32.mrb[0].mxu0
        %v3036 = vpop.f32.mrb[0].mxu0
        %v3037 = vadd.f32 0.0, %v3036
        %v3038 = vpop.f32.mrb[0].mxu0
        %3039 = vdwg.mxu0
        %v3040 = vpack.c.bf16 %v3037, %v3034
        %v3041 = vld [vmem:[%s537 + $0xe0] sm:$0xf]
        %v3042 = vld [vmem:[%s537 + $0xe4] sm:$0xf]
        %v3043 = vld [vmem:[%s537 + $0xe8] sm:$0xf]
        %v3044 = vld [vmem:[%s537 + $0xec] sm:$0xf]
        %v3045 = vld [vmem:[%s537 + $0xf0] sm:$0xf]
        %v3046 = vld [vmem:[%s537 + $0xf4] sm:$0xf]
        %v3047 = vld [vmem:[%s537 + $0xf8] sm:$0xf]
        %v3048 = vld [vmem:[%s537 + $0xfc] sm:$0xf]
        %v3057 = vunpack.c.l.b16 %v3041
        %v3058 = vunpack.c.l.b16 %v3042
        %v3059 = vunpack.c.l.b16 %v3043
        %v3060 = vunpack.c.l.b16 %v3044
        %v3061 = vunpack.c.l.b16 %v3045
        %v3062 = vunpack.c.l.b16 %v3046
        %v3063 = vunpack.c.l.b16 %v3047
        %v3064 = vunpack.c.l.b16 %v3048
        %v3065 = vpack.c.b16 %v3058, %v3057
        %v3066 = vpack.c.b16 %v3060, %v3059
        %v3067 = vpack.c.b16 %v3062, %v3061
        %v3068 = vpack.c.b16 %v3064, %v3063
        %v3074 = vsel %vm1507, %v3040, 0
        %3076 = vmatprep.subr.bf16.mxu0 0
        %3077 = vmatpush1.bf16.msra.mxu0 %v3065
        %3078 = vmatprep.subr.bf16.mxu0 0
        %3079 = vmatpush1.bf16.msra.mxu0 %v3066
        %3080 = vmatprep.subr.bf16.mxu0 0
        %3081 = vmatpush1.bf16.msra.mxu0 %v3067
        %3082 = vmatprep.subr.bf16.mxu0 0
        %3083 = vmatpush1.bf16.msra.mxu0 %v3068
        %3084 = vmatprep.subr.bf16.mxu0 0
        %3085 = vmatpush1.bf16.msra.mxu0 0
        %3086 = vmatprep.subr.bf16.mxu0 0
        %3087 = vmatpush1.bf16.msra.mxu0 0
        %3088 = vmatprep.subr.bf16.mxu0 0
        %3089 = vmatpush1.bf16.msra.mxu0 0
        %3090 = vmatprep.subr.bf16.mxu0 0
        %3091 = vmatpush1.bf16.msra.mxu0 0
        %3092 = vmatprep.subr.bf16.mxu0 0
        %3093 = vmatpush1.bf16.msra.mxu0 0
        %3094 = vmatprep.subr.bf16.mxu0 0
        %3095 = vmatpush1.bf16.msra.mxu0 0
        %3096 = vmatprep.subr.bf16.mxu0 0
        %3097 = vmatpush1.bf16.msra.mxu0 0
        %3098 = vmatprep.subr.bf16.mxu0 0
        %3099 = vmatpush1.bf16.msra.mxu0 0
        %3100 = vmatprep.subr.bf16.mxu0 0
        %3101 = vmatpush1.bf16.msra.mxu0 0
        %3102 = vmatprep.subr.bf16.mxu0 0
        %3103 = vmatpush1.bf16.msra.mxu0 0
        %3104 = vmatprep.subr.bf16.mxu0 0
        %3105 = vmatpush1.bf16.msra.mxu0 0
        %3106 = vmatprep.subr.bf16.mxu0 0
        %3107 = vmatpush1.bf16.msra.mxu0 0
        %3108 = vmatprep.mubr.bf16.mxu0 0
        %3109 = vmatmul.mubr.bf16.gmra.mrb[0].mxu0 %v3074
        %v3110 = vpop.f32.mrb[0].mxu0
        %v3111 = vadd.f32 0.0, %v3110
        %v3112 = vpop.f32.mrb[0].mxu0
        %v3113 = vpop.f32.mrb[0].mxu0
        %v3114 = vadd.f32 0.0, %v3113
        %v3115 = vpop.f32.mrb[0].mxu0
        %3116 = vdwg.mxu0
        %v3117 = vadd.f32 %v2911, %v3111
        %v3118 = vadd.f32 %v2912, %v3114
        %v3119 = vadd.f32 %v641, %v3117
        %v3120 = vadd.f32 %v642, %v3118
        %v3121 = vld [vmem:[%s545] sm:$0x1]
        %v3122 = vmul.f32 %v3119, %v3119
        %v3123 = vmul.f32 %v3120, %v3120
        %3124 = vadd.xlane.f32.xlu0 %v3122
        %v3125 = vpop.xlane.xlu0 %3124
        %3126 = vadd.xlane.f32.xlu0 %v3123
        %v3127 = vpop.xlane.xlu0 %3126
        %v3128 = vmul.f32 %v3125, %v650
        %v3129 = vmul.f32 %v3127, %v650
        %v3130 = vadd.f32 %v3128, 1e-06
        %v3131 = vadd.f32 %v3129, 1e-06
        %v3132 = vrsqrt.pop %v3130
        %v3133 = vrsqrt.pop %v3131
        %v3134 = vmul.f32 %v3119, %v3132
        %v3135 = vmul.f32 %v3120, %v3133
        %v3137 = vlaneseq
        %v3138 = vshrl.u32 %v3137, 7
        %v3139 = vsub.s32 0, %v3138
        %v3140 = vrot.slane %v3121, %v3139
        %v3142 = vmul.f32 %v3134, %v3140
        %v3143 = vmul.f32 %v3135, %v3140
        %v3144 = vpack.c.bf16 %v3143, %v3142
        %v3145 = vld [vmem:[%s554] sm:$0xff]
        %v3146 = vld [vmem:[%s554 + $0x8] sm:$0xff]
        %v3147 = vld [vmem:[%s554 + $0x10] sm:$0xff]
        %v3148 = vld [vmem:[%s554 + $0x18] sm:$0xff]
        %v3149 = vld [vmem:[%s554 + $0x20] sm:$0xff]
        %v3150 = vld [vmem:[%s554 + $0x28] sm:$0xff]
        %v3151 = vld [vmem:[%s554 + $0x30] sm:$0xff]
        %v3152 = vld [vmem:[%s554 + $0x38] sm:$0xff]
        %v3153 = vld [vmem:[%s554 + $0x40] sm:$0xff]
        %v3154 = vld [vmem:[%s554 + $0x48] sm:$0xff]
        %v3155 = vld [vmem:[%s554 + $0x50] sm:$0xff]
        %v3156 = vld [vmem:[%s554 + $0x58] sm:$0xff]
        %v3157 = vld [vmem:[%s554 + $0x60] sm:$0xff]
        %v3158 = vld [vmem:[%s554 + $0x68] sm:$0xff]
        %v3159 = vld [vmem:[%s554 + $0x70] sm:$0xff]
        %v3160 = vld [vmem:[%s554 + $0x78] sm:$0xff]
        %v3177 = vunpack.c.l.b16 %v3145
        %v3178 = vunpack.c.h.b16 %v3145
        %v3179 = vunpack.c.l.b16 %v3146
        %v3180 = vunpack.c.h.b16 %v3146
        %v3181 = vunpack.c.l.b16 %v3147
        %v3182 = vunpack.c.h.b16 %v3147
        %v3183 = vunpack.c.l.b16 %v3148
        %v3184 = vunpack.c.h.b16 %v3148
        %v3185 = vunpack.c.l.b16 %v3149
        %v3186 = vunpack.c.h.b16 %v3149
        %v3187 = vunpack.c.l.b16 %v3150
        %v3188 = vunpack.c.h.b16 %v3150
        %v3189 = vunpack.c.l.b16 %v3151
        %v3190 = vunpack.c.h.b16 %v3151
        %v3191 = vunpack.c.l.b16 %v3152
        %v3192 = vunpack.c.h.b16 %v3152
        %v3193 = vunpack.c.l.b16 %v3153
        %v3194 = vunpack.c.h.b16 %v3153
        %v3195 = vunpack.c.l.b16 %v3154
        %v3196 = vunpack.c.h.b16 %v3154
        %v3197 = vunpack.c.l.b16 %v3155
        %v3198 = vunpack.c.h.b16 %v3155
        %v3199 = vunpack.c.l.b16 %v3156
        %v3200 = vunpack.c.h.b16 %v3156
        %v3201 = vunpack.c.l.b16 %v3157
        %v3202 = vunpack.c.h.b16 %v3157
        %v3203 = vunpack.c.l.b16 %v3158
        %v3204 = vunpack.c.h.b16 %v3158
        %v3205 = vunpack.c.l.b16 %v3159
        %v3206 = vunpack.c.h.b16 %v3159
        %v3207 = vunpack.c.l.b16 %v3160
        %v3208 = vunpack.c.h.b16 %v3160
        %v3209 = vpack.c.b16 %v3179, %v3177
        %v3210 = vpack.c.b16 %v3180, %v3178
        %v3211 = vpack.c.b16 %v3183, %v3181
        %v3212 = vpack.c.b16 %v3184, %v3182
        %v3213 = vpack.c.b16 %v3187, %v3185
        %v3214 = vpack.c.b16 %v3188, %v3186
        %v3215 = vpack.c.b16 %v3191, %v3189
        %v3216 = vpack.c.b16 %v3192, %v3190
        %v3217 = vpack.c.b16 %v3195, %v3193
        %v3218 = vpack.c.b16 %v3196, %v3194
        %v3219 = vpack.c.b16 %v3199, %v3197
        %v3220 = vpack.c.b16 %v3200, %v3198
        %v3221 = vpack.c.b16 %v3203, %v3201
        %v3222 = vpack.c.b16 %v3204, %v3202
        %v3223 = vpack.c.b16 %v3207, %v3205
        %v3224 = vpack.c.b16 %v3208, %v3206
        %3241 = vmatprep.subr.bf16.mxu0 %v3210
        %3242 = vmatpush1.bf16.msra.mxu0 %v3209
        %3243 = vmatprep.subr.bf16.mxu0 %v3212
        %3244 = vmatpush1.bf16.msra.mxu0 %v3211
        %3245 = vmatprep.subr.bf16.mxu0 %v3214
        %3246 = vmatpush1.bf16.msra.mxu0 %v3213
        %3247 = vmatprep.subr.bf16.mxu0 %v3216
        %3248 = vmatpush1.bf16.msra.mxu0 %v3215
        %3249 = vmatprep.subr.bf16.mxu0 %v3218
        %3250 = vmatpush1.bf16.msra.mxu0 %v3217
        %3251 = vmatprep.subr.bf16.mxu0 %v3220
        %3252 = vmatpush1.bf16.msra.mxu0 %v3219
        %3253 = vmatprep.subr.bf16.mxu0 %v3222
        %3254 = vmatpush1.bf16.msra.mxu0 %v3221
        %3255 = vmatprep.subr.bf16.mxu0 %v3224
        %3256 = vmatpush1.bf16.msra.mxu0 %v3223
        %3257 = vmatprep.subr.bf16.mxu0 0
        %3258 = vmatpush1.bf16.msra.mxu0 0
        %3259 = vmatprep.subr.bf16.mxu0 0
        %3260 = vmatpush1.bf16.msra.mxu0 0
        %3261 = vmatprep.subr.bf16.mxu0 0
        %3262 = vmatpush1.bf16.msra.mxu0 0
        %3263 = vmatprep.subr.bf16.mxu0 0
        %3264 = vmatpush1.bf16.msra.mxu0 0
        %3265 = vmatprep.subr.bf16.mxu0 0
        %3266 = vmatpush1.bf16.msra.mxu0 0
        %3267 = vmatprep.subr.bf16.mxu0 0
        %3268 = vmatpush1.bf16.msra.mxu0 0
        %3269 = vmatprep.subr.bf16.mxu0 0
        %3270 = vmatpush1.bf16.msra.mxu0 0
        %3271 = vmatprep.subr.bf16.mxu0 0
        %3272 = vmatpush1.bf16.msra.mxu0 0
        %3273 = vmatprep.mubr.bf16.mxu0 0
        %3274 = vmatmul.mubr.bf16.gmra.mrb[0].mxu0 %v3144
        %v3275 = vpop.f32.mrb[0].mxu0
        %v3276 = vadd.f32 0.0, %v3275
        %v3277 = vpop.f32.mrb[0].mxu0
        %v3278 = vadd.f32 0.0, %v3277
        %v3279 = vpop.f32.mrb[0].mxu0
        %v3280 = vadd.f32 0.0, %v3279
        %v3281 = vpop.f32.mrb[0].mxu0
        %v3282 = vadd.f32 0.0, %v3281
        %3283 = vdwg.mxu0
        %v3284 = vmax.f32 %v3276, 0.0
        %v3285 = vmax.f32 %v3278, 0.0
        %v3286 = vmax.f32 %v3280, 0.0
        %v3287 = vmax.f32 %v3282, 0.0
        %v3288 = vpack.c.bf16 %v3286, %v3284
        %v3289 = vpack.c.bf16 %v3287, %v3285
        %v3290 = vld [vmem:[%s563] sm:$0xf]
        %v3291 = vld [vmem:[%s563 + $0x4] sm:$0xf]
        %v3292 = vld [vmem:[%s563 + $0x8] sm:$0xf]
        %v3293 = vld [vmem:[%s563 + $0xc] sm:$0xf]
        %v3294 = vld [vmem:[%s563 + $0x10] sm:$0xf]
        %v3295 = vld [vmem:[%s563 + $0x14] sm:$0xf]
        %v3296 = vld [vmem:[%s563 + $0x18] sm:$0xf]
        %v3297 = vld [vmem:[%s563 + $0x1c] sm:$0xf]
        %v3298 = vld [vmem:[%s563 + $0x20] sm:$0xf]
        %v3299 = vld [vmem:[%s563 + $0x24] sm:$0xf]
        %v3300 = vld [vmem:[%s563 + $0x28] sm:$0xf]
        %v3301 = vld [vmem:[%s563 + $0x2c] sm:$0xf]
        %v3302 = vld [vmem:[%s563 + $0x30] sm:$0xf]
        %v3303 = vld [vmem:[%s563 + $0x34] sm:$0xf]
        %v3304 = vld [vmem:[%s563 + $0x38] sm:$0xf]
        %v3305 = vld [vmem:[%s563 + $0x3c] sm:$0xf]
        %v3306 = vld [vmem:[%s563 + $0x40] sm:$0xf]
        %v3307 = vld [vmem:[%s563 + $0x44] sm:$0xf]
        %v3308 = vld [vmem:[%s563 + $0x48] sm:$0xf]
        %v3309 = vld [vmem:[%s563 + $0x4c] sm:$0xf]
        %v3310 = vld [vmem:[%s563 + $0x50] sm:$0xf]
        %v3311 = vld [vmem:[%s563 + $0x54] sm:$0xf]
        %v3312 = vld [vmem:[%s563 + $0x58] sm:$0xf]
        %v3313 = vld [vmem:[%s563 + $0x5c] sm:$0xf]
        %v3314 = vld [vmem:[%s563 + $0x60] sm:$0xf]
        %v3315 = vld [vmem:[%s563 + $0x64] sm:$0xf]
        %v3316 = vld [vmem:[%s563 + $0x68] sm:$0xf]
        %v3317 = vld [vmem:[%s563 + $0x6c] sm:$0xf]
        %v3318 = vld [vmem:[%s563 + $0x70] sm:$0xf]
        %v3319 = vld [vmem:[%s563 + $0x74] sm:$0xf]
        %v3320 = vld [vmem:[%s563 + $0x78] sm:$0xf]
        %v3321 = vld [vmem:[%s563 + $0x7c] sm:$0xf]
        %v3354 = vunpack.c.l.b16 %v3290
        %v3355 = vunpack.c.l.b16 %v3291
        %v3356 = vunpack.c.l.b16 %v3292
        %v3357 = vunpack.c.l.b16 %v3293
        %v3358 = vunpack.c.l.b16 %v3294
        %v3359 = vunpack.c.l.b16 %v3295
        %v3360 = vunpack.c.l.b16 %v3296
        %v3361 = vunpack.c.l.b16 %v3297
        %v3362 = vunpack.c.l.b16 %v3298
        %v3363 = vunpack.c.l.b16 %v3299
        %v3364 = vunpack.c.l.b16 %v3300
        %v3365 = vunpack.c.l.b16 %v3301
        %v3366 = vunpack.c.l.b16 %v3302
        %v3367 = vunpack.c.l.b16 %v3303
        %v3368 = vunpack.c.l.b16 %v3304
        %v3369 = vunpack.c.l.b16 %v3305
        %v3370 = vunpack.c.l.b16 %v3306
        %v3371 = vunpack.c.l.b16 %v3307
        %v3372 = vunpack.c.l.b16 %v3308
        %v3373 = vunpack.c.l.b16 %v3309
        %v3374 = vunpack.c.l.b16 %v3310
        %v3375 = vunpack.c.l.b16 %v3311
        %v3376 = vunpack.c.l.b16 %v3312
        %v3377 = vunpack.c.l.b16 %v3313
        %v3378 = vunpack.c.l.b16 %v3314
        %v3379 = vunpack.c.l.b16 %v3315
        %v3380 = vunpack.c.l.b16 %v3316
        %v3381 = vunpack.c.l.b16 %v3317
        %v3382 = vunpack.c.l.b16 %v3318
        %v3383 = vunpack.c.l.b16 %v3319
        %v3384 = vunpack.c.l.b16 %v3320
        %v3385 = vunpack.c.l.b16 %v3321
        %v3386 = vpack.c.b16 %v3355, %v3354
        %v3387 = vpack.c.b16 %v3357, %v3356
        %v3388 = vpack.c.b16 %v3359, %v3358
        %v3389 = vpack.c.b16 %v3361, %v3360
        %v3390 = vpack.c.b16 %v3363, %v3362
        %v3391 = vpack.c.b16 %v3365, %v3364
        %v3392 = vpack.c.b16 %v3367, %v3366
        %v3393 = vpack.c.b16 %v3369, %v3368
        %v3394 = vpack.c.b16 %v3371, %v3370
        %v3395 = vpack.c.b16 %v3373, %v3372
        %v3396 = vpack.c.b16 %v3375, %v3374
        %v3397 = vpack.c.b16 %v3377, %v3376
        %v3398 = vpack.c.b16 %v3379, %v3378
        %v3399 = vpack.c.b16 %v3381, %v3380
        %v3400 = vpack.c.b16 %v3383, %v3382
        %v3401 = vpack.c.b16 %v3385, %v3384
        %3418 = vmatprep.subr.bf16.mxu0 0
        %3419 = vmatpush1.bf16.msra.mxu0 %v3386
        %3420 = vmatprep.subr.bf16.mxu0 0
        %3421 = vmatpush1.bf16.msra.mxu0 %v3387
        %3422 = vmatprep.subr.bf16.mxu0 0
        %3423 = vmatpush1.bf16.msra.mxu0 %v3388
        %3424 = vmatprep.subr.bf16.mxu0 0
        %3425 = vmatpush1.bf16.msra.mxu0 %v3389
        %3426 = vmatprep.subr.bf16.mxu0 0
        %3427 = vmatpush1.bf16.msra.mxu0 %v3390
        %3428 = vmatprep.subr.bf16.mxu0 0
        %3429 = vmatpush1.bf16.msra.mxu0 %v3391
        %3430 = vmatprep.subr.bf16.mxu0 0
        %3431 = vmatpush1.bf16.msra.mxu0 %v3392
        %3432 = vmatprep.subr.bf16.mxu0 0
        %3433 = vmatpush1.bf16.msra.mxu0 %v3393
        %3434 = vmatprep.subr.bf16.mxu0 0
        %3435 = vmatpush1.bf16.msra.mxu0 %v3394
        %3436 = vmatprep.subr.bf16.mxu0 0
        %3437 = vmatpush1.bf16.msra.mxu0 %v3395
        %3438 = vmatprep.subr.bf16.mxu0 0
        %3439 = vmatpush1.bf16.msra.mxu0 %v3396
        %3440 = vmatprep.subr.bf16.mxu0 0
        %3441 = vmatpush1.bf16.msra.mxu0 %v3397
        %3442 = vmatprep.subr.bf16.mxu0 0
        %3443 = vmatpush1.bf16.msra.mxu0 %v3398
        %3444 = vmatprep.subr.bf16.mxu0 0
        %3445 = vmatpush1.bf16.msra.mxu0 %v3399
        %3446 = vmatprep.subr.bf16.mxu0 0
        %3447 = vmatpush1.bf16.msra.mxu0 %v3400
        %3448 = vmatprep.subr.bf16.mxu0 0
        %3449 = vmatpush1.bf16.msra.mxu0 %v3401
        %3450 = vmatprep.mubr.bf16.mxu0 %v3289
        %3451 = vmatmul.mubr.bf16.gmra.mrb[0].mxu0 %v3288
        %v3452 = vpop.f32.mrb[0].mxu0
        %v3453 = vadd.f32 0.0, %v3452
        %v3454 = vpop.f32.mrb[0].mxu0
        %v3455 = vpop.f32.mrb[0].mxu0
        %v3456 = vadd.f32 0.0, %v3455
        %v3457 = vpop.f32.mrb[0].mxu0
        %3458 = vdwg.mxu0
        %v3459 = vadd.f32 %v3119, %v3453
        %v3460 = vadd.f32 %v3120, %v3456
        %3461 = vst [vmem:[#allocation2] sm:$0xff] %v3459
        %3462 = vst [vmem:[#allocation2 + $0x8] sm:$0xff] %v3460
        %p3463 = scmp.eq.s32.totalorder %s26, 2
        // Predicated region
        $region113: #{tpu_custom_call.1} parent=63 // pred_check
          %p3464 = pneg %p3463
        $region114: #{tpu_custom_call.1} parent=63 // pred_check_branch
          %3466 = sbr.rel (%p3464) target = $region116
        $region115: #{tpu_custom_call.1} parent=63 // pred_region
          %v3468 = vrot.slane %v3460, 7
          %vm3470 = vcmask 1040384
          %v3471 = vsel %vm3470, %v3459, %v3468
          %v3472 = vld [vmem:[#allocation14] sm:$0x1]
          %v3473 = vmul.f32 %v3471, %v3471
          %vm3474 = vcmask 1041408
          %v3475 = vsel %vm3474, %v3473, 0.0
          %3476 = vadd.xlane.f32.xlu0 %v3475
          %v3477 = vpop.xlane.xlu0 %3476
          %v3478 = vmul.f32 %v3477, %v650
          %v3479 = vadd.f32 %v3478, 1e-06
          %v3480 = vrsqrt.pop %v3479
          %v3481 = vmul.f32 %v3471, %v3480
          %v3483 = vlaneseq
          %v3484 = vshrl.u32 %v3483, 7
          %v3485 = vsub.s32 0, %v3484
          %v3486 = vrot.slane %v3472, %v3485
          %v3488 = vmul.f32 %v3481, %v3486
          %v3489 = vpack.c.bf16 %v3488, %v3488
          %v3490 = vld [vmem:[#allocation15] sm:$0xf]
          %v3491 = vld [vmem:[#allocation15 + $0x4] sm:$0xf]
          %v3492 = vld [vmem:[#allocation15 + $0x8] sm:$0xf]
          %v3493 = vld [vmem:[#allocation15 + $0xc] sm:$0xf]
          %v3494 = vld [vmem:[#allocation15 + $0x10] sm:$0xf]
          %v3495 = vld [vmem:[#allocation15 + $0x14] sm:$0xf]
          %v3496 = vld [vmem:[#allocation15 + $0x18] sm:$0xf]
          %v3497 = vld [vmem:[#allocation15 + $0x1c] sm:$0xf]
          %v3498 = vld [vmem:[#allocation15 + $0x20] sm:$0xf]
          %v3499 = vld [vmem:[#allocation15 + $0x24] sm:$0xf]
          %v3500 = vld [vmem:[#allocation15 + $0x28] sm:$0xf]
          %v3501 = vld [vmem:[#allocation15 + $0x2c] sm:$0xf]
          %v3502 = vld [vmem:[#allocation15 + $0x30] sm:$0xf]
          %v3503 = vld [vmem:[#allocation15 + $0x34] sm:$0xf]
          %v3504 = vld [vmem:[#allocation15 + $0x38] sm:$0xf]
          %v3505 = vld [vmem:[#allocation15 + $0x3c] sm:$0xf]
          %v3506 = vld [vmem:[#allocation17] sm:$0x1]
          %v3508 = vlaneseq
          %v3509 = vshrl.u32 %v3508, 7
          %v3510 = vsub.s32 0, %v3509
          %v3511 = vrot.slane %v3506, %v3510
          %v3529 = vunpack.c.l.b16 %v3490
          %v3530 = vunpack.c.l.b16 %v3491
          %v3531 = vunpack.c.l.b16 %v3492
          %v3532 = vunpack.c.l.b16 %v3493
          %v3533 = vunpack.c.l.b16 %v3494
          %v3534 = vunpack.c.l.b16 %v3495
          %v3535 = vunpack.c.l.b16 %v3496
          %v3536 = vunpack.c.l.b16 %v3497
          %v3537 = vunpack.c.l.b16 %v3498
          %v3538 = vunpack.c.l.b16 %v3499
          %v3539 = vunpack.c.l.b16 %v3500
          %v3540 = vunpack.c.l.b16 %v3501
          %v3541 = vunpack.c.l.b16 %v3502
          %v3542 = vunpack.c.l.b16 %v3503
          %v3543 = vunpack.c.l.b16 %v3504
          %v3544 = vunpack.c.l.b16 %v3505
          %v3545 = vpack.c.b16 %v3530, %v3529
          %v3546 = vpack.c.b16 %v3532, %v3531
          %v3547 = vpack.c.b16 %v3534, %v3533
          %v3548 = vpack.c.b16 %v3536, %v3535
          %v3549 = vpack.c.b16 %v3538, %v3537
          %v3550 = vpack.c.b16 %v3540, %v3539
          %v3551 = vpack.c.b16 %v3542, %v3541
          %v3552 = vpack.c.b16 %v3544, %v3543
          %3561 = vmatprep.subr.bf16.mxu0 0
          %3562 = vmatpush1.bf16.msra.mxu0 %v3545
          %3563 = vmatprep.subr.bf16.mxu0 0
          %3564 = vmatpush1.bf16.msra.mxu0 %v3546
          %3565 = vmatprep.subr.bf16.mxu0 0
          %3566 = vmatpush1.bf16.msra.mxu0 %v3547
          %3567 = vmatprep.subr.bf16.mxu0 0
          %3568 = vmatpush1.bf16.msra.mxu0 %v3548
          %3569 = vmatprep.subr.bf16.mxu0 0
          %3570 = vmatpush1.bf16.msra.mxu0 %v3549
          %3571 = vmatprep.subr.bf16.mxu0 0
          %3572 = vmatpush1.bf16.msra.mxu0 %v3550
          %3573 = vmatprep.subr.bf16.mxu0 0
          %3574 = vmatpush1.bf16.msra.mxu0 %v3551
          %3575 = vmatprep.subr.bf16.mxu0 0
          %3576 = vmatpush1.bf16.msra.mxu0 %v3552
          %3577 = vmatprep.subr.bf16.mxu0 0
          %3578 = vmatpush1.bf16.msra.mxu0 0
          %3579 = vmatprep.subr.bf16.mxu0 0
          %3580 = vmatpush1.bf16.msra.mxu0 0
          %3581 = vmatprep.subr.bf16.mxu0 0
          %3582 = vmatpush1.bf16.msra.mxu0 0
          %3583 = vmatprep.subr.bf16.mxu0 0
          %3584 = vmatpush1.bf16.msra.mxu0 0
          %3585 = vmatprep.subr.bf16.mxu0 0
          %3586 = vmatpush1.bf16.msra.mxu0 0
          %3587 = vmatprep.subr.bf16.mxu0 0
          %3588 = vmatpush1.bf16.msra.mxu0 0
          %3589 = vmatprep.subr.bf16.mxu0 0
          %3590 = vmatpush1.bf16.msra.mxu0 0
          %3591 = vmatprep.subr.bf16.mxu0 0
          %3592 = vmatpush1.bf16.msra.mxu0 0
          %3593 = vmatprep.mubr.bf16.mxu0 0
          %3594 = vmatmul.mubr.bf16.gmra.mrb[0].mxu0 %v3489
          %v3595 = vpop.f32.mrb[0].mxu0
          %v3596 = vadd.f32 %v3511, %v3595
          %v3597 = vpop.f32.mrb[0].mxu0
          %v3598 = vpop.f32.mrb[0].mxu0
          %v3599 = vpop.f32.mrb[0].mxu0
          %3600 = vdwg.mxu0
          %v3601 = vsel %vm3474, %v3596, -inf
          %3602 = vmax.xlane.f32.xlu0 %v3601
          %v3603 = vpop.xlane.xlu0 %3602
          %v3604 = vsub.f32 %v3596, %v3603
          %v3605 = vmul.f32 %v3604, 1.442695
          %v3606 = vpow.pop %v3605
          %v3607 = vsel %vm3474, %v3606, 0.0
          %3608 = vadd.xlane.f32.xlu0 %v3607
          %v3609 = vpop.xlane.xlu0 %3608
          %v3610 = vrcp.pop %v3609
          %v3611 = vmul.f32 %v3606, %v3610
          %3612 = vst [vmem:[#allocation18] sm:$0x3] %v3611
        $region116: #{tpu_custom_call.1} parent=63 // pred_fallthru
          _
        // Predicated region
        $region117: #{tpu_custom_call.1} parent=63 // pred_check
          %p3613 = pneg %p300
        $region118: #{tpu_custom_call.1} parent=63 // pred_check_branch
          %3615 = sbr.rel (%p3613) target = $region120
        $region119: #{tpu_custom_call.1} parent=63 // pred_region
          %s3617 = ssub.s32 32, 32
          %3618 = vsyncadd [#allocation5], %s3617
          %s3620 = sshll.u32 [#allocation18], 4
          %s3621 = int_to_ptr.vmem [resolvable:$true] %s3620
          %3623 = dma.vmem_to_hbm [thread:$0]  %s3621, 32, %s11, [#allocation5]
        $region120: #{tpu_custom_call.1} parent=63 // pred_fallthru
          _
        // Predicated region
        $region121: #{tpu_custom_call.1} parent=63 // pred_check
          %p3624 = pneg %p300
        $region122: #{tpu_custom_call.1} parent=63 // pred_check_branch
          %3626 = sbr.rel (%p3624) target = $region124
        $region123: #{tpu_custom_call.1} parent=63 // pred_region
          %3627 = dma.done [#allocation5], 32
        $region124: #{tpu_custom_call.1} parent=63 // pred_fallthru
          _
      $region64: #{tpu_custom_call.1} parent=5 // pred_fallthru
        _
      %p3628 = scmp.le.s32.totalorder 2, %s21
      // Predicated region
      $region125: #{tpu_custom_call.1} parent=5 // pred_check
        %p3629 = pneg %p3628
      $region126: #{tpu_custom_call.1} parent=5 // pred_check_branch
        %3631 = sbr.rel (%p3629) target = $region128
      $region127: #{tpu_custom_call.1} parent=5 // pred_region
        %s3632 = ssub.s32 %s21, 2
      $region128: #{tpu_custom_call.1} parent=5 // pred_fallthru
        _
    $region6: #{tpu_custom_call.1} parent=1 // loop_footer
      %s25 = sadd.s32 1, %s21
    $region7: #{tpu_custom_call.1} parent=1 // loop_footer_branch
      %20 = sbr.rel target = $region3
    $region8: #{tpu_custom_call.1} parent=1 // loop_exit
      _
    %3633 = vsyncpa [#allocation4], 1
    %s3634 = scalar_lea.sflag [#allocation4], 1
    %3635 = vsyncpa %s3634, 1
    %3636 = vsyncpa [#allocation7], 1
    %3637 = vsyncpa [#allocation16], 1
    %3638 = vsyncpa [#allocation5], 1
    %s3639 = scalar_lea.sflag [#allocation5], 1
    %3640 = vsyncpa %s3639, 1

</llo_original>
